<compile_context>
chip_gen: v5e
topology: v5e:2x2
jax: 0.10.0
libtpu: 0.0.40
codegen_flags: <defaults>
</compile_context>

<pallas_src>
import functools

import jax
import jax.numpy as jnp
from jax import lax
from jax.experimental import pallas as pl
from jax.experimental.pallas import tpu as pltpu

LANE = 128
SUBLANE = 8


def _round_up(x, m):
    return (x + m - 1) // m * m


def _basic_block_kernel(x_ref, w1_ref, b1_ref, w2_ref, b2_ref, o_ref,
                        xscr, yscr, *, H, W, Wp, Cp):
    """Fused conv3x3+bn+relu -> conv3x3+bn -> +identity -> relu (one image per step).

    x_ref  : (1, H, W, Cp)  input NHWC block, f32, channels lane-padded
    w1_ref : (3, Cp, 3*Cp)  conv1 weights (BN1 scale folded), bf16, row dy -> (ci, dx*Cp+co)
    b1_ref : (1, Cp)        folded BN1 bias, f32
    w2_ref : (3, Cp, 3*Cp)  conv2 weights (BN2 scale folded), bf16
    b2_ref : (1, Cp)        folded BN2 bias, f32
    o_ref  : (1, H, W, Cp)  output block, f32
    xscr/yscr : VMEM scratch (H+2, Wp, Cp) f32 zero-halo activations
                (rows 0 / H+1 and columns [W, Wp) are the zero halo).
    """
    M = H * Wp

    # Re-zero the halo strips EVERY grid step: cheap (few KB) and independent of how the
    # grid is sharded across TensorCores (megacore-safe).  The interior and the halo are
    # disjoint, so the interior writes below never touch these zeros.
    zrow = jnp.zeros((1, Wp, Cp), jnp.float32)
    zcol = jnp.zeros((H, Wp - W, Cp), jnp.float32)
    for scr in (xscr, yscr):
        scr[0:1, :, :] = zrow                      # top halo row
        scr[H + 1:H + 2, :, :] = zrow              # bottom halo row
        scr[1:H + 1, W:Wp, :] = zcol               # right halo columns

    x = x_ref[0]                                   # (H, W, Cp) f32, stays in VMEM
    xscr[1:H + 1, 0:W, :] = x                      # sublane-aligned interior store

    def conv3x3(scr, w_ref):
        # One matmul per kernel row dy over the whole padded width; all three dx taps are
        # produced at once (N = 3*Cp).  dx alignment = roll of the f32 output by +1 / -1
        # along the flattened (H, Wp) axis; wrapped elements only come from / land in the
        # zero right-halo columns, so boundaries are handled for free.
        acc = jnp.zeros((M, 3 * Cp), jnp.float32)
        for dy in range(3):
            slab = scr[dy:dy + H, :, :].reshape(M, Cp).astype(jnp.bfloat16)
            acc += jnp.dot(slab, w_ref[dy], preferred_element_type=jnp.float32)
        left = pltpu.roll(acc[:, 0:Cp], 1, 0)                  # dx = 0 tap: shift +1
        right = pltpu.roll(acc[:, 2 * Cp:3 * Cp], M - 1, 0)    # dx = 2 tap: shift -1
        out = left + acc[:, Cp:2 * Cp] + right
        return out.reshape(H, Wp, Cp)[:, 0:W, :]   # drop junk right-halo columns

    # conv1 + bn1 + relu   (y1 never leaves VMEM)
    y1 = jnp.maximum(conv3x3(xscr, w1_ref) + b1_ref[0], 0.0)
    yscr[1:H + 1, 0:W, :] = y1

    # conv2 + bn2 + residual + relu  (identity taken from the f32 input block in VMEM)
    y2 = conv3x3(yscr, w2_ref) + b2_ref[0]
    out = jnp.maximum(y2 + x, 0.0)
    o_ref[...] = out[None].astype(o_ref.dtype)


def _fold_bn(gamma, beta, mean, var, eps=1e-5):
    scale = gamma / jnp.sqrt(var + eps)
    bias = beta - mean * scale
    return scale.astype(jnp.float32), bias.astype(jnp.float32)


def _prep_weight(w_oihw, scale, cin, cout, cp):
    # (Cout, Cin, 3, 3) -> (kh=dy, Cin, kw=dx, Cout); fold BN scale over Cout; zero-pad
    # both channel axes to the lane width; merge (kw, Cout) so each kernel row becomes a
    # single (Cp, 3*Cp) bf16 MXU operand (output column index = dx*Cp + co).
    w = jnp.transpose(w_oihw, (2, 1, 3, 0)).astype(jnp.float32)
    w = w * scale[None, None, None, :]
    w = jnp.pad(w, ((0, 0), (0, cp - cin), (0, 0), (0, cp - cout)))
    return w.reshape(3, cp, 3 * cp).astype(jnp.bfloat16)


def _vmem_budget_bytes():
    # Per-generation cap: ~3/4 of physical VMEM, never above 100 MiB
    # (v5e/v6e: 128 MiB physical -> 96 MiB; v7x: 64 MiB -> 48 MiB).
    cap = 128 << 20
    try:
        info = pltpu.get_tpu_info()
        cap = int(getattr(info, "vmem_capacity_bytes", cap)) or cap
    except Exception:
        pass
    return min(cap * 3 // 4, 100 << 20)


def basic_block_forward(x_nchw, params):
    """BasicBlock forward. x_nchw: (N, C, H, W) float32. Returns (N, C, H, W) float32."""
    N, C, H, W = x_nchw.shape
    Cout = params["conv1_w"].shape[0]
    assert Cout == C, "identity residual requires ch_in == ch_out (no downsample)"
    Cp = _round_up(C, LANE)
    Wp = _round_up(W + 1, SUBLANE)     # >= 1 zero column on the right, sublane-aligned

    s1, b1 = _fold_bn(params["bn1_gamma"], params["bn1_beta"],
                      params["bn1_mean"], params["bn1_var"])
    s2, b2 = _fold_bn(params["bn2_gamma"], params["bn2_beta"],
                      params["bn2_mean"], params["bn2_var"])
    w1 = _prep_weight(params["conv1_w"], s1, C, C, Cp)
    w2 = _prep_weight(params["conv2_w"], s2, C, C, Cp)
    b1 = jnp.pad(b1, (0, Cp - C)).reshape(1, Cp)
    b2 = jnp.pad(b2, (0, Cp - C)).reshape(1, Cp)

    x = jnp.transpose(x_nchw, (0, 2, 3, 1)).astype(jnp.float32)    # NCHW -> NHWC
    x = jnp.pad(x, ((0, 0), (0, 0), (0, 0), (0, Cp - C)))          # lane-dense channels

    # Rough double-buffered VMEM footprint (blocks + halo scratches + weights + temps).
    f32b, bf16b = 4, 2
    est = (2 * H * W * Cp * f32b            # input block, double-buffered
           + 2 * H * W * Cp * f32b          # output block, double-buffered
           + 2 * 2 * 9 * Cp * Cp * bf16b    # w1 + w2, double-buffered
           + 2 * (H + 2) * Wp * Cp * f32b   # zero-halo scratches
           + 5 * H * Wp * 3 * Cp * f32b)    # accumulator / rolled / epilogue temps
    vmem_limit = int(min(max(est * 3 // 2, 16 << 20), _vmem_budget_bytes()))

    kernel = functools.partial(_basic_block_kernel, H=H, W=W, Wp=Wp, Cp=Cp)
    y = pl.pallas_call(
        kernel,
        out_shape=jax.ShapeDtypeStruct((N, H, W, Cp), jnp.float32),
        grid=(N,),
        in_specs=[
            pl.BlockSpec((1, H, W, Cp), lambda n: (n, 0, 0, 0)),
            pl.BlockSpec((3, Cp, 3 * Cp), lambda n: (0, 0, 0)),
            pl.BlockSpec((1, Cp), lambda n: (0, 0)),
            pl.BlockSpec((3, Cp, 3 * Cp), lambda n: (0, 0, 0)),
            pl.BlockSpec((1, Cp), lambda n: (0, 0)),
        ],
        out_specs=pl.BlockSpec((1, H, W, Cp), lambda n: (n, 0, 0, 0)),
        scratch_shapes=[
            pltpu.VMEM((H + 2, Wp, Cp), jnp.float32),
            pltpu.VMEM((H + 2, Wp, Cp), jnp.float32),
        ],
        compiler_params=pltpu.CompilerParams(
            dimension_semantics=("parallel",),
            vmem_limit_bytes=vmem_limit),
    )(x, w1, b1, w2, b2)

    y = y[:, :, :, :C]                                   # drop lane padding
    return jnp.transpose(y, (0, 3, 1, 2))                # NHWC -> NCHW


def _reference_forward(x, params, eps=1e-5):
    """Pure-JAX/XLA reference (PyTorch eval semantics) for correctness checking."""
    def conv(a, w):
        return lax.conv_general_dilated(
            a, w, window_strides=(1, 1), padding=((1, 1), (1, 1)),
            dimension_numbers=("NCHW", "OIHW", "NCHW"),
            precision=lax.Precision.HIGHEST)

    def bn(a, g, b, m, v):
        return ((a - m[None, :, None, None])
                / jnp.sqrt(v + eps)[None, :, None, None]
                * g[None, :, None, None] + b[None, :, None, None])

    out = jnp.maximum(bn(conv(x, params["conv1_w"]), params["bn1_gamma"],
                         params["bn1_beta"], params["bn1_mean"], params["bn1_var"]), 0.0)
    out = bn(conv(out, params["conv2_w"]), params["bn2_gamma"],
             params["bn2_beta"], params["bn2_mean"], params["bn2_var"])
    return jnp.maximum(out + x, 0.0)


def init_params(key, ch_in, ch_out):
    k1, k2 = jax.random.split(key)
    fan1 = ch_in * 9
    fan2 = ch_out * 9
    return {
        "conv1_w": jax.random.normal(k1, (ch_out, ch_in, 3, 3), jnp.float32) / jnp.sqrt(fan1),
        "conv2_w": jax.random.normal(k2, (ch_out, ch_out, 3, 3), jnp.float32) / jnp.sqrt(fan2),
        "bn1_gamma": 1.0 + 0.05 * jnp.arange(ch_out, dtype=jnp.float32),
        "bn1_beta": 0.01 * jnp.arange(ch_out, dtype=jnp.float32),
        "bn1_mean": 0.02 * jnp.arange(ch_out, dtype=jnp.float32),
        "bn1_var": 1.0 + 0.1 * jnp.arange(ch_out, dtype=jnp.float32),
        "bn2_gamma": 1.0 - 0.03 * jnp.arange(ch_out, dtype=jnp.float32) / ch_out,
        "bn2_beta": -0.01 * jnp.arange(ch_out, dtype=jnp.float32),
        "bn2_mean": 0.01 * jnp.arange(ch_out, dtype=jnp.float32),
        "bn2_var": 1.0 + 0.05 * jnp.arange(ch_out, dtype=jnp.float32),
    }


if __name__ == "__main__":
    key = jax.random.PRNGKey(0)
    kx, kp = jax.random.split(key)

    N, C, H, W = 2, 8, 16, 16   # ch_in == ch_out (identity residual, no downsample)
    x = jax.random.normal(kx, (N, C, H, W), jnp.float32)
    params = init_params(kp, C, C)

    out = jax.block_until_ready(basic_block_forward(x, params))
    assert out.shape == (N, C, H, W), out.shape

    ref = jax.block_until_ready(_reference_forward(x, params))
    err = float(jnp.max(jnp.abs(out - ref)))
    # bf16 MXU operands with f32 accumulation: expected max abs error ~1e-2 for O(1)
    # activations; 5e-2 gives margin without masking structural bugs.
    assert err < 5e-2, f"max abs error vs reference: {err}"

    print("KERNEL_OK")
</pallas_src>

<mosaic_0001>
module attributes {stable_mosaic.version = 11 : i64} {
  func.func @_basic_block_kernel(%arg0: i32, %arg1: memref<1x16x16x128xf32, #tpu.memory_space<vmem>>, %arg2: memref<3x128x384xbf16, #tpu.memory_space<vmem>>, %arg3: memref<1x128xf32, #tpu.memory_space<vmem>>, %arg4: memref<3x128x384xbf16, #tpu.memory_space<vmem>>, %arg5: memref<1x128xf32, #tpu.memory_space<vmem>>, %arg6: memref<1x16x16x128xf32, #tpu.memory_space<vmem>>, %arg7: memref<18x24x128xf32, #tpu.memory_space<vmem>>, %arg8: memref<18x24x128xf32, #tpu.memory_space<vmem>>) attributes {dimension_semantics = [#tpu.dimension_semantics<parallel>], iteration_bounds = array<i64: 2>, scalar_prefetch = 0 : i64, scratch_operands = 2 : i64, tpu.core_type = #tpu.core_type<tc>, window_params = [{transform_indices = @transform_0, window_bounds = array<i64: 1, 16, 16, 128>}, {pipeline_mode = #tpu.pipeline_mode<synchronous>, transform_indices = @transform_1, window_bounds = array<i64: 3, 128, 384>}, {pipeline_mode = #tpu.pipeline_mode<synchronous>, transform_indices = @transform_2, window_bounds = array<i64: 1, 128>}, {pipeline_mode = #tpu.pipeline_mode<synchronous>, transform_indices = @transform_3, window_bounds = array<i64: 3, 128, 384>}, {pipeline_mode = #tpu.pipeline_mode<synchronous>, transform_indices = @transform_4, window_bounds = array<i64: 1, 128>}, {transform_indices = @transform_5, window_bounds = array<i64: 1, 16, 16, 128>}]} {
    %cst = arith.constant 0.000000e+00 : f32
    %0 = vector.broadcast %cst : f32 to vector<1x24x128xf32>
    %cst_0 = arith.constant 0.000000e+00 : f32
    %1 = vector.broadcast %cst_0 : f32 to vector<16x8x128xf32>
    %c0 = arith.constant 0 : index
    %c0_1 = arith.constant 0 : index
    %c0_2 = arith.constant 0 : index
    %2 = vector.load %arg7[%c0, %c0_1, %c0_2] : memref<18x24x128xf32, #tpu.memory_space<vmem>>, vector<1x24x128xf32>
    tpu.vector_store %arg7[%c0, %c0_1, %c0_2], %0 {strides = array<i32>} : memref<18x24x128xf32, #tpu.memory_space<vmem>>, vector<1x24x128xf32>,
    %c17 = arith.constant 17 : index
    %c0_3 = arith.constant 0 : index
    %c0_4 = arith.constant 0 : index
    %3 = vector.load %arg7[%c17, %c0_3, %c0_4] : memref<18x24x128xf32, #tpu.memory_space<vmem>>, vector<1x24x128xf32>
    tpu.vector_store %arg7[%c17, %c0_3, %c0_4], %0 {strides = array<i32>} : memref<18x24x128xf32, #tpu.memory_space<vmem>>, vector<1x24x128xf32>,
    %c1 = arith.constant 1 : index
    %c16 = arith.constant 16 : index
    %c0_5 = arith.constant 0 : index
    %4 = vector.load %arg7[%c1, %c16, %c0_5] : memref<18x24x128xf32, #tpu.memory_space<vmem>>, vector<16x8x128xf32>
    tpu.vector_store %arg7[%c1, %c16, %c0_5], %1 {strides = array<i32>} : memref<18x24x128xf32, #tpu.memory_space<vmem>>, vector<16x8x128xf32>,
    %c0_6 = arith.constant 0 : index
    %c0_7 = arith.constant 0 : index
    %c0_8 = arith.constant 0 : index
    %5 = vector.load %arg8[%c0_6, %c0_7, %c0_8] : memref<18x24x128xf32, #tpu.memory_space<vmem>>, vector<1x24x128xf32>
    tpu.vector_store %arg8[%c0_6, %c0_7, %c0_8], %0 {strides = array<i32>} : memref<18x24x128xf32, #tpu.memory_space<vmem>>, vector<1x24x128xf32>,
    %c17_9 = arith.constant 17 : index
    %c0_10 = arith.constant 0 : index
    %c0_11 = arith.constant 0 : index
    %6 = vector.load %arg8[%c17_9, %c0_10, %c0_11] : memref<18x24x128xf32, #tpu.memory_space<vmem>>, vector<1x24x128xf32>
    tpu.vector_store %arg8[%c17_9, %c0_10, %c0_11], %0 {strides = array<i32>} : memref<18x24x128xf32, #tpu.memory_space<vmem>>, vector<1x24x128xf32>,
    %c1_12 = arith.constant 1 : index
    %c16_13 = arith.constant 16 : index
    %c0_14 = arith.constant 0 : index
    %7 = vector.load %arg8[%c1_12, %c16_13, %c0_14] : memref<18x24x128xf32, #tpu.memory_space<vmem>>, vector<16x8x128xf32>
    tpu.vector_store %arg8[%c1_12, %c16_13, %c0_14], %1 {strides = array<i32>} : memref<18x24x128xf32, #tpu.memory_space<vmem>>, vector<16x8x128xf32>,
    %c0_15 = arith.constant 0 : index
    %c0_16 = arith.constant 0 : index
    %c0_17 = arith.constant 0 : index
    %c0_18 = arith.constant 0 : index
    %8 = vector.load %arg1[%c0_15, %c0_16, %c0_17, %c0_18] : memref<1x16x16x128xf32, #tpu.memory_space<vmem>>, vector<1x16x16x128xf32>
    %9 = vector.shape_cast %8 : vector<1x16x16x128xf32> to vector<16x16x128xf32>
    %c1_19 = arith.constant 1 : index
    %c0_20 = arith.constant 0 : index
    %c0_21 = arith.constant 0 : index
    %10 = vector.load %arg7[%c1_19, %c0_20, %c0_21] : memref<18x24x128xf32, #tpu.memory_space<vmem>>, vector<16x16x128xf32>
    tpu.vector_store %arg7[%c1_19, %c0_20, %c0_21], %9 {strides = array<i32>} : memref<18x24x128xf32, #tpu.memory_space<vmem>>, vector<16x16x128xf32>,
    %cst_22 = arith.constant 0.000000e+00 : f32
    %11 = vector.broadcast %cst_22 : f32 to vector<384x384xf32>
    %c0_23 = arith.constant 0 : index
    %c0_24 = arith.constant 0 : index
    %c0_25 = arith.constant 0 : index
    %12 = vector.load %arg7[%c0_23, %c0_24, %c0_25] : memref<18x24x128xf32, #tpu.memory_space<vmem>>, vector<16x24x128xf32>
    %13 = vector.shape_cast %12 : vector<16x24x128xf32> to vector<384x128xf32>
    %14 = arith.truncf %13 : vector<384x128xf32> to vector<384x128xbf16>
    %c0_26 = arith.constant 0 : index
    %c0_27 = arith.constant 0 : index
    %c0_28 = arith.constant 0 : index
    %15 = vector.load %arg2[%c0_26, %c0_27, %c0_28] : memref<3x128x384xbf16, #tpu.memory_space<vmem>>, vector<1x128x384xbf16>
    %16 = vector.shape_cast %15 : vector<1x128x384xbf16> to vector<128x384xbf16>
    %cst_29 = arith.constant dense<0.000000e+00> : vector<384x384xf32>
    %17 = tpu.matmul %14, %16, %cst_29 {dimension_numbers = #tpu.dot_dimension_numbers<[1], [0], [0], [1], [0, 0, 1, 1], [], []>} : vector<384x128xbf16>, vector<128x384xbf16>, vector<384x384xf32> -> vector<384x384xf32>
    %18 = arith.addf %11, %17 : vector<384x384xf32>
    %c1_30 = arith.constant 1 : index
    %c0_31 = arith.constant 0 : index
    %c0_32 = arith.constant 0 : index
    %19 = vector.load %arg7[%c1_30, %c0_31, %c0_32] : memref<18x24x128xf32, #tpu.memory_space<vmem>>, vector<16x24x128xf32>
    %20 = vector.shape_cast %19 : vector<16x24x128xf32> to vector<384x128xf32>
    %21 = arith.truncf %20 : vector<384x128xf32> to vector<384x128xbf16>
    %c1_33 = arith.constant 1 : index
    %c0_34 = arith.constant 0 : index
    %c0_35 = arith.constant 0 : index
    %22 = vector.load %arg2[%c1_33, %c0_34, %c0_35] : memref<3x128x384xbf16, #tpu.memory_space<vmem>>, vector<1x128x384xbf16>
    %23 = vector.shape_cast %22 : vector<1x128x384xbf16> to vector<128x384xbf16>
    %cst_36 = arith.constant dense<0.000000e+00> : vector<384x384xf32>
    %24 = tpu.matmul %21, %23, %cst_36 {dimension_numbers = #tpu.dot_dimension_numbers<[1], [0], [0], [1], [0, 0, 1, 1], [], []>} : vector<384x128xbf16>, vector<128x384xbf16>, vector<384x384xf32> -> vector<384x384xf32>
    %25 = arith.addf %18, %24 : vector<384x384xf32>
    %c2 = arith.constant 2 : index
    %c0_37 = arith.constant 0 : index
    %c0_38 = arith.constant 0 : index
    %26 = vector.load %arg7[%c2, %c0_37, %c0_38] : memref<18x24x128xf32, #tpu.memory_space<vmem>>, vector<16x24x128xf32>
    %27 = vector.shape_cast %26 : vector<16x24x128xf32> to vector<384x128xf32>
    %28 = arith.truncf %27 : vector<384x128xf32> to vector<384x128xbf16>
    %c2_39 = arith.constant 2 : index
    %c0_40 = arith.constant 0 : index
    %c0_41 = arith.constant 0 : index
    %29 = vector.load %arg2[%c2_39, %c0_40, %c0_41] : memref<3x128x384xbf16, #tpu.memory_space<vmem>>, vector<1x128x384xbf16>
    %30 = vector.shape_cast %29 : vector<1x128x384xbf16> to vector<128x384xbf16>
    %cst_42 = arith.constant dense<0.000000e+00> : vector<384x384xf32>
    %31 = tpu.matmul %28, %30, %cst_42 {dimension_numbers = #tpu.dot_dimension_numbers<[1], [0], [0], [1], [0, 0, 1, 1], [], []>} : vector<384x128xbf16>, vector<128x384xbf16>, vector<384x384xf32> -> vector<384x384xf32>
    %32 = arith.addf %25, %31 : vector<384x384xf32>
    %33 = vector.extract_strided_slice %32 {offsets = [0, 0], sizes = [384, 128], strides = [1, 1]} : vector<384x384xf32> to vector<384x128xf32>
    %c1_i32 = arith.constant 1 : i32
    %34 = tpu.dynamic_rotate %33 by %c1_i32 dim 0 : vector<384x128xf32>, i32 -> vector<384x128xf32>
    %35 = vector.extract_strided_slice %32 {offsets = [0, 256], sizes = [384, 128], strides = [1, 1]} : vector<384x384xf32> to vector<384x128xf32>
    %c383_i32 = arith.constant 383 : i32
    %36 = tpu.dynamic_rotate %35 by %c383_i32 dim 0 : vector<384x128xf32>, i32 -> vector<384x128xf32>
    %37 = vector.extract_strided_slice %32 {offsets = [0, 128], sizes = [384, 128], strides = [1, 1]} : vector<384x384xf32> to vector<384x128xf32>
    %38 = arith.addf %34, %37 : vector<384x128xf32>
    %39 = arith.addf %38, %36 : vector<384x128xf32>
    %40 = vector.shape_cast %39 : vector<384x128xf32> to vector<16x24x128xf32>
    %41 = vector.extract_strided_slice %40 {offsets = [0, 0, 0], sizes = [16, 16, 128], strides = [1, 1, 1]} : vector<16x24x128xf32> to vector<16x16x128xf32>
    %c0_43 = arith.constant 0 : index
    %c0_44 = arith.constant 0 : index
    %42 = vector.load %arg3[%c0_43, %c0_44] : memref<1x128xf32, #tpu.memory_space<vmem>>, vector<1x128xf32>
    %43 = vector.shape_cast %42 : vector<1x128xf32> to vector<128xf32>
    %44 = vector.shape_cast %43 : vector<128xf32> to vector<1x1x128xf32>
    %45 = vector.broadcast %44 : vector<1x1x128xf32> to vector<16x16x128xf32>
    %46 = arith.addf %41, %45 : vector<16x16x128xf32>
    %cst_45 = arith.constant 0.000000e+00 : f32
    %47 = vector.broadcast %cst_45 : f32 to vector<16x16x128xf32>
    %48 = arith.maximumf %46, %47 : vector<16x16x128xf32>
    %c1_46 = arith.constant 1 : index
    %c0_47 = arith.constant 0 : index
    %c0_48 = arith.constant 0 : index
    %49 = vector.load %arg8[%c1_46, %c0_47, %c0_48] : memref<18x24x128xf32, #tpu.memory_space<vmem>>, vector<16x16x128xf32>
    tpu.vector_store %arg8[%c1_46, %c0_47, %c0_48], %48 {strides = array<i32>} : memref<18x24x128xf32, #tpu.memory_space<vmem>>, vector<16x16x128xf32>,
    %cst_49 = arith.constant 0.000000e+00 : f32
    %50 = vector.broadcast %cst_49 : f32 to vector<384x384xf32>
    %c0_50 = arith.constant 0 : index
    %c0_51 = arith.constant 0 : index
    %c0_52 = arith.constant 0 : index
    %51 = vector.load %arg8[%c0_50, %c0_51, %c0_52] : memref<18x24x128xf32, #tpu.memory_space<vmem>>, vector<16x24x128xf32>
    %52 = vector.shape_cast %51 : vector<16x24x128xf32> to vector<384x128xf32>
    %53 = arith.truncf %52 : vector<384x128xf32> to vector<384x128xbf16>
    %c0_53 = arith.constant 0 : index
    %c0_54 = arith.constant 0 : index
    %c0_55 = arith.constant 0 : index
    %54 = vector.load %arg4[%c0_53, %c0_54, %c0_55] : memref<3x128x384xbf16, #tpu.memory_space<vmem>>, vector<1x128x384xbf16>
    %55 = vector.shape_cast %54 : vector<1x128x384xbf16> to vector<128x384xbf16>
    %cst_56 = arith.constant dense<0.000000e+00> : vector<384x384xf32>
    %56 = tpu.matmul %53, %55, %cst_56 {dimension_numbers = #tpu.dot_dimension_numbers<[1], [0], [0], [1], [0, 0, 1, 1], [], []>} : vector<384x128xbf16>, vector<128x384xbf16>, vector<384x384xf32> -> vector<384x384xf32>
    %57 = arith.addf %50, %56 : vector<384x384xf32>
    %c1_57 = arith.constant 1 : index
    %c0_58 = arith.constant 0 : index
    %c0_59 = arith.constant 0 : index
    %58 = vector.load %arg8[%c1_57, %c0_58, %c0_59] : memref<18x24x128xf32, #tpu.memory_space<vmem>>, vector<16x24x128xf32>
    %59 = vector.shape_cast %58 : vector<16x24x128xf32> to vector<384x128xf32>
    %60 = arith.truncf %59 : vector<384x128xf32> to vector<384x128xbf16>
    %c1_60 = arith.constant 1 : index
    %c0_61 = arith.constant 0 : index
    %c0_62 = arith.constant 0 : index
    %61 = vector.load %arg4[%c1_60, %c0_61, %c0_62] : memref<3x128x384xbf16, #tpu.memory_space<vmem>>, vector<1x128x384xbf16>
    %62 = vector.shape_cast %61 : vector<1x128x384xbf16> to vector<128x384xbf16>
    %cst_63 = arith.constant dense<0.000000e+00> : vector<384x384xf32>
    %63 = tpu.matmul %60, %62, %cst_63 {dimension_numbers = #tpu.dot_dimension_numbers<[1], [0], [0], [1], [0, 0, 1, 1], [], []>} : vector<384x128xbf16>, vector<128x384xbf16>, vector<384x384xf32> -> vector<384x384xf32>
    %64 = arith.addf %57, %63 : vector<384x384xf32>
    %c2_64 = arith.constant 2 : index
    %c0_65 = arith.constant 0 : index
    %c0_66 = arith.constant 0 : index
    %65 = vector.load %arg8[%c2_64, %c0_65, %c0_66] : memref<18x24x128xf32, #tpu.memory_space<vmem>>, vector<16x24x128xf32>
    %66 = vector.shape_cast %65 : vector<16x24x128xf32> to vector<384x128xf32>
    %67 = arith.truncf %66 : vector<384x128xf32> to vector<384x128xbf16>
    %c2_67 = arith.constant 2 : index
    %c0_68 = arith.constant 0 : index
    %c0_69 = arith.constant 0 : index
    %68 = vector.load %arg4[%c2_67, %c0_68, %c0_69] : memref<3x128x384xbf16, #tpu.memory_space<vmem>>, vector<1x128x384xbf16>
    %69 = vector.shape_cast %68 : vector<1x128x384xbf16> to vector<128x384xbf16>
    %cst_70 = arith.constant dense<0.000000e+00> : vector<384x384xf32>
    %70 = tpu.matmul %67, %69, %cst_70 {dimension_numbers = #tpu.dot_dimension_numbers<[1], [0], [0], [1], [0, 0, 1, 1], [], []>} : vector<384x128xbf16>, vector<128x384xbf16>, vector<384x384xf32> -> vector<384x384xf32>
    %71 = arith.addf %64, %70 : vector<384x384xf32>
    %72 = vector.extract_strided_slice %71 {offsets = [0, 0], sizes = [384, 128], strides = [1, 1]} : vector<384x384xf32> to vector<384x128xf32>
    %c1_i32_71 = arith.constant 1 : i32
    %73 = tpu.dynamic_rotate %72 by %c1_i32_71 dim 0 : vector<384x128xf32>, i32 -> vector<384x128xf32>
    %74 = vector.extract_strided_slice %71 {offsets = [0, 256], sizes = [384, 128], strides = [1, 1]} : vector<384x384xf32> to vector<384x128xf32>
    %c383_i32_72 = arith.constant 383 : i32
    %75 = tpu.dynamic_rotate %74 by %c383_i32_72 dim 0 : vector<384x128xf32>, i32 -> vector<384x128xf32>
    %76 = vector.extract_strided_slice %71 {offsets = [0, 128], sizes = [384, 128], strides = [1, 1]} : vector<384x384xf32> to vector<384x128xf32>
    %77 = arith.addf %73, %76 : vector<384x128xf32>
    %78 = arith.addf %77, %75 : vector<384x128xf32>
    %79 = vector.shape_cast %78 : vector<384x128xf32> to vector<16x24x128xf32>
    %80 = vector.extract_strided_slice %79 {offsets = [0, 0, 0], sizes = [16, 16, 128], strides = [1, 1, 1]} : vector<16x24x128xf32> to vector<16x16x128xf32>
    %c0_73 = arith.constant 0 : index
    %c0_74 = arith.constant 0 : index
    %81 = vector.load %arg5[%c0_73, %c0_74] : memref<1x128xf32, #tpu.memory_space<vmem>>, vector<1x128xf32>
    %82 = vector.shape_cast %81 : vector<1x128xf32> to vector<128xf32>
    %83 = vector.shape_cast %82 : vector<128xf32> to vector<1x1x128xf32>
    %84 = vector.broadcast %83 : vector<1x1x128xf32> to vector<16x16x128xf32>
    %85 = arith.addf %80, %84 : vector<16x16x128xf32>
    %86 = arith.addf %85, %9 : vector<16x16x128xf32>
    %cst_75 = arith.constant 0.000000e+00 : f32
    %87 = vector.broadcast %cst_75 : f32 to vector<16x16x128xf32>
    %88 = arith.maximumf %86, %87 : vector<16x16x128xf32>
    %89 = vector.shape_cast %88 : vector<16x16x128xf32> to vector<1x16x16x128xf32>
    %c0_76 = arith.constant 0 : index
    %c0_77 = arith.constant 0 : index
    %c0_78 = arith.constant 0 : index
    %c0_79 = arith.constant 0 : index
    %90 = vector.load %arg6[%c0_76, %c0_77, %c0_78, %c0_79] : memref<1x16x16x128xf32, #tpu.memory_space<vmem>>, vector<1x16x16x128xf32>
    tpu.vector_store %arg6[%c0_76, %c0_77, %c0_78, %c0_79], %89 {strides = array<i32>} : memref<1x16x16x128xf32, #tpu.memory_space<vmem>>, vector<1x16x16x128xf32>,
    return
  }
  func.func @transform_0(%arg0: i32) -> (i32, i32, i32, i32) {
    %c0_i32 = arith.constant 0 : i32
    %c0_i32_0 = arith.constant 0 : i32
    %c0_i32_1 = arith.constant 0 : i32
    %c0_i32_2 = arith.constant 0 : i32
    return %arg0, %c0_i32, %c0_i32_0, %c0_i32_1 : i32, i32, i32, i32
  }
  func.func @transform_1(%arg0: i32) -> (i32, i32, i32) {
    %c0_i32 = arith.constant 0 : i32
    %c0_i32_0 = arith.constant 0 : i32
    %c0_i32_1 = arith.constant 0 : i32
    %c0_i32_2 = arith.constant 0 : i32
    return %c0_i32, %c0_i32_0, %c0_i32_1 : i32, i32, i32
  }
  func.func @transform_2(%arg0: i32) -> (i32, i32) {
    %c0_i32 = arith.constant 0 : i32
    %c0_i32_0 = arith.constant 0 : i32
    %c0_i32_1 = arith.constant 0 : i32
    return %c0_i32, %c0_i32_0 : i32, i32
  }
  func.func @transform_3(%arg0: i32) -> (i32, i32, i32) {
    %c0_i32 = arith.constant 0 : i32
    %c0_i32_0 = arith.constant 0 : i32
    %c0_i32_1 = arith.constant 0 : i32
    %c0_i32_2 = arith.constant 0 : i32
    return %c0_i32, %c0_i32_0, %c0_i32_1 : i32, i32, i32
  }
  func.func @transform_4(%arg0: i32) -> (i32, i32) {
    %c0_i32 = arith.constant 0 : i32
    %c0_i32_0 = arith.constant 0 : i32
    %c0_i32_1 = arith.constant 0 : i32
    return %c0_i32, %c0_i32_0 : i32, i32
  }
  func.func @transform_5(%arg0: i32) -> (i32, i32, i32, i32) {
    %c0_i32 = arith.constant 0 : i32
    %c0_i32_0 = arith.constant 0 : i32
    %c0_i32_1 = arith.constant 0 : i32
    %c0_i32_2 = arith.constant 0 : i32
    return %arg0, %c0_i32, %c0_i32_0, %c0_i32_1 : i32, i32, i32, i32
  }
}

</mosaic_0001>

<llo_original>
// kernel: tpu_custom_call.1
$region0: #{tpu_custom_call.1}
  #allocation0 [shape = 'u32[]', space=smem, size = 0x4, offset = 0x4, fixed_abs, tag = 'smem constant byte address 0x4 - core index']
  #allocation1 [shape = 'u32[72,128]{1,0:T(1,128)}', space=vmem, size = 0x9000, scoped, tag = 'internal scratch']
  #allocation2 [shape = 'f32[18,24,128]{2,1,0:T(8,128)}', space=vmem, size = 0x36000, scoped, tag = 'scratch operand']
  #allocation3 [shape = 'f32[18,24,128]{2,1,0:T(8,128)}', space=vmem, size = 0x36000, scoped, tag = 'scratch operand']
  %s0 = inlined_call_operand.hbm [shape: f32[2,16,16,128], index: 0, kind: input, shape index: {}]
  %s1 = inlined_call_operand.hbm [shape: bf16[3,128,384], index: 1, kind: input, shape index: {}]
  %s2 = inlined_call_operand.vmem [shape: f32[1,128], index: 2, kind: input, shape index: {}]
  %s3 = inlined_call_operand.hbm [shape: bf16[3,128,384], index: 3, kind: input, shape index: {}]
  %s4 = inlined_call_operand.vmem [shape: f32[1,128], index: 4, kind: input, shape index: {}]
  %s5 = inlined_call_operand.hbm [shape: f32[2,16,16,128], index: 5, kind: output, shape index: {}]
  %s6 = sld [smem:[#allocation0]]
  $region65: #{tpu_custom_call.1} parent=0
    _
  %s8 = ssub.s32 1, %s6
  %s9 = scalar_select 0, %s8, %s6
  $region1: #{tpu_custom_call.1} parent=0
    #allocation4 [shape = 'u8[262144]{0}', space=vmem, size = 0x40000, scoped, tag = 'input window, operand 0']
    #allocation5 [shape = 's32[2]{0}', space=sflag, size = 0x8, scoped, tag = 'scoped memory for tpu_custom_call.1']
    #allocation6 [shape = 's32[2]{0}', space=sflag, size = 0x8, scoped, tag = 'scoped memory for tpu_custom_call.1']
    #allocation7 [shape = 'u8[294912]{0}', space=vmem, size = 0x48000, scoped, tag = 'input window, operand 1, single buffered']
    #allocation8 [shape = 's32[1]{0}', space=sflag, size = 0x4, scoped, tag = 'scoped memory for tpu_custom_call.1']
    #allocation9 [shape = 'u8[294912]{0}', space=vmem, size = 0x48000, scoped, tag = 'input window, operand 3, single buffered']
    #allocation10 [shape = 'u8[262144]{0}', space=vmem, size = 0x40000, scoped, tag = 'output window, operand 0']
    %10 = vsyncpa [#allocation5], 0
    %s11 = scalar_lea.sflag [#allocation5], 1
    %12 = vsyncpa %s11, 0
    %13 = vsyncpa [#allocation8], 0
    %14 = vsyncpa [#allocation6], 0
    %s15 = scalar_lea.sflag [#allocation6], 1
    %16 = vsyncpa %s15, 0
    loop: start=0, step=1, limit=4
    $region2: #{tpu_custom_call.1} parent=1 // loop_pre_header
      _
    $region3: #{tpu_custom_call.1} parent=1 // loop_header
      %s18 = sphi 0, %s22
      %p19 = scmp.ge.s32.totalorder %s18, 4
      %s28 = sphi 0, %s30
      %s31 = sphi 0, %s28
      %s32 = sphi 0, %s31
      %s48 = sphi 0, %s32
      %s52 = sphi 0, %s52
      %s54 = sphi 0, %s52
      %s55 = sphi 0, %s54
      %s69 = sphi 0, %s55
      %s73 = sphi 0, %s73
      %s75 = sphi 0, %s73
      %s76 = sphi 0, %s75
      %s90 = sphi 0, %s76
      %s94 = sphi 0, %s94
      %s96 = sphi 0, %s94
      %s97 = sphi 0, %s96
      %s111 = sphi 0, %s97
      %s115 = sphi 0, %s115
      %s117 = sphi 0, %s115
      %s118 = sphi 0, %s117
      %s132 = sphi 0, %s118
      %s138 = sphi 0, %s140
      %s141 = sphi 0, %s138
      %s142 = sphi 0, %s141
      %s158 = sphi 0, %s142
    $region4: #{tpu_custom_call.1} parent=1 // loop_header_branch
      %21 = sbr.rel (%p19) target = $region8
    $region5: #{tpu_custom_call.1} parent=1 // loop_body
      %s23 = ssub.s32 %s18, 1
      %s24 = ssub.s32 %s18, 2
      %s25 = sadd.s32 %s18, 1
      %s26 = ssub.s32 %s18, %s25
      %p27 = scmp.eq.s32.totalorder %s26, 0
      %s29 = sadd.s32 %s28, 1
      %s30 = scalar_select %p27, %s28, %s29
      %p33 = pneg %p27
      %p34 = scmp.eq.s32.totalorder %s18, 1
      %p35 = por %p33, %p34
      %p36 = scmp.ne.s32.totalorder %s28, %s31
      %p37 = scmp.eq.s32.totalorder %s18, 0
      %p38 = por %p36, %p37
      %p39 = scmp.ne.s32.totalorder %s28, %s31
      %p40 = scmp.eq.s32.totalorder %s23, 1
      %p41 = por %p39, %p40
      %p42 = scmp.ne.s32.totalorder %s31, %s32
      %p43 = scmp.eq.s32.totalorder %s23, 0
      %p44 = por %p42, %p43
      %p45 = scmp.ne.s32.totalorder %s31, %s32
      %p46 = scmp.eq.s32.totalorder %s24, 1
      %p47 = por %p45, %p46
      %p49 = scmp.ne.s32.totalorder %s32, %s48
      %p50 = scmp.eq.s32.totalorder %s24, 0
      %p51 = por %p49, %p50
      %s53 = sadd.s32 %s52, 1
      %p56 = scmp.eq.s32.totalorder %s18, 1
      %p57 = scmp.ne.s32.totalorder %s52, %s54
      %p58 = scmp.eq.s32.totalorder %s18, 0
      %p59 = por %p57, %p58
      %p60 = scmp.ne.s32.totalorder %s52, %s54
      %p61 = scmp.eq.s32.totalorder %s23, 1
      %p62 = por %p60, %p61
      %p63 = scmp.ne.s32.totalorder %s54, %s55
      %p64 = scmp.eq.s32.totalorder %s23, 0
      %p65 = por %p63, %p64
      %p66 = scmp.ne.s32.totalorder %s54, %s55
      %p67 = scmp.eq.s32.totalorder %s24, 1
      %p68 = por %p66, %p67
      %p70 = scmp.ne.s32.totalorder %s55, %s69
      %p71 = scmp.eq.s32.totalorder %s24, 0
      %p72 = por %p70, %p71
      %s74 = sadd.s32 %s73, 1
      %p77 = scmp.eq.s32.totalorder %s18, 1
      %p78 = scmp.ne.s32.totalorder %s73, %s75
      %p79 = scmp.eq.s32.totalorder %s18, 0
      %p80 = por %p78, %p79
      %p81 = scmp.ne.s32.totalorder %s73, %s75
      %p82 = scmp.eq.s32.totalorder %s23, 1
      %p83 = por %p81, %p82
      %p84 = scmp.ne.s32.totalorder %s75, %s76
      %p85 = scmp.eq.s32.totalorder %s23, 0
      %p86 = por %p84, %p85
      %p87 = scmp.ne.s32.totalorder %s75, %s76
      %p88 = scmp.eq.s32.totalorder %s24, 1
      %p89 = por %p87, %p88
      %p91 = scmp.ne.s32.totalorder %s76, %s90
      %p92 = scmp.eq.s32.totalorder %s24, 0
      %p93 = por %p91, %p92
      %s95 = sadd.s32 %s94, 1
      %p98 = scmp.eq.s32.totalorder %s18, 1
      %p99 = scmp.ne.s32.totalorder %s94, %s96
      %p100 = scmp.eq.s32.totalorder %s18, 0
      %p101 = por %p99, %p100
      %p102 = scmp.ne.s32.totalorder %s94, %s96
      %p103 = scmp.eq.s32.totalorder %s23, 1
      %p104 = por %p102, %p103
      %p105 = scmp.ne.s32.totalorder %s96, %s97
      %p106 = scmp.eq.s32.totalorder %s23, 0
      %p107 = por %p105, %p106
      %p108 = scmp.ne.s32.totalorder %s96, %s97
      %p109 = scmp.eq.s32.totalorder %s24, 1
      %p110 = por %p108, %p109
      %p112 = scmp.ne.s32.totalorder %s97, %s111
      %p113 = scmp.eq.s32.totalorder %s24, 0
      %p114 = por %p112, %p113
      %s116 = sadd.s32 %s115, 1
      %p119 = scmp.eq.s32.totalorder %s18, 1
      %p120 = scmp.ne.s32.totalorder %s115, %s117
      %p121 = scmp.eq.s32.totalorder %s18, 0
      %p122 = por %p120, %p121
      %p123 = scmp.ne.s32.totalorder %s115, %s117
      %p124 = scmp.eq.s32.totalorder %s23, 1
      %p125 = por %p123, %p124
      %p126 = scmp.ne.s32.totalorder %s117, %s118
      %p127 = scmp.eq.s32.totalorder %s23, 0
      %p128 = por %p126, %p127
      %p129 = scmp.ne.s32.totalorder %s117, %s118
      %p130 = scmp.eq.s32.totalorder %s24, 1
      %p131 = por %p129, %p130
      %p133 = scmp.ne.s32.totalorder %s118, %s132
      %p134 = scmp.eq.s32.totalorder %s24, 0
      %p135 = por %p133, %p134
      %s136 = ssub.s32 %s18, %s25
      %p137 = scmp.eq.s32.totalorder %s136, 0
      %s139 = sadd.s32 %s138, 1
      %s140 = scalar_select %p137, %s138, %s139
      %p143 = pneg %p137
      %p144 = scmp.eq.s32.totalorder %s18, 1
      %p145 = por %p143, %p144
      %p146 = scmp.ne.s32.totalorder %s138, %s141
      %p147 = scmp.eq.s32.totalorder %s18, 0
      %p148 = por %p146, %p147
      %p149 = scmp.ne.s32.totalorder %s138, %s141
      %p150 = scmp.eq.s32.totalorder %s23, 1
      %p151 = por %p149, %p150
      %p152 = scmp.ne.s32.totalorder %s141, %s142
      %p153 = scmp.eq.s32.totalorder %s23, 0
      %p154 = por %p152, %p153
      %p155 = scmp.ne.s32.totalorder %s141, %s142
      %p156 = scmp.eq.s32.totalorder %s24, 1
      %p157 = por %p155, %p156
      %p159 = scmp.ne.s32.totalorder %s142, %s158
      %p160 = scmp.eq.s32.totalorder %s24, 0
      %p161 = por %p159, %p160
      %p162 = scmp.le.s32.totalorder 1, %s18
      %p163 = scmp.lt.s32.totalorder %s18, 3
      %p164 = pnand %p162, %p163
      %p165 = pneg %p164
      // Predicated region
      $region9: #{tpu_custom_call.1} parent=5 // pred_check
        _
      $region10: #{tpu_custom_call.1} parent=5 // pred_check_branch
        %167 = sbr.rel (%p164) target = $region12
      $region11: #{tpu_custom_call.1} parent=5 // pred_region
        %s168 = ssub.s32 %s18, 1
        // Predicated region
        $region13: #{tpu_custom_call.1} parent=11 // pred_check
          %p169 = pneg %p65
        $region14: #{tpu_custom_call.1} parent=11 // pred_check_branch
          %171 = sbr.rel (%p169) target = $region16
        $region15: #{tpu_custom_call.1} parent=11 // pred_region
          %173 = vsyncadd [#allocation8], 0
          %s174 = sshll.u32 %s1, 4
          %s175 = int_to_ptr.hbm [resolvable:$true] %s174
          %s176 = sshll.u32 [#allocation7], 4
          %s177 = int_to_ptr.vmem [resolvable:$true] %s176
          %182 = dma.hbm_to_vmem [thread:$0]  %s175, 9216, %s177, [#allocation8], 192, 192, 12
        $region16: #{tpu_custom_call.1} parent=11 // pred_fallthru
          _
        // Predicated region
        $region17: #{tpu_custom_call.1} parent=11 // pred_check
          %p183 = pneg %p86
        $region18: #{tpu_custom_call.1} parent=11 // pred_check_branch
          %185 = sbr.rel (%p183) target = $region20
        $region19: #{tpu_custom_call.1} parent=11 // pred_region
          _
        $region20: #{tpu_custom_call.1} parent=11 // pred_fallthru
          _
        // Predicated region
        $region21: #{tpu_custom_call.1} parent=11 // pred_check
          %p186 = pneg %p107
        $region22: #{tpu_custom_call.1} parent=11 // pred_check_branch
          %188 = sbr.rel (%p186) target = $region24
        $region23: #{tpu_custom_call.1} parent=11 // pred_region
          %190 = vsyncadd [#allocation8], 0
          %s191 = sshll.u32 %s3, 4
          %s192 = int_to_ptr.hbm [resolvable:$true] %s191
          %s193 = sshll.u32 [#allocation9], 4
          %s194 = int_to_ptr.vmem [resolvable:$true] %s193
          %199 = dma.hbm_to_vmem [thread:$0]  %s192, 9216, %s194, [#allocation8], 192, 192, 12
        $region24: #{tpu_custom_call.1} parent=11 // pred_fallthru
          _
        // Predicated region
        $region25: #{tpu_custom_call.1} parent=11 // pred_check
          %p200 = pneg %p128
        $region26: #{tpu_custom_call.1} parent=11 // pred_check_branch
          %202 = sbr.rel (%p200) target = $region28
        $region27: #{tpu_custom_call.1} parent=11 // pred_region
          _
        $region28: #{tpu_custom_call.1} parent=11 // pred_fallthru
          _
      $region12: #{tpu_custom_call.1} parent=5 // pred_fallthru
        _
      %p203 = scmp.lt.s32.totalorder %s18, 2
      // Predicated region
      $region29: #{tpu_custom_call.1} parent=5 // pred_check
        %p204 = pneg %p203
      $region30: #{tpu_custom_call.1} parent=5 // pred_check_branch
        %206 = sbr.rel (%p204) target = $region32
      $region31: #{tpu_custom_call.1} parent=5 // pred_region
        // Predicated region
        $region33: #{tpu_custom_call.1} parent=31 // pred_check
          %p207 = pneg %p38
        $region34: #{tpu_custom_call.1} parent=31 // pred_check_branch
          %209 = sbr.rel (%p207) target = $region36
        $region35: #{tpu_custom_call.1} parent=31 // pred_region
          %s210 = sand.u32 %s28, 1
          %s211 = scalar_lea.sflag [#allocation5], %s210
          %s212 = sand.u32 %s28, 1
          %s213 = smul.addr %s212, 256
          %s214 = scalar_lea.vmem [#allocation4], %s213
          %216 = vsyncadd %s211, 0
          %s217 = smul.addr %s18, 32
          %s218 = smul.addr %s217, 8
          %s219 = scalar_lea.hbm %s0, %s218
          %s220 = sshll.u32 %s219, 4
          %s221 = int_to_ptr.hbm [resolvable:$true] %s220
          %s222 = sshll.u32 %s214, 4
          %s223 = int_to_ptr.vmem [resolvable:$true] %s222
          %228 = dma.hbm_to_vmem [thread:$0]  %s221, 4096, %s223, %s211, 128, 128, 8
        $region36: #{tpu_custom_call.1} parent=31 // pred_fallthru
          _
      $region32: #{tpu_custom_call.1} parent=5 // pred_fallthru
        _
      %p229 = scmp.le.s32.totalorder 1, %s18
      %p230 = scmp.lt.s32.totalorder %s18, 3
      %p231 = pnand %p229, %p230
      %p232 = pneg %p231
      // Predicated region
      $region37: #{tpu_custom_call.1} parent=5 // pred_check
        _
      $region38: #{tpu_custom_call.1} parent=5 // pred_check_branch
        %234 = sbr.rel (%p231) target = $region40
      $region39: #{tpu_custom_call.1} parent=5 // pred_region
        %s235 = ssub.s32 %s18, 1
        %s236 = sand.u32 %s31, 1
        %s237 = scalar_lea.sflag [#allocation5], %s236
        %s238 = sand.u32 %s31, 1
        %s239 = smul.addr %s238, 256
        %s240 = scalar_lea.vmem [#allocation4], %s239
        // Predicated region
        $region41: #{tpu_custom_call.1} parent=39 // pred_check
          %p241 = pneg %p44
        $region42: #{tpu_custom_call.1} parent=39 // pred_check_branch
          %243 = sbr.rel (%p241) target = $region44
        $region43: #{tpu_custom_call.1} parent=39 // pred_region
          %245 = dma.done %s237, 4096
        $region44: #{tpu_custom_call.1} parent=39 // pred_fallthru
          _
        // Predicated region
        $region45: #{tpu_custom_call.1} parent=39 // pred_check
          %p246 = pneg %p65
        $region46: #{tpu_custom_call.1} parent=39 // pred_check_branch
          %248 = sbr.rel (%p246) target = $region48
        $region47: #{tpu_custom_call.1} parent=39 // pred_region
          %250 = dma.done [#allocation8], 9216
        $region48: #{tpu_custom_call.1} parent=39 // pred_fallthru
          _
        // Predicated region
        $region49: #{tpu_custom_call.1} parent=39 // pred_check
          %p251 = pneg %p107
        $region50: #{tpu_custom_call.1} parent=39 // pred_check_branch
          %253 = sbr.rel (%p251) target = $region52
        $region51: #{tpu_custom_call.1} parent=39 // pred_region
          %255 = dma.done [#allocation8], 9216
        $region52: #{tpu_custom_call.1} parent=39 // pred_fallthru
          _
        %s256 = sand.u32 %s31, 1
        %s257 = scalar_lea.sflag [#allocation5], %s256
        %s258 = sand.u32 %s31, 1
        %s259 = smul.addr %s258, 256
        %s260 = scalar_lea.vmem [#allocation4], %s259
        %p261 = pneg %p44
        %p262 = pneg %p41
        %p263 = pneg %p65
        %p264 = pneg %p62
        %p265 = pneg %p86
        %p266 = pneg %p83
        %p267 = pneg %p107
        %p268 = pneg %p104
        %p269 = pneg %p128
        %p270 = pneg %p125
        %p271 = pneg %p154
        %p272 = pneg %p151
        %s273 = sand.u32 %s141, 1
        %s274 = scalar_lea.sflag [#allocation6], %s273
        %s275 = sand.u32 %s141, 1
        %s276 = smul.addr %s275, 256
        %s277 = scalar_lea.vmem [#allocation10], %s276
        %278 = vst [vmem:[#allocation2] sm:$0xff] 0.0
        %279 = vst [vmem:[#allocation2 + $0x8] sm:$0xff] 0.0
        %280 = vst [vmem:[#allocation2 + $0x10] sm:$0xff] 0.0
        %s281 = scalar_lea.vmem [#allocation2], 408
        %282 = vst [vmem:[%s281] sm:$0xff] 0.0
        %283 = vst [vmem:[%s281 + $0x8] sm:$0xff] 0.0
        %284 = vst [vmem:[%s281 + $0x10] sm:$0xff] 0.0
        %s285 = scalar_lea.vmem [#allocation2], 24
        %286 = vst [vmem:[%s285 + $0x10] sm:$0xff] 0.0
        %287 = vst [vmem:[%s285 + $0x28] sm:$0xff] 0.0
        %288 = vst [vmem:[%s285 + $0x40] sm:$0xff] 0.0
        %289 = vst [vmem:[%s285 + $0x58] sm:$0xff] 0.0
        %290 = vst [vmem:[%s285 + $0x70] sm:$0xff] 0.0
        %291 = vst [vmem:[%s285 + $0x88] sm:$0xff] 0.0
        %292 = vst [vmem:[%s285 + $0xa0] sm:$0xff] 0.0
        %293 = vst [vmem:[%s285 + $0xb8] sm:$0xff] 0.0
        %294 = vst [vmem:[%s285 + $0xd0] sm:$0xff] 0.0
        %295 = vst [vmem:[%s285 + $0xe8] sm:$0xff] 0.0
        %296 = vst [vmem:[%s285 + $0x100] sm:$0xff] 0.0
        %297 = vst [vmem:[%s285 + $0x118] sm:$0xff] 0.0
        %298 = vst [vmem:[%s285 + $0x130] sm:$0xff] 0.0
        %299 = vst [vmem:[%s285 + $0x148] sm:$0xff] 0.0
        %300 = vst [vmem:[%s285 + $0x160] sm:$0xff] 0.0
        %301 = vst [vmem:[%s285 + $0x178] sm:$0xff] 0.0
        %302 = vst [vmem:[#allocation3] sm:$0xff] 0.0
        %303 = vst [vmem:[#allocation3 + $0x8] sm:$0xff] 0.0
        %304 = vst [vmem:[#allocation3 + $0x10] sm:$0xff] 0.0
        %s305 = scalar_lea.vmem [#allocation3], 408
        %306 = vst [vmem:[%s305] sm:$0xff] 0.0
        %307 = vst [vmem:[%s305 + $0x8] sm:$0xff] 0.0
        %308 = vst [vmem:[%s305 + $0x10] sm:$0xff] 0.0
        %s309 = scalar_lea.vmem [#allocation3], 24
        %310 = vst [vmem:[%s309 + $0x10] sm:$0xff] 0.0
        %311 = vst [vmem:[%s309 + $0x28] sm:$0xff] 0.0
        %312 = vst [vmem:[%s309 + $0x40] sm:$0xff] 0.0
        %313 = vst [vmem:[%s309 + $0x58] sm:$0xff] 0.0
        %314 = vst [vmem:[%s309 + $0x70] sm:$0xff] 0.0
        %315 = vst [vmem:[%s309 + $0x88] sm:$0xff] 0.0
        %316 = vst [vmem:[%s309 + $0xa0] sm:$0xff] 0.0
        %317 = vst [vmem:[%s309 + $0xb8] sm:$0xff] 0.0
        %318 = vst [vmem:[%s309 + $0xd0] sm:$0xff] 0.0
        %319 = vst [vmem:[%s309 + $0xe8] sm:$0xff] 0.0
        %320 = vst [vmem:[%s309 + $0x100] sm:$0xff] 0.0
        %321 = vst [vmem:[%s309 + $0x118] sm:$0xff] 0.0
        %322 = vst [vmem:[%s309 + $0x130] sm:$0xff] 0.0
        %323 = vst [vmem:[%s309 + $0x148] sm:$0xff] 0.0
        %324 = vst [vmem:[%s309 + $0x160] sm:$0xff] 0.0
        %325 = vst [vmem:[%s309 + $0x178] sm:$0xff] 0.0
        %v326 = vld [vmem:[%s240] sm:$0xff]
        %v327 = vld [vmem:[%s240 + $0x8] sm:$0xff]
        %v328 = vld [vmem:[%s240 + $0x10] sm:$0xff]
        %v329 = vld [vmem:[%s240 + $0x18] sm:$0xff]
        %v330 = vld [vmem:[%s240 + $0x20] sm:$0xff]
        %v331 = vld [vmem:[%s240 + $0x28] sm:$0xff]
        %v332 = vld [vmem:[%s240 + $0x30] sm:$0xff]
        %v333 = vld [vmem:[%s240 + $0x38] sm:$0xff]
        %v334 = vld [vmem:[%s240 + $0x40] sm:$0xff]
        %v335 = vld [vmem:[%s240 + $0x48] sm:$0xff]
        %v336 = vld [vmem:[%s240 + $0x50] sm:$0xff]
        %v337 = vld [vmem:[%s240 + $0x58] sm:$0xff]
        %v338 = vld [vmem:[%s240 + $0x60] sm:$0xff]
        %v339 = vld [vmem:[%s240 + $0x68] sm:$0xff]
        %v340 = vld [vmem:[%s240 + $0x70] sm:$0xff]
        %v341 = vld [vmem:[%s240 + $0x78] sm:$0xff]
        %v342 = vld [vmem:[%s240 + $0x80] sm:$0xff]
        %v343 = vld [vmem:[%s240 + $0x88] sm:$0xff]
        %v344 = vld [vmem:[%s240 + $0x90] sm:$0xff]
        %v345 = vld [vmem:[%s240 + $0x98] sm:$0xff]
        %v346 = vld [vmem:[%s240 + $0xa0] sm:$0xff]
        %v347 = vld [vmem:[%s240 + $0xa8] sm:$0xff]
        %v348 = vld [vmem:[%s240 + $0xb0] sm:$0xff]
        %v349 = vld [vmem:[%s240 + $0xb8] sm:$0xff]
        %v350 = vld [vmem:[%s240 + $0xc0] sm:$0xff]
        %v351 = vld [vmem:[%s240 + $0xc8] sm:$0xff]
        %v352 = vld [vmem:[%s240 + $0xd0] sm:$0xff]
        %v353 = vld [vmem:[%s240 + $0xd8] sm:$0xff]
        %v354 = vld [vmem:[%s240 + $0xe0] sm:$0xff]
        %v355 = vld [vmem:[%s240 + $0xe8] sm:$0xff]
        %v356 = vld [vmem:[%s240 + $0xf0] sm:$0xff]
        %v357 = vld [vmem:[%s240 + $0xf8] sm:$0xff]
        %358 = vst [vmem:[%s285] sm:$0xff] %v326
        %359 = vst [vmem:[%s285 + $0x8] sm:$0xff] %v327
        %360 = vst [vmem:[%s285 + $0x18] sm:$0xff] %v328
        %361 = vst [vmem:[%s285 + $0x20] sm:$0xff] %v329
        %362 = vst [vmem:[%s285 + $0x30] sm:$0xff] %v330
        %363 = vst [vmem:[%s285 + $0x38] sm:$0xff] %v331
        %364 = vst [vmem:[%s285 + $0x48] sm:$0xff] %v332
        %365 = vst [vmem:[%s285 + $0x50] sm:$0xff] %v333
        %366 = vst [vmem:[%s285 + $0x60] sm:$0xff] %v334
        %367 = vst [vmem:[%s285 + $0x68] sm:$0xff] %v335
        %368 = vst [vmem:[%s285 + $0x78] sm:$0xff] %v336
        %369 = vst [vmem:[%s285 + $0x80] sm:$0xff] %v337
        %370 = vst [vmem:[%s285 + $0x90] sm:$0xff] %v338
        %371 = vst [vmem:[%s285 + $0x98] sm:$0xff] %v339
        %372 = vst [vmem:[%s285 + $0xa8] sm:$0xff] %v340
        %373 = vst [vmem:[%s285 + $0xb0] sm:$0xff] %v341
        %374 = vst [vmem:[%s285 + $0xc0] sm:$0xff] %v342
        %375 = vst [vmem:[%s285 + $0xc8] sm:$0xff] %v343
        %376 = vst [vmem:[%s285 + $0xd8] sm:$0xff] %v344
        %377 = vst [vmem:[%s285 + $0xe0] sm:$0xff] %v345
        %378 = vst [vmem:[%s285 + $0xf0] sm:$0xff] %v346
        %379 = vst [vmem:[%s285 + $0xf8] sm:$0xff] %v347
        %380 = vst [vmem:[%s285 + $0x108] sm:$0xff] %v348
        %381 = vst [vmem:[%s285 + $0x110] sm:$0xff] %v349
        %382 = vst [vmem:[%s285 + $0x120] sm:$0xff] %v350
        %383 = vst [vmem:[%s285 + $0x128] sm:$0xff] %v351
        %384 = vst [vmem:[%s285 + $0x138] sm:$0xff] %v352
        %385 = vst [vmem:[%s285 + $0x140] sm:$0xff] %v353
        %386 = vst [vmem:[%s285 + $0x150] sm:$0xff] %v354
        %387 = vst [vmem:[%s285 + $0x158] sm:$0xff] %v355
        %388 = vst [vmem:[%s285 + $0x168] sm:$0xff] %v356
        %389 = vst [vmem:[%s285 + $0x170] sm:$0xff] %v357
        %v390 = vld [vmem:[#allocation2] sm:$0xff]
        %v391 = vld [vmem:[#allocation2 + $0x8] sm:$0xff]
        %v392 = vld [vmem:[#allocation2 + $0x10] sm:$0xff]
        %v393 = vld [vmem:[#allocation2 + $0x18] sm:$0xff]
        %v394 = vld [vmem:[#allocation2 + $0x20] sm:$0xff]
        %v395 = vld [vmem:[#allocation2 + $0x28] sm:$0xff]
        %v396 = vld [vmem:[#allocation2 + $0x30] sm:$0xff]
        %v397 = vld [vmem:[#allocation2 + $0x38] sm:$0xff]
        %v398 = vld [vmem:[#allocation2 + $0x40] sm:$0xff]
        %v399 = vld [vmem:[#allocation2 + $0x48] sm:$0xff]
        %v400 = vld [vmem:[#allocation2 + $0x50] sm:$0xff]
        %v401 = vld [vmem:[#allocation2 + $0x58] sm:$0xff]
        %v402 = vld [vmem:[#allocation2 + $0x60] sm:$0xff]
        %v403 = vld [vmem:[#allocation2 + $0x68] sm:$0xff]
        %v404 = vld [vmem:[#allocation2 + $0x70] sm:$0xff]
        %v405 = vld [vmem:[#allocation2 + $0x78] sm:$0xff]
        %v406 = vld [vmem:[#allocation2 + $0x80] sm:$0xff]
        %v407 = vld [vmem:[#allocation2 + $0x88] sm:$0xff]
        %v408 = vld [vmem:[#allocation2 + $0x90] sm:$0xff]
        %v409 = vld [vmem:[#allocation2 + $0x98] sm:$0xff]
        %v410 = vld [vmem:[#allocation2 + $0xa0] sm:$0xff]
        %v411 = vld [vmem:[#allocation2 + $0xa8] sm:$0xff]
        %v412 = vld [vmem:[#allocation2 + $0xb0] sm:$0xff]
        %v413 = vld [vmem:[#allocation2 + $0xb8] sm:$0xff]
        %v414 = vld [vmem:[#allocation2 + $0xc0] sm:$0xff]
        %v415 = vld [vmem:[#allocation2 + $0xc8] sm:$0xff]
        %v416 = vld [vmem:[#allocation2 + $0xd0] sm:$0xff]
        %v417 = vld [vmem:[#allocation2 + $0xd8] sm:$0xff]
        %v418 = vld [vmem:[#allocation2 + $0xe0] sm:$0xff]
        %v419 = vld [vmem:[#allocation2 + $0xe8] sm:$0xff]
        %v420 = vld [vmem:[#allocation2 + $0xf0] sm:$0xff]
        %v421 = vld [vmem:[#allocation2 + $0xf8] sm:$0xff]
        %v422 = vld [vmem:[#allocation2 + $0x100] sm:$0xff]
        %v423 = vld [vmem:[#allocation2 + $0x108] sm:$0xff]
        %v424 = vld [vmem:[#allocation2 + $0x110] sm:$0xff]
        %v425 = vld [vmem:[#allocation2 + $0x118] sm:$0xff]
        %v426 = vld [vmem:[#allocation2 + $0x120] sm:$0xff]
        %v427 = vld [vmem:[#allocation2 + $0x128] sm:$0xff]
        %v428 = vld [vmem:[#allocation2 + $0x130] sm:$0xff]
        %v429 = vld [vmem:[#allocation2 + $0x138] sm:$0xff]
        %v430 = vld [vmem:[#allocation2 + $0x140] sm:$0xff]
        %v431 = vld [vmem:[#allocation2 + $0x148] sm:$0xff]
        %v432 = vld [vmem:[#allocation2 + $0x150] sm:$0xff]
        %v433 = vld [vmem:[#allocation2 + $0x158] sm:$0xff]
        %v434 = vld [vmem:[#allocation2 + $0x160] sm:$0xff]
        %v435 = vld [vmem:[#allocation2 + $0x168] sm:$0xff]
        %v436 = vld [vmem:[#allocation2 + $0x170] sm:$0xff]
        %v437 = vld [vmem:[#allocation2 + $0x178] sm:$0xff]
        %v438 = vpack.c.bf16 %v391, %v390
        %v439 = vpack.c.bf16 %v393, %v392
        %v440 = vpack.c.bf16 %v395, %v394
        %v441 = vpack.c.bf16 %v397, %v396
        %v442 = vpack.c.bf16 %v399, %v398
        %v443 = vpack.c.bf16 %v401, %v400
        %v444 = vpack.c.bf16 %v403, %v402
        %v445 = vpack.c.bf16 %v405, %v404
        %v446 = vpack.c.bf16 %v407, %v406
        %v447 = vpack.c.bf16 %v409, %v408
        %v448 = vpack.c.bf16 %v411, %v410
        %v449 = vpack.c.bf16 %v413, %v412
        %v450 = vpack.c.bf16 %v415, %v414
        %v451 = vpack.c.bf16 %v417, %v416
        %v452 = vpack.c.bf16 %v419, %v418
        %v453 = vpack.c.bf16 %v421, %v420
        %v454 = vpack.c.bf16 %v423, %v422
        %v455 = vpack.c.bf16 %v425, %v424
        %v456 = vpack.c.bf16 %v427, %v426
        %v457 = vpack.c.bf16 %v429, %v428
        %v458 = vpack.c.bf16 %v431, %v430
        %v459 = vpack.c.bf16 %v433, %v432
        %v460 = vpack.c.bf16 %v435, %v434
        %v461 = vpack.c.bf16 %v437, %v436
        %v462 = vld [vmem:[#allocation7] sm:$0xff]
        %v463 = vld [vmem:[#allocation7 + $0x8] sm:$0xf]
        %v464 = vld [vmem:[#allocation7 + $0xc] sm:$0xff]
        %v465 = vld [vmem:[#allocation7 + $0x14] sm:$0xf]
        %v466 = vld [vmem:[#allocation7 + $0x18] sm:$0xff]
        %v467 = vld [vmem:[#allocation7 + $0x20] sm:$0xf]
        %v468 = vld [vmem:[#allocation7 + $0x24] sm:$0xff]
        %v469 = vld [vmem:[#allocation7 + $0x2c] sm:$0xf]
        %v470 = vld [vmem:[#allocation7 + $0x30] sm:$0xff]
        %v471 = vld [vmem:[#allocation7 + $0x38] sm:$0xf]
        %v472 = vld [vmem:[#allocation7 + $0x3c] sm:$0xff]
        %v473 = vld [vmem:[#allocation7 + $0x44] sm:$0xf]
        %v474 = vld [vmem:[#allocation7 + $0x48] sm:$0xff]
        %v475 = vld [vmem:[#allocation7 + $0x50] sm:$0xf]
        %v476 = vld [vmem:[#allocation7 + $0x54] sm:$0xff]
        %v477 = vld [vmem:[#allocation7 + $0x5c] sm:$0xf]
        %v478 = vld [vmem:[#allocation7 + $0x60] sm:$0xff]
        %v479 = vld [vmem:[#allocation7 + $0x68] sm:$0xf]
        %v480 = vld [vmem:[#allocation7 + $0x6c] sm:$0xff]
        %v481 = vld [vmem:[#allocation7 + $0x74] sm:$0xf]
        %v482 = vld [vmem:[#allocation7 + $0x78] sm:$0xff]
        %v483 = vld [vmem:[#allocation7 + $0x80] sm:$0xf]
        %v484 = vld [vmem:[#allocation7 + $0x84] sm:$0xff]
        %v485 = vld [vmem:[#allocation7 + $0x8c] sm:$0xf]
        %v486 = vld [vmem:[#allocation7 + $0x90] sm:$0xff]
        %v487 = vld [vmem:[#allocation7 + $0x98] sm:$0xf]
        %v488 = vld [vmem:[#allocation7 + $0x9c] sm:$0xff]
        %v489 = vld [vmem:[#allocation7 + $0xa4] sm:$0xf]
        %v490 = vld [vmem:[#allocation7 + $0xa8] sm:$0xff]
        %v491 = vld [vmem:[#allocation7 + $0xb0] sm:$0xf]
        %v492 = vld [vmem:[#allocation7 + $0xb4] sm:$0xff]
        %v493 = vld [vmem:[#allocation7 + $0xbc] sm:$0xf]
        %v494 = vld [vmem:[%s285] sm:$0xff]
        %v495 = vld [vmem:[%s285 + $0x8] sm:$0xff]
        %v496 = vld [vmem:[%s285 + $0x10] sm:$0xff]
        %v497 = vld [vmem:[%s285 + $0x18] sm:$0xff]
        %v498 = vld [vmem:[%s285 + $0x20] sm:$0xff]
        %v499 = vld [vmem:[%s285 + $0x28] sm:$0xff]
        %v500 = vld [vmem:[%s285 + $0x30] sm:$0xff]
        %v501 = vld [vmem:[%s285 + $0x38] sm:$0xff]
        %v502 = vld [vmem:[%s285 + $0x40] sm:$0xff]
        %v503 = vld [vmem:[%s285 + $0x48] sm:$0xff]
        %v504 = vld [vmem:[%s285 + $0x50] sm:$0xff]
        %v505 = vld [vmem:[%s285 + $0x58] sm:$0xff]
        %v506 = vld [vmem:[%s285 + $0x60] sm:$0xff]
        %v507 = vld [vmem:[%s285 + $0x68] sm:$0xff]
        %v508 = vld [vmem:[%s285 + $0x70] sm:$0xff]
        %v509 = vld [vmem:[%s285 + $0x78] sm:$0xff]
        %v510 = vld [vmem:[%s285 + $0x80] sm:$0xff]
        %v511 = vld [vmem:[%s285 + $0x88] sm:$0xff]
        %v512 = vld [vmem:[%s285 + $0x90] sm:$0xff]
        %v513 = vld [vmem:[%s285 + $0x98] sm:$0xff]
        %v514 = vld [vmem:[%s285 + $0xa0] sm:$0xff]
        %v515 = vld [vmem:[%s285 + $0xa8] sm:$0xff]
        %v516 = vld [vmem:[%s285 + $0xb0] sm:$0xff]
        %v517 = vld [vmem:[%s285 + $0xb8] sm:$0xff]
        %v518 = vld [vmem:[%s285 + $0xc0] sm:$0xff]
        %v519 = vld [vmem:[%s285 + $0xc8] sm:$0xff]
        %v520 = vld [vmem:[%s285 + $0xd0] sm:$0xff]
        %v521 = vld [vmem:[%s285 + $0xd8] sm:$0xff]
        %v522 = vld [vmem:[%s285 + $0xe0] sm:$0xff]
        %v523 = vld [vmem:[%s285 + $0xe8] sm:$0xff]
        %v524 = vld [vmem:[%s285 + $0xf0] sm:$0xff]
        %v525 = vld [vmem:[%s285 + $0xf8] sm:$0xff]
        %v526 = vld [vmem:[%s285 + $0x100] sm:$0xff]
        %v527 = vld [vmem:[%s285 + $0x108] sm:$0xff]
        %v528 = vld [vmem:[%s285 + $0x110] sm:$0xff]
        %v529 = vld [vmem:[%s285 + $0x118] sm:$0xff]
        %v530 = vld [vmem:[%s285 + $0x120] sm:$0xff]
        %v531 = vld [vmem:[%s285 + $0x128] sm:$0xff]
        %v532 = vld [vmem:[%s285 + $0x130] sm:$0xff]
        %v533 = vld [vmem:[%s285 + $0x138] sm:$0xff]
        %v534 = vld [vmem:[%s285 + $0x140] sm:$0xff]
        %v535 = vld [vmem:[%s285 + $0x148] sm:$0xff]
        %v536 = vld [vmem:[%s285 + $0x150] sm:$0xff]
        %v537 = vld [vmem:[%s285 + $0x158] sm:$0xff]
        %v538 = vld [vmem:[%s285 + $0x160] sm:$0xff]
        %v539 = vld [vmem:[%s285 + $0x168] sm:$0xff]
        %v540 = vld [vmem:[%s285 + $0x170] sm:$0xff]
        %v541 = vld [vmem:[%s285 + $0x178] sm:$0xff]
        %v542 = vpack.c.bf16 %v495, %v494
        %v543 = vpack.c.bf16 %v497, %v496
        %v544 = vpack.c.bf16 %v499, %v498
        %v545 = vpack.c.bf16 %v501, %v500
        %v546 = vpack.c.bf16 %v503, %v502
        %v547 = vpack.c.bf16 %v505, %v504
        %v548 = vpack.c.bf16 %v507, %v506
        %v549 = vpack.c.bf16 %v509, %v508
        %v550 = vpack.c.bf16 %v511, %v510
        %v551 = vpack.c.bf16 %v513, %v512
        %v552 = vpack.c.bf16 %v515, %v514
        %v553 = vpack.c.bf16 %v517, %v516
        %v554 = vpack.c.bf16 %v519, %v518
        %v555 = vpack.c.bf16 %v521, %v520
        %v556 = vpack.c.bf16 %v523, %v522
        %v557 = vpack.c.bf16 %v525, %v524
        %v558 = vpack.c.bf16 %v527, %v526
        %v559 = vpack.c.bf16 %v529, %v528
        %v560 = vpack.c.bf16 %v531, %v530
        %v561 = vpack.c.bf16 %v533, %v532
        %v562 = vpack.c.bf16 %v535, %v534
        %v563 = vpack.c.bf16 %v537, %v536
        %v564 = vpack.c.bf16 %v539, %v538
        %v565 = vpack.c.bf16 %v541, %v540
        %s566 = scalar_lea.vmem [#allocation7], 192
        %v567 = vld [vmem:[%s566] sm:$0xff]
        %v568 = vld [vmem:[%s566 + $0x8] sm:$0xf]
        %v569 = vld [vmem:[%s566 + $0xc] sm:$0xff]
        %v570 = vld [vmem:[%s566 + $0x14] sm:$0xf]
        %v571 = vld [vmem:[%s566 + $0x18] sm:$0xff]
        %v572 = vld [vmem:[%s566 + $0x20] sm:$0xf]
        %v573 = vld [vmem:[%s566 + $0x24] sm:$0xff]
        %v574 = vld [vmem:[%s566 + $0x2c] sm:$0xf]
        %v575 = vld [vmem:[%s566 + $0x30] sm:$0xff]
        %v576 = vld [vmem:[%s566 + $0x38] sm:$0xf]
        %v577 = vld [vmem:[%s566 + $0x3c] sm:$0xff]
        %v578 = vld [vmem:[%s566 + $0x44] sm:$0xf]
        %v579 = vld [vmem:[%s566 + $0x48] sm:$0xff]
        %v580 = vld [vmem:[%s566 + $0x50] sm:$0xf]
        %v581 = vld [vmem:[%s566 + $0x54] sm:$0xff]
        %v582 = vld [vmem:[%s566 + $0x5c] sm:$0xf]
        %v583 = vld [vmem:[%s566 + $0x60] sm:$0xff]
        %v584 = vld [vmem:[%s566 + $0x68] sm:$0xf]
        %v585 = vld [vmem:[%s566 + $0x6c] sm:$0xff]
        %v586 = vld [vmem:[%s566 + $0x74] sm:$0xf]
        %v587 = vld [vmem:[%s566 + $0x78] sm:$0xff]
        %v588 = vld [vmem:[%s566 + $0x80] sm:$0xf]
        %v589 = vld [vmem:[%s566 + $0x84] sm:$0xff]
        %v590 = vld [vmem:[%s566 + $0x8c] sm:$0xf]
        %v591 = vld [vmem:[%s566 + $0x90] sm:$0xff]
        %v592 = vld [vmem:[%s566 + $0x98] sm:$0xf]
        %v593 = vld [vmem:[%s566 + $0x9c] sm:$0xff]
        %v594 = vld [vmem:[%s566 + $0xa4] sm:$0xf]
        %v595 = vld [vmem:[%s566 + $0xa8] sm:$0xff]
        %v596 = vld [vmem:[%s566 + $0xb0] sm:$0xf]
        %v597 = vld [vmem:[%s566 + $0xb4] sm:$0xff]
        %v598 = vld [vmem:[%s566 + $0xbc] sm:$0xf]
        %v631 = vunpack.c.l.b16 %v567
        %v632 = vunpack.c.h.b16 %v567
        %v633 = vunpack.c.l.b16 %v568
        %v634 = vunpack.c.l.b16 %v569
        %v635 = vunpack.c.h.b16 %v569
        %v636 = vunpack.c.l.b16 %v570
        %v637 = vunpack.c.l.b16 %v571
        %v638 = vunpack.c.h.b16 %v571
        %v639 = vunpack.c.l.b16 %v572
        %v640 = vunpack.c.l.b16 %v573
        %v641 = vunpack.c.h.b16 %v573
        %v642 = vunpack.c.l.b16 %v574
        %v643 = vunpack.c.l.b16 %v575
        %v644 = vunpack.c.h.b16 %v575
        %v645 = vunpack.c.l.b16 %v576
        %v646 = vunpack.c.l.b16 %v577
        %v647 = vunpack.c.h.b16 %v577
        %v648 = vunpack.c.l.b16 %v578
        %v649 = vunpack.c.l.b16 %v579
        %v650 = vunpack.c.h.b16 %v579
        %v651 = vunpack.c.l.b16 %v580
        %v652 = vunpack.c.l.b16 %v581
        %v653 = vunpack.c.h.b16 %v581
        %v654 = vunpack.c.l.b16 %v582
        %v655 = vunpack.c.l.b16 %v583
        %v656 = vunpack.c.h.b16 %v583
        %v657 = vunpack.c.l.b16 %v584
        %v658 = vunpack.c.l.b16 %v585
        %v659 = vunpack.c.h.b16 %v585
        %v660 = vunpack.c.l.b16 %v586
        %v661 = vunpack.c.l.b16 %v587
        %v662 = vunpack.c.h.b16 %v587
        %v663 = vunpack.c.l.b16 %v588
        %v664 = vunpack.c.l.b16 %v589
        %v665 = vunpack.c.h.b16 %v589
        %v666 = vunpack.c.l.b16 %v590
        %v667 = vunpack.c.l.b16 %v591
        %v668 = vunpack.c.h.b16 %v591
        %v669 = vunpack.c.l.b16 %v592
        %v670 = vunpack.c.l.b16 %v593
        %v671 = vunpack.c.h.b16 %v593
        %v672 = vunpack.c.l.b16 %v594
        %v673 = vunpack.c.l.b16 %v595
        %v674 = vunpack.c.h.b16 %v595
        %v675 = vunpack.c.l.b16 %v596
        %v676 = vunpack.c.l.b16 %v597
        %v677 = vunpack.c.h.b16 %v597
        %v678 = vunpack.c.l.b16 %v598
        %v679 = vpack.c.b16 %v634, %v631
        %v680 = vpack.c.b16 %v635, %v632
        %v681 = vpack.c.b16 %v636, %v633
        %v682 = vpack.c.b16 %v640, %v637
        %v683 = vpack.c.b16 %v641, %v638
        %v684 = vpack.c.b16 %v642, %v639
        %v685 = vpack.c.b16 %v646, %v643
        %v686 = vpack.c.b16 %v647, %v644
        %v687 = vpack.c.b16 %v648, %v645
        %v688 = vpack.c.b16 %v652, %v649
        %v689 = vpack.c.b16 %v653, %v650
        %v690 = vpack.c.b16 %v654, %v651
        %v691 = vpack.c.b16 %v658, %v655
        %v692 = vpack.c.b16 %v659, %v656
        %v693 = vpack.c.b16 %v660, %v657
        %v694 = vpack.c.b16 %v664, %v661
        %v695 = vpack.c.b16 %v665, %v662
        %v696 = vpack.c.b16 %v666, %v663
        %v697 = vpack.c.b16 %v670, %v667
        %v698 = vpack.c.b16 %v671, %v668
        %v699 = vpack.c.b16 %v672, %v669
        %v700 = vpack.c.b16 %v676, %v673
        %v701 = vpack.c.b16 %v677, %v674
        %v702 = vpack.c.b16 %v678, %v675
        %727 = vmatpush.bf16.msra.mxu0 %v700
        %728 = vmatpush.bf16.msra.mxu0 %v697
        %729 = vmatpush.bf16.msra.mxu0 %v694
        %730 = vmatpush.bf16.msra.mxu0 %v691
        %731 = vmatpush.bf16.msra.mxu0 %v688
        %732 = vmatpush.bf16.msra.mxu0 %v685
        %733 = vmatpush.bf16.msra.mxu0 %v682
        %734 = vmatpush.bf16.msra.mxu0 %v679
        %735 = vmatmul.bf16.gmra.mxu0 %v542
        %v736 = vpop.f32.mrf.mxu0
        %v737 = vadd.f32 0.0, %v736
        %v738 = vpop.f32.mrf.mxu0
        %v739 = vadd.f32 0.0, %v738
        %740 = vmatmul.bf16.gmra.mxu0 %v543
        %v741 = vpop.f32.mrf.mxu0
        %v742 = vadd.f32 0.0, %v741
        %v743 = vpop.f32.mrf.mxu0
        %v744 = vadd.f32 0.0, %v743
        %745 = vmatmul.bf16.gmra.mxu0 %v544
        %v746 = vpop.f32.mrf.mxu0
        %v747 = vadd.f32 0.0, %v746
        %v748 = vpop.f32.mrf.mxu0
        %v749 = vadd.f32 0.0, %v748
        %750 = vmatmul.bf16.gmra.mxu0 %v545
        %v751 = vpop.f32.mrf.mxu0
        %v752 = vadd.f32 0.0, %v751
        %v753 = vpop.f32.mrf.mxu0
        %v754 = vadd.f32 0.0, %v753
        %755 = vmatmul.bf16.gmra.mxu0 %v546
        %v756 = vpop.f32.mrf.mxu0
        %v757 = vadd.f32 0.0, %v756
        %v758 = vpop.f32.mrf.mxu0
        %v759 = vadd.f32 0.0, %v758
        %760 = vmatmul.bf16.gmra.mxu0 %v547
        %v761 = vpop.f32.mrf.mxu0
        %v762 = vadd.f32 0.0, %v761
        %v763 = vpop.f32.mrf.mxu0
        %v764 = vadd.f32 0.0, %v763
        %765 = vmatmul.bf16.gmra.mxu0 %v548
        %v766 = vpop.f32.mrf.mxu0
        %v767 = vadd.f32 0.0, %v766
        %v768 = vpop.f32.mrf.mxu0
        %v769 = vadd.f32 0.0, %v768
        %770 = vmatmul.bf16.gmra.mxu0 %v549
        %v771 = vpop.f32.mrf.mxu0
        %v772 = vadd.f32 0.0, %v771
        %v773 = vpop.f32.mrf.mxu0
        %v774 = vadd.f32 0.0, %v773
        %775 = vmatmul.bf16.gmra.mxu0 %v550
        %v776 = vpop.f32.mrf.mxu0
        %v777 = vadd.f32 0.0, %v776
        %v778 = vpop.f32.mrf.mxu0
        %v779 = vadd.f32 0.0, %v778
        %780 = vmatmul.bf16.gmra.mxu0 %v551
        %v781 = vpop.f32.mrf.mxu0
        %v782 = vadd.f32 0.0, %v781
        %v783 = vpop.f32.mrf.mxu0
        %v784 = vadd.f32 0.0, %v783
        %785 = vmatmul.bf16.gmra.mxu0 %v552
        %v786 = vpop.f32.mrf.mxu0
        %v787 = vadd.f32 0.0, %v786
        %v788 = vpop.f32.mrf.mxu0
        %v789 = vadd.f32 0.0, %v788
        %790 = vmatmul.bf16.gmra.mxu0 %v553
        %v791 = vpop.f32.mrf.mxu0
        %v792 = vadd.f32 0.0, %v791
        %v793 = vpop.f32.mrf.mxu0
        %v794 = vadd.f32 0.0, %v793
        %795 = vmatmul.bf16.gmra.mxu0 %v554
        %v796 = vpop.f32.mrf.mxu0
        %v797 = vadd.f32 0.0, %v796
        %v798 = vpop.f32.mrf.mxu0
        %v799 = vadd.f32 0.0, %v798
        %800 = vmatmul.bf16.gmra.mxu0 %v555
        %v801 = vpop.f32.mrf.mxu0
        %v802 = vadd.f32 0.0, %v801
        %v803 = vpop.f32.mrf.mxu0
        %v804 = vadd.f32 0.0, %v803
        %805 = vmatmul.bf16.gmra.mxu0 %v556
        %v806 = vpop.f32.mrf.mxu0
        %v807 = vadd.f32 0.0, %v806
        %v808 = vpop.f32.mrf.mxu0
        %v809 = vadd.f32 0.0, %v808
        %810 = vmatmul.bf16.gmra.mxu0 %v557
        %v811 = vpop.f32.mrf.mxu0
        %v812 = vadd.f32 0.0, %v811
        %v813 = vpop.f32.mrf.mxu0
        %v814 = vadd.f32 0.0, %v813
        %815 = vmatmul.bf16.gmra.mxu0 %v558
        %v816 = vpop.f32.mrf.mxu0
        %v817 = vadd.f32 0.0, %v816
        %v818 = vpop.f32.mrf.mxu0
        %v819 = vadd.f32 0.0, %v818
        %820 = vmatmul.bf16.gmra.mxu0 %v559
        %v821 = vpop.f32.mrf.mxu0
        %v822 = vadd.f32 0.0, %v821
        %v823 = vpop.f32.mrf.mxu0
        %v824 = vadd.f32 0.0, %v823
        %825 = vmatmul.bf16.gmra.mxu0 %v560
        %v826 = vpop.f32.mrf.mxu0
        %v827 = vadd.f32 0.0, %v826
        %v828 = vpop.f32.mrf.mxu0
        %v829 = vadd.f32 0.0, %v828
        %830 = vmatmul.bf16.gmra.mxu0 %v561
        %v831 = vpop.f32.mrf.mxu0
        %v832 = vadd.f32 0.0, %v831
        %v833 = vpop.f32.mrf.mxu0
        %v834 = vadd.f32 0.0, %v833
        %835 = vmatmul.bf16.gmra.mxu0 %v562
        %v836 = vpop.f32.mrf.mxu0
        %v837 = vadd.f32 0.0, %v836
        %v838 = vpop.f32.mrf.mxu0
        %v839 = vadd.f32 0.0, %v838
        %840 = vmatmul.bf16.gmra.mxu0 %v563
        %v841 = vpop.f32.mrf.mxu0
        %v842 = vadd.f32 0.0, %v841
        %v843 = vpop.f32.mrf.mxu0
        %v844 = vadd.f32 0.0, %v843
        %845 = vmatmul.bf16.gmra.mxu0 %v564
        %v846 = vpop.f32.mrf.mxu0
        %v847 = vadd.f32 0.0, %v846
        %v848 = vpop.f32.mrf.mxu0
        %v849 = vadd.f32 0.0, %v848
        %850 = vmatmul.bf16.gmra.mxu0 %v565
        %v851 = vpop.f32.mrf.mxu0
        %v852 = vadd.f32 0.0, %v851
        %v853 = vpop.f32.mrf.mxu0
        %v854 = vadd.f32 0.0, %v853
        %855 = vdwg.mxu0
        %856 = vmatpush.bf16.msra.mxu0 %v701
        %857 = vmatpush.bf16.msra.mxu0 %v698
        %858 = vmatpush.bf16.msra.mxu0 %v695
        %859 = vmatpush.bf16.msra.mxu0 %v692
        %860 = vmatpush.bf16.msra.mxu0 %v689
        %861 = vmatpush.bf16.msra.mxu0 %v686
        %862 = vmatpush.bf16.msra.mxu0 %v683
        %863 = vmatpush.bf16.msra.mxu0 %v680
        %864 = vmatmul.bf16.gmra.mxu0 %v542
        %v865 = vpop.f32.mrf.mxu0
        %v866 = vadd.f32 0.0, %v865
        %v867 = vpop.f32.mrf.mxu0
        %v868 = vadd.f32 0.0, %v867
        %869 = vmatmul.bf16.gmra.mxu0 %v543
        %v870 = vpop.f32.mrf.mxu0
        %v871 = vpop.f32.mrf.mxu0
        %v872 = vadd.f32 0.0, %v871
        %873 = vmatmul.bf16.gmra.mxu0 %v544
        %v874 = vpop.f32.mrf.mxu0
        %v875 = vadd.f32 0.0, %v874
        %v876 = vpop.f32.mrf.mxu0
        %877 = vmatmul.bf16.gmra.mxu0 %v545
        %v878 = vpop.f32.mrf.mxu0
        %v879 = vadd.f32 0.0, %v878
        %v880 = vpop.f32.mrf.mxu0
        %v881 = vadd.f32 0.0, %v880
        %882 = vmatmul.bf16.gmra.mxu0 %v546
        %v883 = vpop.f32.mrf.mxu0
        %v884 = vpop.f32.mrf.mxu0
        %v885 = vadd.f32 0.0, %v884
        %886 = vmatmul.bf16.gmra.mxu0 %v547
        %v887 = vpop.f32.mrf.mxu0
        %v888 = vadd.f32 0.0, %v887
        %v889 = vpop.f32.mrf.mxu0
        %890 = vmatmul.bf16.gmra.mxu0 %v548
        %v891 = vpop.f32.mrf.mxu0
        %v892 = vadd.f32 0.0, %v891
        %v893 = vpop.f32.mrf.mxu0
        %v894 = vadd.f32 0.0, %v893
        %895 = vmatmul.bf16.gmra.mxu0 %v549
        %v896 = vpop.f32.mrf.mxu0
        %v897 = vpop.f32.mrf.mxu0
        %v898 = vadd.f32 0.0, %v897
        %899 = vmatmul.bf16.gmra.mxu0 %v550
        %v900 = vpop.f32.mrf.mxu0
        %v901 = vadd.f32 0.0, %v900
        %v902 = vpop.f32.mrf.mxu0
        %903 = vmatmul.bf16.gmra.mxu0 %v551
        %v904 = vpop.f32.mrf.mxu0
        %v905 = vadd.f32 0.0, %v904
        %v906 = vpop.f32.mrf.mxu0
        %v907 = vadd.f32 0.0, %v906
        %908 = vmatmul.bf16.gmra.mxu0 %v552
        %v909 = vpop.f32.mrf.mxu0
        %v910 = vpop.f32.mrf.mxu0
        %v911 = vadd.f32 0.0, %v910
        %912 = vmatmul.bf16.gmra.mxu0 %v553
        %v913 = vpop.f32.mrf.mxu0
        %v914 = vadd.f32 0.0, %v913
        %v915 = vpop.f32.mrf.mxu0
        %916 = vmatmul.bf16.gmra.mxu0 %v554
        %v917 = vpop.f32.mrf.mxu0
        %v918 = vadd.f32 0.0, %v917
        %v919 = vpop.f32.mrf.mxu0
        %v920 = vadd.f32 0.0, %v919
        %921 = vmatmul.bf16.gmra.mxu0 %v555
        %v922 = vpop.f32.mrf.mxu0
        %v923 = vpop.f32.mrf.mxu0
        %v924 = vadd.f32 0.0, %v923
        %925 = vmatmul.bf16.gmra.mxu0 %v556
        %v926 = vpop.f32.mrf.mxu0
        %v927 = vadd.f32 0.0, %v926
        %v928 = vpop.f32.mrf.mxu0
        %929 = vmatmul.bf16.gmra.mxu0 %v557
        %v930 = vpop.f32.mrf.mxu0
        %v931 = vadd.f32 0.0, %v930
        %v932 = vpop.f32.mrf.mxu0
        %v933 = vadd.f32 0.0, %v932
        %934 = vmatmul.bf16.gmra.mxu0 %v558
        %v935 = vpop.f32.mrf.mxu0
        %v936 = vpop.f32.mrf.mxu0
        %v937 = vadd.f32 0.0, %v936
        %938 = vmatmul.bf16.gmra.mxu0 %v559
        %v939 = vpop.f32.mrf.mxu0
        %v940 = vadd.f32 0.0, %v939
        %v941 = vpop.f32.mrf.mxu0
        %942 = vmatmul.bf16.gmra.mxu0 %v560
        %v943 = vpop.f32.mrf.mxu0
        %v944 = vadd.f32 0.0, %v943
        %v945 = vpop.f32.mrf.mxu0
        %v946 = vadd.f32 0.0, %v945
        %947 = vmatmul.bf16.gmra.mxu0 %v561
        %v948 = vpop.f32.mrf.mxu0
        %v949 = vpop.f32.mrf.mxu0
        %v950 = vadd.f32 0.0, %v949
        %951 = vmatmul.bf16.gmra.mxu0 %v562
        %v952 = vpop.f32.mrf.mxu0
        %v953 = vadd.f32 0.0, %v952
        %v954 = vpop.f32.mrf.mxu0
        %955 = vmatmul.bf16.gmra.mxu0 %v563
        %v956 = vpop.f32.mrf.mxu0
        %v957 = vadd.f32 0.0, %v956
        %v958 = vpop.f32.mrf.mxu0
        %v959 = vadd.f32 0.0, %v958
        %960 = vmatmul.bf16.gmra.mxu0 %v564
        %v961 = vpop.f32.mrf.mxu0
        %v962 = vpop.f32.mrf.mxu0
        %v963 = vadd.f32 0.0, %v962
        %964 = vmatmul.bf16.gmra.mxu0 %v565
        %v965 = vpop.f32.mrf.mxu0
        %v966 = vadd.f32 0.0, %v965
        %v967 = vpop.f32.mrf.mxu0
        %968 = vdwg.mxu0
        %969 = vmatpush.bf16.msra.mxu0 %v702
        %970 = vmatpush.bf16.msra.mxu0 %v699
        %971 = vmatpush.bf16.msra.mxu0 %v696
        %972 = vmatpush.bf16.msra.mxu0 %v693
        %973 = vmatpush.bf16.msra.mxu0 %v690
        %974 = vmatpush.bf16.msra.mxu0 %v687
        %975 = vmatpush.bf16.msra.mxu0 %v684
        %976 = vmatpush.bf16.msra.mxu0 %v681
        %977 = vmatmul.bf16.gmra.mxu0 %v542
        %v978 = vpop.f32.mrf.mxu0
        %v979 = vadd.f32 0.0, %v978
        %v980 = vpop.f32.mrf.mxu0
        %v981 = vadd.f32 0.0, %v980
        %982 = vmatmul.bf16.gmra.mxu0 %v543
        %v983 = vpop.f32.mrf.mxu0
        %v984 = vadd.f32 0.0, %v983
        %v985 = vpop.f32.mrf.mxu0
        %v986 = vadd.f32 0.0, %v985
        %987 = vmatmul.bf16.gmra.mxu0 %v544
        %v988 = vpop.f32.mrf.mxu0
        %v989 = vadd.f32 0.0, %v988
        %v990 = vpop.f32.mrf.mxu0
        %v991 = vadd.f32 0.0, %v990
        %992 = vmatmul.bf16.gmra.mxu0 %v545
        %v993 = vpop.f32.mrf.mxu0
        %v994 = vadd.f32 0.0, %v993
        %v995 = vpop.f32.mrf.mxu0
        %v996 = vadd.f32 0.0, %v995
        %997 = vmatmul.bf16.gmra.mxu0 %v546
        %v998 = vpop.f32.mrf.mxu0
        %v999 = vadd.f32 0.0, %v998
        %v1000 = vpop.f32.mrf.mxu0
        %v1001 = vadd.f32 0.0, %v1000
        %1002 = vmatmul.bf16.gmra.mxu0 %v547
        %v1003 = vpop.f32.mrf.mxu0
        %v1004 = vadd.f32 0.0, %v1003
        %v1005 = vpop.f32.mrf.mxu0
        %v1006 = vadd.f32 0.0, %v1005
        %1007 = vmatmul.bf16.gmra.mxu0 %v548
        %v1008 = vpop.f32.mrf.mxu0
        %v1009 = vadd.f32 0.0, %v1008
        %v1010 = vpop.f32.mrf.mxu0
        %v1011 = vadd.f32 0.0, %v1010
        %1012 = vmatmul.bf16.gmra.mxu0 %v549
        %v1013 = vpop.f32.mrf.mxu0
        %v1014 = vadd.f32 0.0, %v1013
        %v1015 = vpop.f32.mrf.mxu0
        %v1016 = vadd.f32 0.0, %v1015
        %1017 = vmatmul.bf16.gmra.mxu0 %v550
        %v1018 = vpop.f32.mrf.mxu0
        %v1019 = vadd.f32 0.0, %v1018
        %v1020 = vpop.f32.mrf.mxu0
        %v1021 = vadd.f32 0.0, %v1020
        %1022 = vmatmul.bf16.gmra.mxu0 %v551
        %v1023 = vpop.f32.mrf.mxu0
        %v1024 = vadd.f32 0.0, %v1023
        %v1025 = vpop.f32.mrf.mxu0
        %v1026 = vadd.f32 0.0, %v1025
        %1027 = vmatmul.bf16.gmra.mxu0 %v552
        %v1028 = vpop.f32.mrf.mxu0
        %v1029 = vadd.f32 0.0, %v1028
        %v1030 = vpop.f32.mrf.mxu0
        %v1031 = vadd.f32 0.0, %v1030
        %1032 = vmatmul.bf16.gmra.mxu0 %v553
        %v1033 = vpop.f32.mrf.mxu0
        %v1034 = vadd.f32 0.0, %v1033
        %v1035 = vpop.f32.mrf.mxu0
        %v1036 = vadd.f32 0.0, %v1035
        %1037 = vmatmul.bf16.gmra.mxu0 %v554
        %v1038 = vpop.f32.mrf.mxu0
        %v1039 = vadd.f32 0.0, %v1038
        %v1040 = vpop.f32.mrf.mxu0
        %v1041 = vadd.f32 0.0, %v1040
        %1042 = vmatmul.bf16.gmra.mxu0 %v555
        %v1043 = vpop.f32.mrf.mxu0
        %v1044 = vadd.f32 0.0, %v1043
        %v1045 = vpop.f32.mrf.mxu0
        %v1046 = vadd.f32 0.0, %v1045
        %1047 = vmatmul.bf16.gmra.mxu0 %v556
        %v1048 = vpop.f32.mrf.mxu0
        %v1049 = vadd.f32 0.0, %v1048
        %v1050 = vpop.f32.mrf.mxu0
        %v1051 = vadd.f32 0.0, %v1050
        %1052 = vmatmul.bf16.gmra.mxu0 %v557
        %v1053 = vpop.f32.mrf.mxu0
        %v1054 = vadd.f32 0.0, %v1053
        %v1055 = vpop.f32.mrf.mxu0
        %v1056 = vadd.f32 0.0, %v1055
        %1057 = vmatmul.bf16.gmra.mxu0 %v558
        %v1058 = vpop.f32.mrf.mxu0
        %v1059 = vadd.f32 0.0, %v1058
        %v1060 = vpop.f32.mrf.mxu0
        %v1061 = vadd.f32 0.0, %v1060
        %1062 = vmatmul.bf16.gmra.mxu0 %v559
        %v1063 = vpop.f32.mrf.mxu0
        %v1064 = vadd.f32 0.0, %v1063
        %v1065 = vpop.f32.mrf.mxu0
        %v1066 = vadd.f32 0.0, %v1065
        %1067 = vmatmul.bf16.gmra.mxu0 %v560
        %v1068 = vpop.f32.mrf.mxu0
        %v1069 = vadd.f32 0.0, %v1068
        %v1070 = vpop.f32.mrf.mxu0
        %v1071 = vadd.f32 0.0, %v1070
        %1072 = vmatmul.bf16.gmra.mxu0 %v561
        %v1073 = vpop.f32.mrf.mxu0
        %v1074 = vadd.f32 0.0, %v1073
        %v1075 = vpop.f32.mrf.mxu0
        %v1076 = vadd.f32 0.0, %v1075
        %1077 = vmatmul.bf16.gmra.mxu0 %v562
        %v1078 = vpop.f32.mrf.mxu0
        %v1079 = vadd.f32 0.0, %v1078
        %v1080 = vpop.f32.mrf.mxu0
        %v1081 = vadd.f32 0.0, %v1080
        %1082 = vmatmul.bf16.gmra.mxu0 %v563
        %v1083 = vpop.f32.mrf.mxu0
        %v1084 = vadd.f32 0.0, %v1083
        %v1085 = vpop.f32.mrf.mxu0
        %v1086 = vadd.f32 0.0, %v1085
        %1087 = vmatmul.bf16.gmra.mxu0 %v564
        %v1088 = vpop.f32.mrf.mxu0
        %v1089 = vadd.f32 0.0, %v1088
        %v1090 = vpop.f32.mrf.mxu0
        %v1091 = vadd.f32 0.0, %v1090
        %1092 = vmatmul.bf16.gmra.mxu0 %v565
        %v1093 = vpop.f32.mrf.mxu0
        %v1094 = vadd.f32 0.0, %v1093
        %v1095 = vpop.f32.mrf.mxu0
        %v1096 = vadd.f32 0.0, %v1095
        %1097 = vdwg.mxu0
        %v1130 = vunpack.c.l.b16 %v462
        %v1131 = vunpack.c.h.b16 %v462
        %v1132 = vunpack.c.l.b16 %v463
        %v1133 = vunpack.c.l.b16 %v464
        %v1134 = vunpack.c.h.b16 %v464
        %v1135 = vunpack.c.l.b16 %v465
        %v1136 = vunpack.c.l.b16 %v466
        %v1137 = vunpack.c.h.b16 %v466
        %v1138 = vunpack.c.l.b16 %v467
        %v1139 = vunpack.c.l.b16 %v468
        %v1140 = vunpack.c.h.b16 %v468
        %v1141 = vunpack.c.l.b16 %v469
        %v1142 = vunpack.c.l.b16 %v470
        %v1143 = vunpack.c.h.b16 %v470
        %v1144 = vunpack.c.l.b16 %v471
        %v1145 = vunpack.c.l.b16 %v472
        %v1146 = vunpack.c.h.b16 %v472
        %v1147 = vunpack.c.l.b16 %v473
        %v1148 = vunpack.c.l.b16 %v474
        %v1149 = vunpack.c.h.b16 %v474
        %v1150 = vunpack.c.l.b16 %v475
        %v1151 = vunpack.c.l.b16 %v476
        %v1152 = vunpack.c.h.b16 %v476
        %v1153 = vunpack.c.l.b16 %v477
        %v1154 = vunpack.c.l.b16 %v478
        %v1155 = vunpack.c.h.b16 %v478
        %v1156 = vunpack.c.l.b16 %v479
        %v1157 = vunpack.c.l.b16 %v480
        %v1158 = vunpack.c.h.b16 %v480
        %v1159 = vunpack.c.l.b16 %v481
        %v1160 = vunpack.c.l.b16 %v482
        %v1161 = vunpack.c.h.b16 %v482
        %v1162 = vunpack.c.l.b16 %v483
        %v1163 = vunpack.c.l.b16 %v484
        %v1164 = vunpack.c.h.b16 %v484
        %v1165 = vunpack.c.l.b16 %v485
        %v1166 = vunpack.c.l.b16 %v486
        %v1167 = vunpack.c.h.b16 %v486
        %v1168 = vunpack.c.l.b16 %v487
        %v1169 = vunpack.c.l.b16 %v488
        %v1170 = vunpack.c.h.b16 %v488
        %v1171 = vunpack.c.l.b16 %v489
        %v1172 = vunpack.c.l.b16 %v490
        %v1173 = vunpack.c.h.b16 %v490
        %v1174 = vunpack.c.l.b16 %v491
        %v1175 = vunpack.c.l.b16 %v492
        %v1176 = vunpack.c.h.b16 %v492
        %v1177 = vunpack.c.l.b16 %v493
        %v1178 = vpack.c.b16 %v1133, %v1130
        %v1179 = vpack.c.b16 %v1134, %v1131
        %v1180 = vpack.c.b16 %v1135, %v1132
        %v1181 = vpack.c.b16 %v1139, %v1136
        %v1182 = vpack.c.b16 %v1140, %v1137
        %v1183 = vpack.c.b16 %v1141, %v1138
        %v1184 = vpack.c.b16 %v1145, %v1142
        %v1185 = vpack.c.b16 %v1146, %v1143
        %v1186 = vpack.c.b16 %v1147, %v1144
        %v1187 = vpack.c.b16 %v1151, %v1148
        %v1188 = vpack.c.b16 %v1152, %v1149
        %v1189 = vpack.c.b16 %v1153, %v1150
        %v1190 = vpack.c.b16 %v1157, %v1154
        %v1191 = vpack.c.b16 %v1158, %v1155
        %v1192 = vpack.c.b16 %v1159, %v1156
        %v1193 = vpack.c.b16 %v1163, %v1160
        %v1194 = vpack.c.b16 %v1164, %v1161
        %v1195 = vpack.c.b16 %v1165, %v1162
        %v1196 = vpack.c.b16 %v1169, %v1166
        %v1197 = vpack.c.b16 %v1170, %v1167
        %v1198 = vpack.c.b16 %v1171, %v1168
        %v1199 = vpack.c.b16 %v1175, %v1172
        %v1200 = vpack.c.b16 %v1176, %v1173
        %v1201 = vpack.c.b16 %v1177, %v1174
        %1226 = vmatpush.bf16.msra.mxu0 %v1199
        %1227 = vmatpush.bf16.msra.mxu0 %v1196
        %1228 = vmatpush.bf16.msra.mxu0 %v1193
        %1229 = vmatpush.bf16.msra.mxu0 %v1190
        %1230 = vmatpush.bf16.msra.mxu0 %v1187
        %1231 = vmatpush.bf16.msra.mxu0 %v1184
        %1232 = vmatpush.bf16.msra.mxu0 %v1181
        %1233 = vmatpush.bf16.msra.mxu0 %v1178
        %1234 = vmatmul.bf16.gmra.mxu0 %v438
        %v1235 = vpop.f32.mrf.mxu0
        %v1236 = vadd.f32 %v737, %v1235
        %v1237 = vpop.f32.mrf.mxu0
        %v1238 = vadd.f32 %v739, %v1237
        %1239 = vmatmul.bf16.gmra.mxu0 %v439
        %v1240 = vpop.f32.mrf.mxu0
        %v1241 = vadd.f32 %v742, %v1240
        %v1242 = vpop.f32.mrf.mxu0
        %v1243 = vadd.f32 %v744, %v1242
        %1244 = vmatmul.bf16.gmra.mxu0 %v440
        %v1245 = vpop.f32.mrf.mxu0
        %v1246 = vadd.f32 %v747, %v1245
        %v1247 = vpop.f32.mrf.mxu0
        %v1248 = vadd.f32 %v749, %v1247
        %1249 = vmatmul.bf16.gmra.mxu0 %v441
        %v1250 = vpop.f32.mrf.mxu0
        %v1251 = vadd.f32 %v752, %v1250
        %v1252 = vpop.f32.mrf.mxu0
        %v1253 = vadd.f32 %v754, %v1252
        %1254 = vmatmul.bf16.gmra.mxu0 %v442
        %v1255 = vpop.f32.mrf.mxu0
        %v1256 = vadd.f32 %v757, %v1255
        %v1257 = vpop.f32.mrf.mxu0
        %v1258 = vadd.f32 %v759, %v1257
        %1259 = vmatmul.bf16.gmra.mxu0 %v443
        %v1260 = vpop.f32.mrf.mxu0
        %v1261 = vadd.f32 %v762, %v1260
        %v1262 = vpop.f32.mrf.mxu0
        %v1263 = vadd.f32 %v764, %v1262
        %1264 = vmatmul.bf16.gmra.mxu0 %v444
        %v1265 = vpop.f32.mrf.mxu0
        %v1266 = vadd.f32 %v767, %v1265
        %v1267 = vpop.f32.mrf.mxu0
        %v1268 = vadd.f32 %v769, %v1267
        %1269 = vmatmul.bf16.gmra.mxu0 %v445
        %v1270 = vpop.f32.mrf.mxu0
        %v1271 = vadd.f32 %v772, %v1270
        %v1272 = vpop.f32.mrf.mxu0
        %v1273 = vadd.f32 %v774, %v1272
        %1274 = vmatmul.bf16.gmra.mxu0 %v446
        %v1275 = vpop.f32.mrf.mxu0
        %v1276 = vadd.f32 %v777, %v1275
        %v1277 = vpop.f32.mrf.mxu0
        %v1278 = vadd.f32 %v779, %v1277
        %1279 = vmatmul.bf16.gmra.mxu0 %v447
        %v1280 = vpop.f32.mrf.mxu0
        %v1281 = vadd.f32 %v782, %v1280
        %v1282 = vpop.f32.mrf.mxu0
        %v1283 = vadd.f32 %v784, %v1282
        %1284 = vmatmul.bf16.gmra.mxu0 %v448
        %v1285 = vpop.f32.mrf.mxu0
        %v1286 = vadd.f32 %v787, %v1285
        %v1287 = vpop.f32.mrf.mxu0
        %v1288 = vadd.f32 %v789, %v1287
        %1289 = vmatmul.bf16.gmra.mxu0 %v449
        %v1290 = vpop.f32.mrf.mxu0
        %v1291 = vadd.f32 %v792, %v1290
        %v1292 = vpop.f32.mrf.mxu0
        %v1293 = vadd.f32 %v794, %v1292
        %1294 = vmatmul.bf16.gmra.mxu0 %v450
        %v1295 = vpop.f32.mrf.mxu0
        %v1296 = vadd.f32 %v797, %v1295
        %v1297 = vpop.f32.mrf.mxu0
        %v1298 = vadd.f32 %v799, %v1297
        %1299 = vmatmul.bf16.gmra.mxu0 %v451
        %v1300 = vpop.f32.mrf.mxu0
        %v1301 = vadd.f32 %v802, %v1300
        %v1302 = vpop.f32.mrf.mxu0
        %v1303 = vadd.f32 %v804, %v1302
        %1304 = vmatmul.bf16.gmra.mxu0 %v452
        %v1305 = vpop.f32.mrf.mxu0
        %v1306 = vadd.f32 %v807, %v1305
        %v1307 = vpop.f32.mrf.mxu0
        %v1308 = vadd.f32 %v809, %v1307
        %1309 = vmatmul.bf16.gmra.mxu0 %v453
        %v1310 = vpop.f32.mrf.mxu0
        %v1311 = vadd.f32 %v812, %v1310
        %v1312 = vpop.f32.mrf.mxu0
        %v1313 = vadd.f32 %v814, %v1312
        %1314 = vmatmul.bf16.gmra.mxu0 %v454
        %v1315 = vpop.f32.mrf.mxu0
        %v1316 = vadd.f32 %v817, %v1315
        %v1317 = vpop.f32.mrf.mxu0
        %v1318 = vadd.f32 %v819, %v1317
        %1319 = vmatmul.bf16.gmra.mxu0 %v455
        %v1320 = vpop.f32.mrf.mxu0
        %v1321 = vadd.f32 %v822, %v1320
        %v1322 = vpop.f32.mrf.mxu0
        %v1323 = vadd.f32 %v824, %v1322
        %1324 = vmatmul.bf16.gmra.mxu0 %v456
        %v1325 = vpop.f32.mrf.mxu0
        %v1326 = vadd.f32 %v827, %v1325
        %v1327 = vpop.f32.mrf.mxu0
        %v1328 = vadd.f32 %v829, %v1327
        %1329 = vmatmul.bf16.gmra.mxu0 %v457
        %v1330 = vpop.f32.mrf.mxu0
        %v1331 = vadd.f32 %v832, %v1330
        %v1332 = vpop.f32.mrf.mxu0
        %v1333 = vadd.f32 %v834, %v1332
        %1334 = vmatmul.bf16.gmra.mxu0 %v458
        %v1335 = vpop.f32.mrf.mxu0
        %v1336 = vadd.f32 %v837, %v1335
        %v1337 = vpop.f32.mrf.mxu0
        %v1338 = vadd.f32 %v839, %v1337
        %1339 = vmatmul.bf16.gmra.mxu0 %v459
        %v1340 = vpop.f32.mrf.mxu0
        %v1341 = vadd.f32 %v842, %v1340
        %v1342 = vpop.f32.mrf.mxu0
        %v1343 = vadd.f32 %v844, %v1342
        %1344 = vmatmul.bf16.gmra.mxu0 %v460
        %v1345 = vpop.f32.mrf.mxu0
        %v1346 = vadd.f32 %v847, %v1345
        %v1347 = vpop.f32.mrf.mxu0
        %v1348 = vadd.f32 %v849, %v1347
        %1349 = vmatmul.bf16.gmra.mxu0 %v461
        %v1350 = vpop.f32.mrf.mxu0
        %v1351 = vadd.f32 %v852, %v1350
        %v1352 = vpop.f32.mrf.mxu0
        %v1353 = vadd.f32 %v854, %v1352
        %1354 = vdwg.mxu0
        %1355 = vmatpush.bf16.msra.mxu0 %v1200
        %1356 = vmatpush.bf16.msra.mxu0 %v1197
        %1357 = vmatpush.bf16.msra.mxu0 %v1194
        %1358 = vmatpush.bf16.msra.mxu0 %v1191
        %1359 = vmatpush.bf16.msra.mxu0 %v1188
        %1360 = vmatpush.bf16.msra.mxu0 %v1185
        %1361 = vmatpush.bf16.msra.mxu0 %v1182
        %1362 = vmatpush.bf16.msra.mxu0 %v1179
        %1363 = vmatmul.bf16.gmra.mxu0 %v438
        %v1364 = vpop.f32.mrf.mxu0
        %v1365 = vadd.f32 %v866, %v1364
        %v1366 = vpop.f32.mrf.mxu0
        %v1367 = vadd.f32 %v868, %v1366
        %1368 = vmatmul.bf16.gmra.mxu0 %v439
        %v1369 = vpop.f32.mrf.mxu0
        %v1370 = vpop.f32.mrf.mxu0
        %v1371 = vadd.f32 %v872, %v1370
        %1372 = vmatmul.bf16.gmra.mxu0 %v440
        %v1373 = vpop.f32.mrf.mxu0
        %v1374 = vadd.f32 %v875, %v1373
        %v1375 = vpop.f32.mrf.mxu0
        %1376 = vmatmul.bf16.gmra.mxu0 %v441
        %v1377 = vpop.f32.mrf.mxu0
        %v1378 = vadd.f32 %v879, %v1377
        %v1379 = vpop.f32.mrf.mxu0
        %v1380 = vadd.f32 %v881, %v1379
        %1381 = vmatmul.bf16.gmra.mxu0 %v442
        %v1382 = vpop.f32.mrf.mxu0
        %v1383 = vpop.f32.mrf.mxu0
        %v1384 = vadd.f32 %v885, %v1383
        %1385 = vmatmul.bf16.gmra.mxu0 %v443
        %v1386 = vpop.f32.mrf.mxu0
        %v1387 = vadd.f32 %v888, %v1386
        %v1388 = vpop.f32.mrf.mxu0
        %1389 = vmatmul.bf16.gmra.mxu0 %v444
        %v1390 = vpop.f32.mrf.mxu0
        %v1391 = vadd.f32 %v892, %v1390
        %v1392 = vpop.f32.mrf.mxu0
        %v1393 = vadd.f32 %v894, %v1392
        %1394 = vmatmul.bf16.gmra.mxu0 %v445
        %v1395 = vpop.f32.mrf.mxu0
        %v1396 = vpop.f32.mrf.mxu0
        %v1397 = vadd.f32 %v898, %v1396
        %1398 = vmatmul.bf16.gmra.mxu0 %v446
        %v1399 = vpop.f32.mrf.mxu0
        %v1400 = vadd.f32 %v901, %v1399
        %v1401 = vpop.f32.mrf.mxu0
        %1402 = vmatmul.bf16.gmra.mxu0 %v447
        %v1403 = vpop.f32.mrf.mxu0
        %v1404 = vadd.f32 %v905, %v1403
        %v1405 = vpop.f32.mrf.mxu0
        %v1406 = vadd.f32 %v907, %v1405
        %1407 = vmatmul.bf16.gmra.mxu0 %v448
        %v1408 = vpop.f32.mrf.mxu0
        %v1409 = vpop.f32.mrf.mxu0
        %v1410 = vadd.f32 %v911, %v1409
        %1411 = vmatmul.bf16.gmra.mxu0 %v449
        %v1412 = vpop.f32.mrf.mxu0
        %v1413 = vadd.f32 %v914, %v1412
        %v1414 = vpop.f32.mrf.mxu0
        %1415 = vmatmul.bf16.gmra.mxu0 %v450
        %v1416 = vpop.f32.mrf.mxu0
        %v1417 = vadd.f32 %v918, %v1416
        %v1418 = vpop.f32.mrf.mxu0
        %v1419 = vadd.f32 %v920, %v1418
        %1420 = vmatmul.bf16.gmra.mxu0 %v451
        %v1421 = vpop.f32.mrf.mxu0
        %v1422 = vpop.f32.mrf.mxu0
        %v1423 = vadd.f32 %v924, %v1422
        %1424 = vmatmul.bf16.gmra.mxu0 %v452
        %v1425 = vpop.f32.mrf.mxu0
        %v1426 = vadd.f32 %v927, %v1425
        %v1427 = vpop.f32.mrf.mxu0
        %1428 = vmatmul.bf16.gmra.mxu0 %v453
        %v1429 = vpop.f32.mrf.mxu0
        %v1430 = vadd.f32 %v931, %v1429
        %v1431 = vpop.f32.mrf.mxu0
        %v1432 = vadd.f32 %v933, %v1431
        %1433 = vmatmul.bf16.gmra.mxu0 %v454
        %v1434 = vpop.f32.mrf.mxu0
        %v1435 = vpop.f32.mrf.mxu0
        %v1436 = vadd.f32 %v937, %v1435
        %1437 = vmatmul.bf16.gmra.mxu0 %v455
        %v1438 = vpop.f32.mrf.mxu0
        %v1439 = vadd.f32 %v940, %v1438
        %v1440 = vpop.f32.mrf.mxu0
        %1441 = vmatmul.bf16.gmra.mxu0 %v456
        %v1442 = vpop.f32.mrf.mxu0
        %v1443 = vadd.f32 %v944, %v1442
        %v1444 = vpop.f32.mrf.mxu0
        %v1445 = vadd.f32 %v946, %v1444
        %1446 = vmatmul.bf16.gmra.mxu0 %v457
        %v1447 = vpop.f32.mrf.mxu0
        %v1448 = vpop.f32.mrf.mxu0
        %v1449 = vadd.f32 %v950, %v1448
        %1450 = vmatmul.bf16.gmra.mxu0 %v458
        %v1451 = vpop.f32.mrf.mxu0
        %v1452 = vadd.f32 %v953, %v1451
        %v1453 = vpop.f32.mrf.mxu0
        %1454 = vmatmul.bf16.gmra.mxu0 %v459
        %v1455 = vpop.f32.mrf.mxu0
        %v1456 = vadd.f32 %v957, %v1455
        %v1457 = vpop.f32.mrf.mxu0
        %v1458 = vadd.f32 %v959, %v1457
        %1459 = vmatmul.bf16.gmra.mxu0 %v460
        %v1460 = vpop.f32.mrf.mxu0
        %v1461 = vpop.f32.mrf.mxu0
        %v1462 = vadd.f32 %v963, %v1461
        %1463 = vmatmul.bf16.gmra.mxu0 %v461
        %v1464 = vpop.f32.mrf.mxu0
        %v1465 = vadd.f32 %v966, %v1464
        %v1466 = vpop.f32.mrf.mxu0
        %1467 = vdwg.mxu0
        %1468 = vmatpush.bf16.msra.mxu0 %v1201
        %1469 = vmatpush.bf16.msra.mxu0 %v1198
        %1470 = vmatpush.bf16.msra.mxu0 %v1195
        %1471 = vmatpush.bf16.msra.mxu0 %v1192
        %1472 = vmatpush.bf16.msra.mxu0 %v1189
        %1473 = vmatpush.bf16.msra.mxu0 %v1186
        %1474 = vmatpush.bf16.msra.mxu0 %v1183
        %1475 = vmatpush.bf16.msra.mxu0 %v1180
        %1476 = vmatmul.bf16.gmra.mxu0 %v438
        %v1477 = vpop.f32.mrf.mxu0
        %v1478 = vadd.f32 %v979, %v1477
        %v1479 = vpop.f32.mrf.mxu0
        %v1480 = vadd.f32 %v981, %v1479
        %1481 = vmatmul.bf16.gmra.mxu0 %v439
        %v1482 = vpop.f32.mrf.mxu0
        %v1483 = vadd.f32 %v984, %v1482
        %v1484 = vpop.f32.mrf.mxu0
        %v1485 = vadd.f32 %v986, %v1484
        %1486 = vmatmul.bf16.gmra.mxu0 %v440
        %v1487 = vpop.f32.mrf.mxu0
        %v1488 = vadd.f32 %v989, %v1487
        %v1489 = vpop.f32.mrf.mxu0
        %v1490 = vadd.f32 %v991, %v1489
        %1491 = vmatmul.bf16.gmra.mxu0 %v441
        %v1492 = vpop.f32.mrf.mxu0
        %v1493 = vadd.f32 %v994, %v1492
        %v1494 = vpop.f32.mrf.mxu0
        %v1495 = vadd.f32 %v996, %v1494
        %1496 = vmatmul.bf16.gmra.mxu0 %v442
        %v1497 = vpop.f32.mrf.mxu0
        %v1498 = vadd.f32 %v999, %v1497
        %v1499 = vpop.f32.mrf.mxu0
        %v1500 = vadd.f32 %v1001, %v1499
        %1501 = vmatmul.bf16.gmra.mxu0 %v443
        %v1502 = vpop.f32.mrf.mxu0
        %v1503 = vadd.f32 %v1004, %v1502
        %v1504 = vpop.f32.mrf.mxu0
        %v1505 = vadd.f32 %v1006, %v1504
        %1506 = vmatmul.bf16.gmra.mxu0 %v444
        %v1507 = vpop.f32.mrf.mxu0
        %v1508 = vadd.f32 %v1009, %v1507
        %v1509 = vpop.f32.mrf.mxu0
        %v1510 = vadd.f32 %v1011, %v1509
        %1511 = vmatmul.bf16.gmra.mxu0 %v445
        %v1512 = vpop.f32.mrf.mxu0
        %v1513 = vadd.f32 %v1014, %v1512
        %v1514 = vpop.f32.mrf.mxu0
        %v1515 = vadd.f32 %v1016, %v1514
        %1516 = vmatmul.bf16.gmra.mxu0 %v446
        %v1517 = vpop.f32.mrf.mxu0
        %v1518 = vadd.f32 %v1019, %v1517
        %v1519 = vpop.f32.mrf.mxu0
        %v1520 = vadd.f32 %v1021, %v1519
        %1521 = vmatmul.bf16.gmra.mxu0 %v447
        %v1522 = vpop.f32.mrf.mxu0
        %v1523 = vadd.f32 %v1024, %v1522
        %v1524 = vpop.f32.mrf.mxu0
        %v1525 = vadd.f32 %v1026, %v1524
        %1526 = vmatmul.bf16.gmra.mxu0 %v448
        %v1527 = vpop.f32.mrf.mxu0
        %v1528 = vadd.f32 %v1029, %v1527
        %v1529 = vpop.f32.mrf.mxu0
        %v1530 = vadd.f32 %v1031, %v1529
        %1531 = vmatmul.bf16.gmra.mxu0 %v449
        %v1532 = vpop.f32.mrf.mxu0
        %v1533 = vadd.f32 %v1034, %v1532
        %v1534 = vpop.f32.mrf.mxu0
        %v1535 = vadd.f32 %v1036, %v1534
        %1536 = vmatmul.bf16.gmra.mxu0 %v450
        %v1537 = vpop.f32.mrf.mxu0
        %v1538 = vadd.f32 %v1039, %v1537
        %v1539 = vpop.f32.mrf.mxu0
        %v1540 = vadd.f32 %v1041, %v1539
        %1541 = vmatmul.bf16.gmra.mxu0 %v451
        %v1542 = vpop.f32.mrf.mxu0
        %v1543 = vadd.f32 %v1044, %v1542
        %v1544 = vpop.f32.mrf.mxu0
        %v1545 = vadd.f32 %v1046, %v1544
        %1546 = vmatmul.bf16.gmra.mxu0 %v452
        %v1547 = vpop.f32.mrf.mxu0
        %v1548 = vadd.f32 %v1049, %v1547
        %v1549 = vpop.f32.mrf.mxu0
        %v1550 = vadd.f32 %v1051, %v1549
        %1551 = vmatmul.bf16.gmra.mxu0 %v453
        %v1552 = vpop.f32.mrf.mxu0
        %v1553 = vadd.f32 %v1054, %v1552
        %v1554 = vpop.f32.mrf.mxu0
        %v1555 = vadd.f32 %v1056, %v1554
        %1556 = vmatmul.bf16.gmra.mxu0 %v454
        %v1557 = vpop.f32.mrf.mxu0
        %v1558 = vadd.f32 %v1059, %v1557
        %v1559 = vpop.f32.mrf.mxu0
        %v1560 = vadd.f32 %v1061, %v1559
        %1561 = vmatmul.bf16.gmra.mxu0 %v455
        %v1562 = vpop.f32.mrf.mxu0
        %v1563 = vadd.f32 %v1064, %v1562
        %v1564 = vpop.f32.mrf.mxu0
        %v1565 = vadd.f32 %v1066, %v1564
        %1566 = vmatmul.bf16.gmra.mxu0 %v456
        %v1567 = vpop.f32.mrf.mxu0
        %v1568 = vadd.f32 %v1069, %v1567
        %v1569 = vpop.f32.mrf.mxu0
        %v1570 = vadd.f32 %v1071, %v1569
        %1571 = vmatmul.bf16.gmra.mxu0 %v457
        %v1572 = vpop.f32.mrf.mxu0
        %v1573 = vadd.f32 %v1074, %v1572
        %v1574 = vpop.f32.mrf.mxu0
        %v1575 = vadd.f32 %v1076, %v1574
        %1576 = vmatmul.bf16.gmra.mxu0 %v458
        %v1577 = vpop.f32.mrf.mxu0
        %v1578 = vadd.f32 %v1079, %v1577
        %v1579 = vpop.f32.mrf.mxu0
        %v1580 = vadd.f32 %v1081, %v1579
        %1581 = vmatmul.bf16.gmra.mxu0 %v459
        %v1582 = vpop.f32.mrf.mxu0
        %v1583 = vadd.f32 %v1084, %v1582
        %v1584 = vpop.f32.mrf.mxu0
        %v1585 = vadd.f32 %v1086, %v1584
        %1586 = vmatmul.bf16.gmra.mxu0 %v460
        %v1587 = vpop.f32.mrf.mxu0
        %v1588 = vadd.f32 %v1089, %v1587
        %v1589 = vpop.f32.mrf.mxu0
        %v1590 = vadd.f32 %v1091, %v1589
        %1591 = vmatmul.bf16.gmra.mxu0 %v461
        %v1592 = vpop.f32.mrf.mxu0
        %v1593 = vadd.f32 %v1094, %v1592
        %v1594 = vpop.f32.mrf.mxu0
        %v1595 = vadd.f32 %v1096, %v1594
        %1596 = vdwg.mxu0
        %s1597 = scalar_lea.vmem [#allocation2], 48
        %v1598 = vld [vmem:[%s1597] sm:$0xff]
        %v1599 = vld [vmem:[%s1597 + $0x8] sm:$0xff]
        %v1600 = vld [vmem:[%s1597 + $0x10] sm:$0xff]
        %v1601 = vld [vmem:[%s1597 + $0x18] sm:$0xff]
        %v1602 = vld [vmem:[%s1597 + $0x20] sm:$0xff]
        %v1603 = vld [vmem:[%s1597 + $0x28] sm:$0xff]
        %v1604 = vld [vmem:[%s1597 + $0x30] sm:$0xff]
        %v1605 = vld [vmem:[%s1597 + $0x38] sm:$0xff]
        %v1606 = vld [vmem:[%s1597 + $0x40] sm:$0xff]
        %v1607 = vld [vmem:[%s1597 + $0x48] sm:$0xff]
        %v1608 = vld [vmem:[%s1597 + $0x50] sm:$0xff]
        %v1609 = vld [vmem:[%s1597 + $0x58] sm:$0xff]
        %v1610 = vld [vmem:[%s1597 + $0x60] sm:$0xff]
        %v1611 = vld [vmem:[%s1597 + $0x68] sm:$0xff]
        %v1612 = vld [vmem:[%s1597 + $0x70] sm:$0xff]
        %v1613 = vld [vmem:[%s1597 + $0x78] sm:$0xff]
        %v1614 = vld [vmem:[%s1597 + $0x80] sm:$0xff]
        %v1615 = vld [vmem:[%s1597 + $0x88] sm:$0xff]
        %v1616 = vld [vmem:[%s1597 + $0x90] sm:$0xff]
        %v1617 = vld [vmem:[%s1597 + $0x98] sm:$0xff]
        %v1618 = vld [vmem:[%s1597 + $0xa0] sm:$0xff]
        %v1619 = vld [vmem:[%s1597 + $0xa8] sm:$0xff]
        %v1620 = vld [vmem:[%s1597 + $0xb0] sm:$0xff]
        %v1621 = vld [vmem:[%s1597 + $0xb8] sm:$0xff]
        %v1622 = vld [vmem:[%s1597 + $0xc0] sm:$0xff]
        %v1623 = vld [vmem:[%s1597 + $0xc8] sm:$0xff]
        %v1624 = vld [vmem:[%s1597 + $0xd0] sm:$0xff]
        %v1625 = vld [vmem:[%s1597 + $0xd8] sm:$0xff]
        %v1626 = vld [vmem:[%s1597 + $0xe0] sm:$0xff]
        %v1627 = vld [vmem:[%s1597 + $0xe8] sm:$0xff]
        %v1628 = vld [vmem:[%s1597 + $0xf0] sm:$0xff]
        %v1629 = vld [vmem:[%s1597 + $0xf8] sm:$0xff]
        %v1630 = vld [vmem:[%s1597 + $0x100] sm:$0xff]
        %v1631 = vld [vmem:[%s1597 + $0x108] sm:$0xff]
        %v1632 = vld [vmem:[%s1597 + $0x110] sm:$0xff]
        %v1633 = vld [vmem:[%s1597 + $0x118] sm:$0xff]
        %v1634 = vld [vmem:[%s1597 + $0x120] sm:$0xff]
        %v1635 = vld [vmem:[%s1597 + $0x128] sm:$0xff]
        %v1636 = vld [vmem:[%s1597 + $0x130] sm:$0xff]
        %v1637 = vld [vmem:[%s1597 + $0x138] sm:$0xff]
        %v1638 = vld [vmem:[%s1597 + $0x140] sm:$0xff]
        %v1639 = vld [vmem:[%s1597 + $0x148] sm:$0xff]
        %v1640 = vld [vmem:[%s1597 + $0x150] sm:$0xff]
        %v1641 = vld [vmem:[%s1597 + $0x158] sm:$0xff]
        %v1642 = vld [vmem:[%s1597 + $0x160] sm:$0xff]
        %v1643 = vld [vmem:[%s1597 + $0x168] sm:$0xff]
        %v1644 = vld [vmem:[%s1597 + $0x170] sm:$0xff]
        %v1645 = vld [vmem:[%s1597 + $0x178] sm:$0xff]
        %v1646 = vpack.c.bf16 %v1599, %v1598
        %v1647 = vpack.c.bf16 %v1601, %v1600
        %v1648 = vpack.c.bf16 %v1603, %v1602
        %v1649 = vpack.c.bf16 %v1605, %v1604
        %v1650 = vpack.c.bf16 %v1607, %v1606
        %v1651 = vpack.c.bf16 %v1609, %v1608
        %v1652 = vpack.c.bf16 %v1611, %v1610
        %v1653 = vpack.c.bf16 %v1613, %v1612
        %v1654 = vpack.c.bf16 %v1615, %v1614
        %v1655 = vpack.c.bf16 %v1617, %v1616
        %v1656 = vpack.c.bf16 %v1619, %v1618
        %v1657 = vpack.c.bf16 %v1621, %v1620
        %v1658 = vpack.c.bf16 %v1623, %v1622
        %v1659 = vpack.c.bf16 %v1625, %v1624
        %v1660 = vpack.c.bf16 %v1627, %v1626
        %v1661 = vpack.c.bf16 %v1629, %v1628
        %v1662 = vpack.c.bf16 %v1631, %v1630
        %v1663 = vpack.c.bf16 %v1633, %v1632
        %v1664 = vpack.c.bf16 %v1635, %v1634
        %v1665 = vpack.c.bf16 %v1637, %v1636
        %v1666 = vpack.c.bf16 %v1639, %v1638
        %v1667 = vpack.c.bf16 %v1641, %v1640
        %v1668 = vpack.c.bf16 %v1643, %v1642
        %v1669 = vpack.c.bf16 %v1645, %v1644
        %s1670 = scalar_lea.vmem [#allocation7], 384
        %v1671 = vld [vmem:[%s1670] sm:$0xff]
        %v1672 = vld [vmem:[%s1670 + $0x8] sm:$0xf]
        %v1673 = vld [vmem:[%s1670 + $0xc] sm:$0xff]
        %v1674 = vld [vmem:[%s1670 + $0x14] sm:$0xf]
        %v1675 = vld [vmem:[%s1670 + $0x18] sm:$0xff]
        %v1676 = vld [vmem:[%s1670 + $0x20] sm:$0xf]
        %v1677 = vld [vmem:[%s1670 + $0x24] sm:$0xff]
        %v1678 = vld [vmem:[%s1670 + $0x2c] sm:$0xf]
        %v1679 = vld [vmem:[%s1670 + $0x30] sm:$0xff]
        %v1680 = vld [vmem:[%s1670 + $0x38] sm:$0xf]
        %v1681 = vld [vmem:[%s1670 + $0x3c] sm:$0xff]
        %v1682 = vld [vmem:[%s1670 + $0x44] sm:$0xf]
        %v1683 = vld [vmem:[%s1670 + $0x48] sm:$0xff]
        %v1684 = vld [vmem:[%s1670 + $0x50] sm:$0xf]
        %v1685 = vld [vmem:[%s1670 + $0x54] sm:$0xff]
        %v1686 = vld [vmem:[%s1670 + $0x5c] sm:$0xf]
        %v1687 = vld [vmem:[%s1670 + $0x60] sm:$0xff]
        %v1688 = vld [vmem:[%s1670 + $0x68] sm:$0xf]
        %v1689 = vld [vmem:[%s1670 + $0x6c] sm:$0xff]
        %v1690 = vld [vmem:[%s1670 + $0x74] sm:$0xf]
        %v1691 = vld [vmem:[%s1670 + $0x78] sm:$0xff]
        %v1692 = vld [vmem:[%s1670 + $0x80] sm:$0xf]
        %v1693 = vld [vmem:[%s1670 + $0x84] sm:$0xff]
        %v1694 = vld [vmem:[%s1670 + $0x8c] sm:$0xf]
        %v1695 = vld [vmem:[%s1670 + $0x90] sm:$0xff]
        %v1696 = vld [vmem:[%s1670 + $0x98] sm:$0xf]
        %v1697 = vld [vmem:[%s1670 + $0x9c] sm:$0xff]
        %v1698 = vld [vmem:[%s1670 + $0xa4] sm:$0xf]
        %v1699 = vld [vmem:[%s1670 + $0xa8] sm:$0xff]
        %v1700 = vld [vmem:[%s1670 + $0xb0] sm:$0xf]
        %v1701 = vld [vmem:[%s1670 + $0xb4] sm:$0xff]
        %v1702 = vld [vmem:[%s1670 + $0xbc] sm:$0xf]
        %v1735 = vunpack.c.l.b16 %v1671
        %v1736 = vunpack.c.h.b16 %v1671
        %v1737 = vunpack.c.l.b16 %v1672
        %v1738 = vunpack.c.l.b16 %v1673
        %v1739 = vunpack.c.h.b16 %v1673
        %v1740 = vunpack.c.l.b16 %v1674
        %v1741 = vunpack.c.l.b16 %v1675
        %v1742 = vunpack.c.h.b16 %v1675
        %v1743 = vunpack.c.l.b16 %v1676
        %v1744 = vunpack.c.l.b16 %v1677
        %v1745 = vunpack.c.h.b16 %v1677
        %v1746 = vunpack.c.l.b16 %v1678
        %v1747 = vunpack.c.l.b16 %v1679
        %v1748 = vunpack.c.h.b16 %v1679
        %v1749 = vunpack.c.l.b16 %v1680
        %v1750 = vunpack.c.l.b16 %v1681
        %v1751 = vunpack.c.h.b16 %v1681
        %v1752 = vunpack.c.l.b16 %v1682
        %v1753 = vunpack.c.l.b16 %v1683
        %v1754 = vunpack.c.h.b16 %v1683
        %v1755 = vunpack.c.l.b16 %v1684
        %v1756 = vunpack.c.l.b16 %v1685
        %v1757 = vunpack.c.h.b16 %v1685
        %v1758 = vunpack.c.l.b16 %v1686
        %v1759 = vunpack.c.l.b16 %v1687
        %v1760 = vunpack.c.h.b16 %v1687
        %v1761 = vunpack.c.l.b16 %v1688
        %v1762 = vunpack.c.l.b16 %v1689
        %v1763 = vunpack.c.h.b16 %v1689
        %v1764 = vunpack.c.l.b16 %v1690
        %v1765 = vunpack.c.l.b16 %v1691
        %v1766 = vunpack.c.h.b16 %v1691
        %v1767 = vunpack.c.l.b16 %v1692
        %v1768 = vunpack.c.l.b16 %v1693
        %v1769 = vunpack.c.h.b16 %v1693
        %v1770 = vunpack.c.l.b16 %v1694
        %v1771 = vunpack.c.l.b16 %v1695
        %v1772 = vunpack.c.h.b16 %v1695
        %v1773 = vunpack.c.l.b16 %v1696
        %v1774 = vunpack.c.l.b16 %v1697
        %v1775 = vunpack.c.h.b16 %v1697
        %v1776 = vunpack.c.l.b16 %v1698
        %v1777 = vunpack.c.l.b16 %v1699
        %v1778 = vunpack.c.h.b16 %v1699
        %v1779 = vunpack.c.l.b16 %v1700
        %v1780 = vunpack.c.l.b16 %v1701
        %v1781 = vunpack.c.h.b16 %v1701
        %v1782 = vunpack.c.l.b16 %v1702
        %v1783 = vpack.c.b16 %v1738, %v1735
        %v1784 = vpack.c.b16 %v1739, %v1736
        %v1785 = vpack.c.b16 %v1740, %v1737
        %v1786 = vpack.c.b16 %v1744, %v1741
        %v1787 = vpack.c.b16 %v1745, %v1742
        %v1788 = vpack.c.b16 %v1746, %v1743
        %v1789 = vpack.c.b16 %v1750, %v1747
        %v1790 = vpack.c.b16 %v1751, %v1748
        %v1791 = vpack.c.b16 %v1752, %v1749
        %v1792 = vpack.c.b16 %v1756, %v1753
        %v1793 = vpack.c.b16 %v1757, %v1754
        %v1794 = vpack.c.b16 %v1758, %v1755
        %v1795 = vpack.c.b16 %v1762, %v1759
        %v1796 = vpack.c.b16 %v1763, %v1760
        %v1797 = vpack.c.b16 %v1764, %v1761
        %v1798 = vpack.c.b16 %v1768, %v1765
        %v1799 = vpack.c.b16 %v1769, %v1766
        %v1800 = vpack.c.b16 %v1770, %v1767
        %v1801 = vpack.c.b16 %v1774, %v1771
        %v1802 = vpack.c.b16 %v1775, %v1772
        %v1803 = vpack.c.b16 %v1776, %v1773
        %v1804 = vpack.c.b16 %v1780, %v1777
        %v1805 = vpack.c.b16 %v1781, %v1778
        %v1806 = vpack.c.b16 %v1782, %v1779
        %1831 = vmatpush.bf16.msra.mxu0 %v1804
        %1832 = vmatpush.bf16.msra.mxu0 %v1801
        %1833 = vmatpush.bf16.msra.mxu0 %v1798
        %1834 = vmatpush.bf16.msra.mxu0 %v1795
        %1835 = vmatpush.bf16.msra.mxu0 %v1792
        %1836 = vmatpush.bf16.msra.mxu0 %v1789
        %1837 = vmatpush.bf16.msra.mxu0 %v1786
        %1838 = vmatpush.bf16.msra.mxu0 %v1783
        %1839 = vmatmul.bf16.gmra.mxu0 %v1646
        %v1840 = vpop.f32.mrf.mxu0
        %v1841 = vadd.f32 0.0, %v1840
        %v1842 = vpop.f32.mrf.mxu0
        %v1843 = vadd.f32 0.0, %v1842
        %1844 = vmatmul.bf16.gmra.mxu0 %v1647
        %v1845 = vpop.f32.mrf.mxu0
        %v1846 = vadd.f32 0.0, %v1845
        %v1847 = vpop.f32.mrf.mxu0
        %v1848 = vadd.f32 0.0, %v1847
        %1849 = vmatmul.bf16.gmra.mxu0 %v1648
        %v1850 = vpop.f32.mrf.mxu0
        %v1851 = vadd.f32 0.0, %v1850
        %v1852 = vpop.f32.mrf.mxu0
        %v1853 = vadd.f32 0.0, %v1852
        %1854 = vmatmul.bf16.gmra.mxu0 %v1649
        %v1855 = vpop.f32.mrf.mxu0
        %v1856 = vadd.f32 0.0, %v1855
        %v1857 = vpop.f32.mrf.mxu0
        %v1858 = vadd.f32 0.0, %v1857
        %1859 = vmatmul.bf16.gmra.mxu0 %v1650
        %v1860 = vpop.f32.mrf.mxu0
        %v1861 = vadd.f32 0.0, %v1860
        %v1862 = vpop.f32.mrf.mxu0
        %v1863 = vadd.f32 0.0, %v1862
        %1864 = vmatmul.bf16.gmra.mxu0 %v1651
        %v1865 = vpop.f32.mrf.mxu0
        %v1866 = vadd.f32 0.0, %v1865
        %v1867 = vpop.f32.mrf.mxu0
        %v1868 = vadd.f32 0.0, %v1867
        %1869 = vmatmul.bf16.gmra.mxu0 %v1652
        %v1870 = vpop.f32.mrf.mxu0
        %v1871 = vadd.f32 0.0, %v1870
        %v1872 = vpop.f32.mrf.mxu0
        %v1873 = vadd.f32 0.0, %v1872
        %1874 = vmatmul.bf16.gmra.mxu0 %v1653
        %v1875 = vpop.f32.mrf.mxu0
        %v1876 = vadd.f32 0.0, %v1875
        %v1877 = vpop.f32.mrf.mxu0
        %v1878 = vadd.f32 0.0, %v1877
        %1879 = vmatmul.bf16.gmra.mxu0 %v1654
        %v1880 = vpop.f32.mrf.mxu0
        %v1881 = vadd.f32 0.0, %v1880
        %v1882 = vpop.f32.mrf.mxu0
        %v1883 = vadd.f32 0.0, %v1882
        %1884 = vmatmul.bf16.gmra.mxu0 %v1655
        %v1885 = vpop.f32.mrf.mxu0
        %v1886 = vadd.f32 0.0, %v1885
        %v1887 = vpop.f32.mrf.mxu0
        %v1888 = vadd.f32 0.0, %v1887
        %1889 = vmatmul.bf16.gmra.mxu0 %v1656
        %v1890 = vpop.f32.mrf.mxu0
        %v1891 = vadd.f32 0.0, %v1890
        %v1892 = vpop.f32.mrf.mxu0
        %v1893 = vadd.f32 0.0, %v1892
        %1894 = vmatmul.bf16.gmra.mxu0 %v1657
        %v1895 = vpop.f32.mrf.mxu0
        %v1896 = vadd.f32 0.0, %v1895
        %v1897 = vpop.f32.mrf.mxu0
        %v1898 = vadd.f32 0.0, %v1897
        %1899 = vmatmul.bf16.gmra.mxu0 %v1658
        %v1900 = vpop.f32.mrf.mxu0
        %v1901 = vadd.f32 0.0, %v1900
        %v1902 = vpop.f32.mrf.mxu0
        %v1903 = vadd.f32 0.0, %v1902
        %1904 = vmatmul.bf16.gmra.mxu0 %v1659
        %v1905 = vpop.f32.mrf.mxu0
        %v1906 = vadd.f32 0.0, %v1905
        %v1907 = vpop.f32.mrf.mxu0
        %v1908 = vadd.f32 0.0, %v1907
        %1909 = vmatmul.bf16.gmra.mxu0 %v1660
        %v1910 = vpop.f32.mrf.mxu0
        %v1911 = vadd.f32 0.0, %v1910
        %v1912 = vpop.f32.mrf.mxu0
        %v1913 = vadd.f32 0.0, %v1912
        %1914 = vmatmul.bf16.gmra.mxu0 %v1661
        %v1915 = vpop.f32.mrf.mxu0
        %v1916 = vadd.f32 0.0, %v1915
        %v1917 = vpop.f32.mrf.mxu0
        %v1918 = vadd.f32 0.0, %v1917
        %1919 = vmatmul.bf16.gmra.mxu0 %v1662
        %v1920 = vpop.f32.mrf.mxu0
        %v1921 = vadd.f32 0.0, %v1920
        %v1922 = vpop.f32.mrf.mxu0
        %v1923 = vadd.f32 0.0, %v1922
        %1924 = vmatmul.bf16.gmra.mxu0 %v1663
        %v1925 = vpop.f32.mrf.mxu0
        %v1926 = vadd.f32 0.0, %v1925
        %v1927 = vpop.f32.mrf.mxu0
        %v1928 = vadd.f32 0.0, %v1927
        %1929 = vmatmul.bf16.gmra.mxu0 %v1664
        %v1930 = vpop.f32.mrf.mxu0
        %v1931 = vadd.f32 0.0, %v1930
        %v1932 = vpop.f32.mrf.mxu0
        %v1933 = vadd.f32 0.0, %v1932
        %1934 = vmatmul.bf16.gmra.mxu0 %v1665
        %v1935 = vpop.f32.mrf.mxu0
        %v1936 = vadd.f32 0.0, %v1935
        %v1937 = vpop.f32.mrf.mxu0
        %v1938 = vadd.f32 0.0, %v1937
        %1939 = vmatmul.bf16.gmra.mxu0 %v1666
        %v1940 = vpop.f32.mrf.mxu0
        %v1941 = vadd.f32 0.0, %v1940
        %v1942 = vpop.f32.mrf.mxu0
        %v1943 = vadd.f32 0.0, %v1942
        %1944 = vmatmul.bf16.gmra.mxu0 %v1667
        %v1945 = vpop.f32.mrf.mxu0
        %v1946 = vadd.f32 0.0, %v1945
        %v1947 = vpop.f32.mrf.mxu0
        %v1948 = vadd.f32 0.0, %v1947
        %1949 = vmatmul.bf16.gmra.mxu0 %v1668
        %v1950 = vpop.f32.mrf.mxu0
        %v1951 = vadd.f32 0.0, %v1950
        %v1952 = vpop.f32.mrf.mxu0
        %v1953 = vadd.f32 0.0, %v1952
        %1954 = vmatmul.bf16.gmra.mxu0 %v1669
        %v1955 = vpop.f32.mrf.mxu0
        %v1956 = vadd.f32 0.0, %v1955
        %v1957 = vpop.f32.mrf.mxu0
        %v1958 = vadd.f32 0.0, %v1957
        %1959 = vdwg.mxu0
        %1960 = vmatpush.bf16.msra.mxu0 %v1805
        %1961 = vmatpush.bf16.msra.mxu0 %v1802
        %1962 = vmatpush.bf16.msra.mxu0 %v1799
        %1963 = vmatpush.bf16.msra.mxu0 %v1796
        %1964 = vmatpush.bf16.msra.mxu0 %v1793
        %1965 = vmatpush.bf16.msra.mxu0 %v1790
        %1966 = vmatpush.bf16.msra.mxu0 %v1787
        %1967 = vmatpush.bf16.msra.mxu0 %v1784
        %1968 = vmatmul.bf16.gmra.mxu0 %v1646
        %v1969 = vpop.f32.mrf.mxu0
        %v1970 = vadd.f32 0.0, %v1969
        %v1971 = vpop.f32.mrf.mxu0
        %v1972 = vadd.f32 0.0, %v1971
        %1973 = vmatmul.bf16.gmra.mxu0 %v1647
        %v1974 = vpop.f32.mrf.mxu0
        %v1975 = vpop.f32.mrf.mxu0
        %v1976 = vadd.f32 0.0, %v1975
        %1977 = vmatmul.bf16.gmra.mxu0 %v1648
        %v1978 = vpop.f32.mrf.mxu0
        %v1979 = vadd.f32 0.0, %v1978
        %v1980 = vpop.f32.mrf.mxu0
        %1981 = vmatmul.bf16.gmra.mxu0 %v1649
        %v1982 = vpop.f32.mrf.mxu0
        %v1983 = vadd.f32 0.0, %v1982
        %v1984 = vpop.f32.mrf.mxu0
        %v1985 = vadd.f32 0.0, %v1984
        %1986 = vmatmul.bf16.gmra.mxu0 %v1650
        %v1987 = vpop.f32.mrf.mxu0
        %v1988 = vpop.f32.mrf.mxu0
        %v1989 = vadd.f32 0.0, %v1988
        %1990 = vmatmul.bf16.gmra.mxu0 %v1651
        %v1991 = vpop.f32.mrf.mxu0
        %v1992 = vadd.f32 0.0, %v1991
        %v1993 = vpop.f32.mrf.mxu0
        %1994 = vmatmul.bf16.gmra.mxu0 %v1652
        %v1995 = vpop.f32.mrf.mxu0
        %v1996 = vadd.f32 0.0, %v1995
        %v1997 = vpop.f32.mrf.mxu0
        %v1998 = vadd.f32 0.0, %v1997
        %1999 = vmatmul.bf16.gmra.mxu0 %v1653
        %v2000 = vpop.f32.mrf.mxu0
        %v2001 = vpop.f32.mrf.mxu0
        %v2002 = vadd.f32 0.0, %v2001
        %2003 = vmatmul.bf16.gmra.mxu0 %v1654
        %v2004 = vpop.f32.mrf.mxu0
        %v2005 = vadd.f32 0.0, %v2004
        %v2006 = vpop.f32.mrf.mxu0
        %2007 = vmatmul.bf16.gmra.mxu0 %v1655
        %v2008 = vpop.f32.mrf.mxu0
        %v2009 = vadd.f32 0.0, %v2008
        %v2010 = vpop.f32.mrf.mxu0
        %v2011 = vadd.f32 0.0, %v2010
        %2012 = vmatmul.bf16.gmra.mxu0 %v1656
        %v2013 = vpop.f32.mrf.mxu0
        %v2014 = vpop.f32.mrf.mxu0
        %v2015 = vadd.f32 0.0, %v2014
        %2016 = vmatmul.bf16.gmra.mxu0 %v1657
        %v2017 = vpop.f32.mrf.mxu0
        %v2018 = vadd.f32 0.0, %v2017
        %v2019 = vpop.f32.mrf.mxu0
        %2020 = vmatmul.bf16.gmra.mxu0 %v1658
        %v2021 = vpop.f32.mrf.mxu0
        %v2022 = vadd.f32 0.0, %v2021
        %v2023 = vpop.f32.mrf.mxu0
        %v2024 = vadd.f32 0.0, %v2023
        %2025 = vmatmul.bf16.gmra.mxu0 %v1659
        %v2026 = vpop.f32.mrf.mxu0
        %v2027 = vpop.f32.mrf.mxu0
        %v2028 = vadd.f32 0.0, %v2027
        %2029 = vmatmul.bf16.gmra.mxu0 %v1660
        %v2030 = vpop.f32.mrf.mxu0
        %v2031 = vadd.f32 0.0, %v2030
        %v2032 = vpop.f32.mrf.mxu0
        %2033 = vmatmul.bf16.gmra.mxu0 %v1661
        %v2034 = vpop.f32.mrf.mxu0
        %v2035 = vadd.f32 0.0, %v2034
        %v2036 = vpop.f32.mrf.mxu0
        %v2037 = vadd.f32 0.0, %v2036
        %2038 = vmatmul.bf16.gmra.mxu0 %v1662
        %v2039 = vpop.f32.mrf.mxu0
        %v2040 = vpop.f32.mrf.mxu0
        %v2041 = vadd.f32 0.0, %v2040
        %2042 = vmatmul.bf16.gmra.mxu0 %v1663
        %v2043 = vpop.f32.mrf.mxu0
        %v2044 = vadd.f32 0.0, %v2043
        %v2045 = vpop.f32.mrf.mxu0
        %2046 = vmatmul.bf16.gmra.mxu0 %v1664
        %v2047 = vpop.f32.mrf.mxu0
        %v2048 = vadd.f32 0.0, %v2047
        %v2049 = vpop.f32.mrf.mxu0
        %v2050 = vadd.f32 0.0, %v2049
        %2051 = vmatmul.bf16.gmra.mxu0 %v1665
        %v2052 = vpop.f32.mrf.mxu0
        %v2053 = vpop.f32.mrf.mxu0
        %v2054 = vadd.f32 0.0, %v2053
        %2055 = vmatmul.bf16.gmra.mxu0 %v1666
        %v2056 = vpop.f32.mrf.mxu0
        %v2057 = vadd.f32 0.0, %v2056
        %v2058 = vpop.f32.mrf.mxu0
        %2059 = vmatmul.bf16.gmra.mxu0 %v1667
        %v2060 = vpop.f32.mrf.mxu0
        %v2061 = vadd.f32 0.0, %v2060
        %v2062 = vpop.f32.mrf.mxu0
        %v2063 = vadd.f32 0.0, %v2062
        %2064 = vmatmul.bf16.gmra.mxu0 %v1668
        %v2065 = vpop.f32.mrf.mxu0
        %v2066 = vpop.f32.mrf.mxu0
        %v2067 = vadd.f32 0.0, %v2066
        %2068 = vmatmul.bf16.gmra.mxu0 %v1669
        %v2069 = vpop.f32.mrf.mxu0
        %v2070 = vadd.f32 0.0, %v2069
        %v2071 = vpop.f32.mrf.mxu0
        %2072 = vdwg.mxu0
        %2073 = vmatpush.bf16.msra.mxu0 %v1806
        %2074 = vmatpush.bf16.msra.mxu0 %v1803
        %2075 = vmatpush.bf16.msra.mxu0 %v1800
        %2076 = vmatpush.bf16.msra.mxu0 %v1797
        %2077 = vmatpush.bf16.msra.mxu0 %v1794
        %2078 = vmatpush.bf16.msra.mxu0 %v1791
        %2079 = vmatpush.bf16.msra.mxu0 %v1788
        %2080 = vmatpush.bf16.msra.mxu0 %v1785
        %2081 = vmatmul.bf16.gmra.mxu0 %v1646
        %v2082 = vpop.f32.mrf.mxu0
        %v2083 = vadd.f32 0.0, %v2082
        %v2084 = vpop.f32.mrf.mxu0
        %v2085 = vadd.f32 0.0, %v2084
        %2086 = vmatmul.bf16.gmra.mxu0 %v1647
        %v2087 = vpop.f32.mrf.mxu0
        %v2088 = vadd.f32 0.0, %v2087
        %v2089 = vpop.f32.mrf.mxu0
        %v2090 = vadd.f32 0.0, %v2089
        %2091 = vmatmul.bf16.gmra.mxu0 %v1648
        %v2092 = vpop.f32.mrf.mxu0
        %v2093 = vadd.f32 0.0, %v2092
        %v2094 = vpop.f32.mrf.mxu0
        %v2095 = vadd.f32 0.0, %v2094
        %2096 = vmatmul.bf16.gmra.mxu0 %v1649
        %v2097 = vpop.f32.mrf.mxu0
        %v2098 = vadd.f32 0.0, %v2097
        %v2099 = vpop.f32.mrf.mxu0
        %v2100 = vadd.f32 0.0, %v2099
        %2101 = vmatmul.bf16.gmra.mxu0 %v1650
        %v2102 = vpop.f32.mrf.mxu0
        %v2103 = vadd.f32 0.0, %v2102
        %v2104 = vpop.f32.mrf.mxu0
        %v2105 = vadd.f32 0.0, %v2104
        %2106 = vmatmul.bf16.gmra.mxu0 %v1651
        %v2107 = vpop.f32.mrf.mxu0
        %v2108 = vadd.f32 0.0, %v2107
        %v2109 = vpop.f32.mrf.mxu0
        %v2110 = vadd.f32 0.0, %v2109
        %2111 = vmatmul.bf16.gmra.mxu0 %v1652
        %v2112 = vpop.f32.mrf.mxu0
        %v2113 = vadd.f32 0.0, %v2112
        %v2114 = vpop.f32.mrf.mxu0
        %v2115 = vadd.f32 0.0, %v2114
        %2116 = vmatmul.bf16.gmra.mxu0 %v1653
        %v2117 = vpop.f32.mrf.mxu0
        %v2118 = vadd.f32 0.0, %v2117
        %v2119 = vpop.f32.mrf.mxu0
        %v2120 = vadd.f32 0.0, %v2119
        %2121 = vmatmul.bf16.gmra.mxu0 %v1654
        %v2122 = vpop.f32.mrf.mxu0
        %v2123 = vadd.f32 0.0, %v2122
        %v2124 = vpop.f32.mrf.mxu0
        %v2125 = vadd.f32 0.0, %v2124
        %2126 = vmatmul.bf16.gmra.mxu0 %v1655
        %v2127 = vpop.f32.mrf.mxu0
        %v2128 = vadd.f32 0.0, %v2127
        %v2129 = vpop.f32.mrf.mxu0
        %v2130 = vadd.f32 0.0, %v2129
        %2131 = vmatmul.bf16.gmra.mxu0 %v1656
        %v2132 = vpop.f32.mrf.mxu0
        %v2133 = vadd.f32 0.0, %v2132
        %v2134 = vpop.f32.mrf.mxu0
        %v2135 = vadd.f32 0.0, %v2134
        %2136 = vmatmul.bf16.gmra.mxu0 %v1657
        %v2137 = vpop.f32.mrf.mxu0
        %v2138 = vadd.f32 0.0, %v2137
        %v2139 = vpop.f32.mrf.mxu0
        %v2140 = vadd.f32 0.0, %v2139
        %2141 = vmatmul.bf16.gmra.mxu0 %v1658
        %v2142 = vpop.f32.mrf.mxu0
        %v2143 = vadd.f32 0.0, %v2142
        %v2144 = vpop.f32.mrf.mxu0
        %v2145 = vadd.f32 0.0, %v2144
        %2146 = vmatmul.bf16.gmra.mxu0 %v1659
        %v2147 = vpop.f32.mrf.mxu0
        %v2148 = vadd.f32 0.0, %v2147
        %v2149 = vpop.f32.mrf.mxu0
        %v2150 = vadd.f32 0.0, %v2149
        %2151 = vmatmul.bf16.gmra.mxu0 %v1660
        %v2152 = vpop.f32.mrf.mxu0
        %v2153 = vadd.f32 0.0, %v2152
        %v2154 = vpop.f32.mrf.mxu0
        %v2155 = vadd.f32 0.0, %v2154
        %2156 = vmatmul.bf16.gmra.mxu0 %v1661
        %v2157 = vpop.f32.mrf.mxu0
        %v2158 = vadd.f32 0.0, %v2157
        %v2159 = vpop.f32.mrf.mxu0
        %v2160 = vadd.f32 0.0, %v2159
        %2161 = vmatmul.bf16.gmra.mxu0 %v1662
        %v2162 = vpop.f32.mrf.mxu0
        %v2163 = vadd.f32 0.0, %v2162
        %v2164 = vpop.f32.mrf.mxu0
        %v2165 = vadd.f32 0.0, %v2164
        %2166 = vmatmul.bf16.gmra.mxu0 %v1663
        %v2167 = vpop.f32.mrf.mxu0
        %v2168 = vadd.f32 0.0, %v2167
        %v2169 = vpop.f32.mrf.mxu0
        %v2170 = vadd.f32 0.0, %v2169
        %2171 = vmatmul.bf16.gmra.mxu0 %v1664
        %v2172 = vpop.f32.mrf.mxu0
        %v2173 = vadd.f32 0.0, %v2172
        %v2174 = vpop.f32.mrf.mxu0
        %v2175 = vadd.f32 0.0, %v2174
        %2176 = vmatmul.bf16.gmra.mxu0 %v1665
        %v2177 = vpop.f32.mrf.mxu0
        %v2178 = vadd.f32 0.0, %v2177
        %v2179 = vpop.f32.mrf.mxu0
        %v2180 = vadd.f32 0.0, %v2179
        %2181 = vmatmul.bf16.gmra.mxu0 %v1666
        %v2182 = vpop.f32.mrf.mxu0
        %v2183 = vadd.f32 0.0, %v2182
        %v2184 = vpop.f32.mrf.mxu0
        %v2185 = vadd.f32 0.0, %v2184
        %2186 = vmatmul.bf16.gmra.mxu0 %v1667
        %v2187 = vpop.f32.mrf.mxu0
        %v2188 = vadd.f32 0.0, %v2187
        %v2189 = vpop.f32.mrf.mxu0
        %v2190 = vadd.f32 0.0, %v2189
        %2191 = vmatmul.bf16.gmra.mxu0 %v1668
        %v2192 = vpop.f32.mrf.mxu0
        %v2193 = vadd.f32 0.0, %v2192
        %v2194 = vpop.f32.mrf.mxu0
        %v2195 = vadd.f32 0.0, %v2194
        %2196 = vmatmul.bf16.gmra.mxu0 %v1669
        %v2197 = vpop.f32.mrf.mxu0
        %v2198 = vadd.f32 0.0, %v2197
        %v2199 = vpop.f32.mrf.mxu0
        %v2200 = vadd.f32 0.0, %v2199
        %2201 = vdwg.mxu0
        %v2202 = vadd.f32 %v1236, %v1841
        %v2203 = vadd.f32 %v1365, %v1970
        %v2204 = vadd.f32 %v1478, %v2083
        %v2205 = vadd.f32 %v1238, %v1843
        %v2206 = vadd.f32 %v1367, %v1972
        %v2207 = vadd.f32 %v1480, %v2085
        %v2208 = vadd.f32 %v1241, %v1846
        %v2209 = vadd.f32 %v1483, %v2088
        %v2210 = vadd.f32 %v1243, %v1848
        %v2211 = vadd.f32 %v1371, %v1976
        %v2212 = vadd.f32 %v1485, %v2090
        %v2213 = vadd.f32 %v1246, %v1851
        %v2214 = vadd.f32 %v1374, %v1979
        %v2215 = vadd.f32 %v1488, %v2093
        %v2216 = vadd.f32 %v1248, %v1853
        %v2217 = vadd.f32 %v1490, %v2095
        %v2218 = vadd.f32 %v1251, %v1856
        %v2219 = vadd.f32 %v1378, %v1983
        %v2220 = vadd.f32 %v1493, %v2098
        %v2221 = vadd.f32 %v1253, %v1858
        %v2222 = vadd.f32 %v1380, %v1985
        %v2223 = vadd.f32 %v1495, %v2100
        %v2224 = vadd.f32 %v1256, %v1861
        %v2225 = vadd.f32 %v1498, %v2103
        %v2226 = vadd.f32 %v1258, %v1863
        %v2227 = vadd.f32 %v1384, %v1989
        %v2228 = vadd.f32 %v1500, %v2105
        %v2229 = vadd.f32 %v1261, %v1866
        %v2230 = vadd.f32 %v1387, %v1992
        %v2231 = vadd.f32 %v1503, %v2108
        %v2232 = vadd.f32 %v1263, %v1868
        %v2233 = vadd.f32 %v1505, %v2110
        %v2234 = vadd.f32 %v1266, %v1871
        %v2235 = vadd.f32 %v1391, %v1996
        %v2236 = vadd.f32 %v1508, %v2113
        %v2237 = vadd.f32 %v1268, %v1873
        %v2238 = vadd.f32 %v1393, %v1998
        %v2239 = vadd.f32 %v1510, %v2115
        %v2240 = vadd.f32 %v1271, %v1876
        %v2241 = vadd.f32 %v1513, %v2118
        %v2242 = vadd.f32 %v1273, %v1878
        %v2243 = vadd.f32 %v1397, %v2002
        %v2244 = vadd.f32 %v1515, %v2120
        %v2245 = vadd.f32 %v1276, %v1881
        %v2246 = vadd.f32 %v1400, %v2005
        %v2247 = vadd.f32 %v1518, %v2123
        %v2248 = vadd.f32 %v1278, %v1883
        %v2249 = vadd.f32 %v1520, %v2125
        %v2250 = vadd.f32 %v1281, %v1886
        %v2251 = vadd.f32 %v1404, %v2009
        %v2252 = vadd.f32 %v1523, %v2128
        %v2253 = vadd.f32 %v1283, %v1888
        %v2254 = vadd.f32 %v1406, %v2011
        %v2255 = vadd.f32 %v1525, %v2130
        %v2256 = vadd.f32 %v1286, %v1891
        %v2257 = vadd.f32 %v1528, %v2133
        %v2258 = vadd.f32 %v1288, %v1893
        %v2259 = vadd.f32 %v1410, %v2015
        %v2260 = vadd.f32 %v1530, %v2135
        %v2261 = vadd.f32 %v1291, %v1896
        %v2262 = vadd.f32 %v1413, %v2018
        %v2263 = vadd.f32 %v1533, %v2138
        %v2264 = vadd.f32 %v1293, %v1898
        %v2265 = vadd.f32 %v1535, %v2140
        %v2266 = vadd.f32 %v1296, %v1901
        %v2267 = vadd.f32 %v1417, %v2022
        %v2268 = vadd.f32 %v1538, %v2143
        %v2269 = vadd.f32 %v1298, %v1903
        %v2270 = vadd.f32 %v1419, %v2024
        %v2271 = vadd.f32 %v1540, %v2145
        %v2272 = vadd.f32 %v1301, %v1906
        %v2273 = vadd.f32 %v1543, %v2148
        %v2274 = vadd.f32 %v1303, %v1908
        %v2275 = vadd.f32 %v1423, %v2028
        %v2276 = vadd.f32 %v1545, %v2150
        %v2277 = vadd.f32 %v1306, %v1911
        %v2278 = vadd.f32 %v1426, %v2031
        %v2279 = vadd.f32 %v1548, %v2153
        %v2280 = vadd.f32 %v1308, %v1913
        %v2281 = vadd.f32 %v1550, %v2155
        %v2282 = vadd.f32 %v1311, %v1916
        %v2283 = vadd.f32 %v1430, %v2035
        %v2284 = vadd.f32 %v1553, %v2158
        %v2285 = vadd.f32 %v1313, %v1918
        %v2286 = vadd.f32 %v1432, %v2037
        %v2287 = vadd.f32 %v1555, %v2160
        %v2288 = vadd.f32 %v1316, %v1921
        %v2289 = vadd.f32 %v1558, %v2163
        %v2290 = vadd.f32 %v1318, %v1923
        %v2291 = vadd.f32 %v1436, %v2041
        %v2292 = vadd.f32 %v1560, %v2165
        %v2293 = vadd.f32 %v1321, %v1926
        %v2294 = vadd.f32 %v1439, %v2044
        %v2295 = vadd.f32 %v1563, %v2168
        %v2296 = vadd.f32 %v1323, %v1928
        %v2297 = vadd.f32 %v1565, %v2170
        %v2298 = vadd.f32 %v1326, %v1931
        %v2299 = vadd.f32 %v1443, %v2048
        %v2300 = vadd.f32 %v1568, %v2173
        %v2301 = vadd.f32 %v1328, %v1933
        %v2302 = vadd.f32 %v1445, %v2050
        %v2303 = vadd.f32 %v1570, %v2175
        %v2304 = vadd.f32 %v1331, %v1936
        %v2305 = vadd.f32 %v1573, %v2178
        %v2306 = vadd.f32 %v1333, %v1938
        %v2307 = vadd.f32 %v1449, %v2054
        %v2308 = vadd.f32 %v1575, %v2180
        %v2309 = vadd.f32 %v1336, %v1941
        %v2310 = vadd.f32 %v1452, %v2057
        %v2311 = vadd.f32 %v1578, %v2183
        %v2312 = vadd.f32 %v1338, %v1943
        %v2313 = vadd.f32 %v1580, %v2185
        %v2314 = vadd.f32 %v1341, %v1946
        %v2315 = vadd.f32 %v1456, %v2061
        %v2316 = vadd.f32 %v1583, %v2188
        %v2317 = vadd.f32 %v1343, %v1948
        %v2318 = vadd.f32 %v1458, %v2063
        %v2319 = vadd.f32 %v1585, %v2190
        %v2320 = vadd.f32 %v1346, %v1951
        %v2321 = vadd.f32 %v1588, %v2193
        %v2322 = vadd.f32 %v1348, %v1953
        %v2323 = vadd.f32 %v1462, %v2067
        %v2324 = vadd.f32 %v1590, %v2195
        %v2325 = vadd.f32 %v1351, %v1956
        %v2326 = vadd.f32 %v1465, %v2070
        %v2327 = vadd.f32 %v1593, %v2198
        %v2328 = vadd.f32 %v1353, %v1958
        %v2329 = vadd.f32 %v1595, %v2200
        %v2330 = vrot.slane %v2202, 7
        %v2331 = vrot.slane %v2205, 7
        %v2332 = vrot.slane %v2208, 7
        %v2333 = vrot.slane %v2210, 7
        %v2334 = vrot.slane %v2213, 7
        %v2335 = vrot.slane %v2216, 7
        %v2336 = vrot.slane %v2218, 7
        %v2337 = vrot.slane %v2221, 7
        %v2338 = vrot.slane %v2224, 7
        %v2339 = vrot.slane %v2226, 7
        %v2340 = vrot.slane %v2229, 7
        %v2341 = vrot.slane %v2232, 7
        %v2342 = vrot.slane %v2234, 7
        %v2343 = vrot.slane %v2237, 7
        %v2344 = vrot.slane %v2240, 7
        %v2345 = vrot.slane %v2242, 7
        %v2346 = vrot.slane %v2245, 7
        %v2347 = vrot.slane %v2248, 7
        %v2348 = vrot.slane %v2250, 7
        %v2349 = vrot.slane %v2253, 7
        %v2350 = vrot.slane %v2256, 7
        %v2351 = vrot.slane %v2258, 7
        %v2352 = vrot.slane %v2261, 7
        %v2353 = vrot.slane %v2264, 7
        %v2354 = vrot.slane %v2266, 7
        %v2355 = vrot.slane %v2269, 7
        %v2356 = vrot.slane %v2272, 7
        %v2357 = vrot.slane %v2274, 7
        %v2358 = vrot.slane %v2277, 7
        %v2359 = vrot.slane %v2280, 7
        %v2360 = vrot.slane %v2282, 7
        %v2361 = vrot.slane %v2285, 7
        %v2362 = vrot.slane %v2288, 7
        %v2363 = vrot.slane %v2290, 7
        %v2364 = vrot.slane %v2293, 7
        %v2365 = vrot.slane %v2296, 7
        %v2366 = vrot.slane %v2298, 7
        %v2367 = vrot.slane %v2301, 7
        %v2368 = vrot.slane %v2304, 7
        %v2369 = vrot.slane %v2306, 7
        %v2370 = vrot.slane %v2309, 7
        %v2371 = vrot.slane %v2312, 7
        %v2372 = vrot.slane %v2314, 7
        %v2373 = vrot.slane %v2317, 7
        %v2374 = vrot.slane %v2320, 7
        %v2375 = vrot.slane %v2322, 7
        %v2376 = vrot.slane %v2325, 7
        %v2377 = vrot.slane %v2328, 7
        %v2378 = vlaneseq
        %v2379 = vshrl.u32 %v2378, 7
        %vm2380 = vcmp.lt.s32.totalorder %v2379, 1
        %v2381 = vsel %vm2380, %v2375, %v2376
        %v2382 = vsel %vm2380, %v2374, %v2375
        %v2383 = vsel %vm2380, %v2372, %v2373
        %v2384 = vsel %vm2380, %v2371, %v2372
        %v2385 = vsel %vm2380, %v2369, %v2370
        %v2386 = vsel %vm2380, %v2368, %v2369
        %v2387 = vsel %vm2380, %v2366, %v2367
        %v2388 = vsel %vm2380, %v2365, %v2366
        %v2389 = vsel %vm2380, %v2363, %v2364
        %v2390 = vsel %vm2380, %v2362, %v2363
        %v2391 = vsel %vm2380, %v2360, %v2361
        %v2392 = vsel %vm2380, %v2359, %v2360
        %v2393 = vsel %vm2380, %v2357, %v2358
        %v2394 = vsel %vm2380, %v2356, %v2357
        %v2395 = vsel %vm2380, %v2354, %v2355
        %v2396 = vsel %vm2380, %v2353, %v2354
        %v2397 = vsel %vm2380, %v2351, %v2352
        %v2398 = vsel %vm2380, %v2350, %v2351
        %v2399 = vsel %vm2380, %v2348, %v2349
        %v2400 = vsel %vm2380, %v2347, %v2348
        %v2401 = vsel %vm2380, %v2345, %v2346
        %v2402 = vsel %vm2380, %v2344, %v2345
        %v2403 = vsel %vm2380, %v2342, %v2343
        %v2404 = vsel %vm2380, %v2341, %v2342
        %v2405 = vsel %vm2380, %v2339, %v2340
        %v2406 = vsel %vm2380, %v2338, %v2339
        %v2407 = vsel %vm2380, %v2336, %v2337
        %v2408 = vsel %vm2380, %v2335, %v2336
        %v2409 = vsel %vm2380, %v2333, %v2334
        %v2410 = vsel %vm2380, %v2332, %v2333
        %v2411 = vsel %vm2380, %v2330, %v2331
        %v2412 = vsel %vm2380, %v2377, %v2330
        %v2413 = vrot.slane %v2204, 1
        %v2414 = vrot.slane %v2207, 1
        %v2415 = vrot.slane %v2209, 1
        %v2416 = vrot.slane %v2212, 1
        %v2417 = vrot.slane %v2215, 1
        %v2418 = vrot.slane %v2217, 1
        %v2419 = vrot.slane %v2220, 1
        %v2420 = vrot.slane %v2223, 1
        %v2421 = vrot.slane %v2225, 1
        %v2422 = vrot.slane %v2228, 1
        %v2423 = vrot.slane %v2231, 1
        %v2424 = vrot.slane %v2233, 1
        %v2425 = vrot.slane %v2236, 1
        %v2426 = vrot.slane %v2239, 1
        %v2427 = vrot.slane %v2241, 1
        %v2428 = vrot.slane %v2244, 1
        %v2429 = vrot.slane %v2247, 1
        %v2430 = vrot.slane %v2249, 1
        %v2431 = vrot.slane %v2252, 1
        %v2432 = vrot.slane %v2255, 1
        %v2433 = vrot.slane %v2257, 1
        %v2434 = vrot.slane %v2260, 1
        %v2435 = vrot.slane %v2263, 1
        %v2436 = vrot.slane %v2265, 1
        %v2437 = vrot.slane %v2268, 1
        %v2438 = vrot.slane %v2271, 1
        %v2439 = vrot.slane %v2273, 1
        %v2440 = vrot.slane %v2276, 1
        %v2441 = vrot.slane %v2279, 1
        %v2442 = vrot.slane %v2281, 1
        %v2443 = vrot.slane %v2284, 1
        %v2444 = vrot.slane %v2287, 1
        %v2445 = vrot.slane %v2289, 1
        %v2446 = vrot.slane %v2292, 1
        %v2447 = vrot.slane %v2295, 1
        %v2448 = vrot.slane %v2297, 1
        %v2449 = vrot.slane %v2300, 1
        %v2450 = vrot.slane %v2303, 1
        %v2451 = vrot.slane %v2305, 1
        %v2452 = vrot.slane %v2308, 1
        %v2453 = vrot.slane %v2311, 1
        %v2454 = vrot.slane %v2313, 1
        %v2455 = vrot.slane %v2316, 1
        %v2456 = vrot.slane %v2319, 1
        %v2457 = vrot.slane %v2321, 1
        %v2458 = vrot.slane %v2324, 1
        %v2459 = vrot.slane %v2327, 1
        %v2460 = vrot.slane %v2329, 1
        %vm2461 = vcmp.lt.s32.totalorder %v2379, 7
        %v2462 = vsel %vm2461, %v2459, %v2460
        %v2463 = vsel %vm2461, %v2458, %v2459
        %v2464 = vsel %vm2461, %v2456, %v2457
        %v2465 = vsel %vm2461, %v2455, %v2456
        %v2466 = vsel %vm2461, %v2453, %v2454
        %v2467 = vsel %vm2461, %v2452, %v2453
        %v2468 = vsel %vm2461, %v2450, %v2451
        %v2469 = vsel %vm2461, %v2449, %v2450
        %v2470 = vsel %vm2461, %v2447, %v2448
        %v2471 = vsel %vm2461, %v2446, %v2447
        %v2472 = vsel %vm2461, %v2444, %v2445
        %v2473 = vsel %vm2461, %v2443, %v2444
        %v2474 = vsel %vm2461, %v2441, %v2442
        %v2475 = vsel %vm2461, %v2440, %v2441
        %v2476 = vsel %vm2461, %v2438, %v2439
        %v2477 = vsel %vm2461, %v2437, %v2438
        %v2478 = vsel %vm2461, %v2435, %v2436
        %v2479 = vsel %vm2461, %v2434, %v2435
        %v2480 = vsel %vm2461, %v2432, %v2433
        %v2481 = vsel %vm2461, %v2431, %v2432
        %v2482 = vsel %vm2461, %v2429, %v2430
        %v2483 = vsel %vm2461, %v2428, %v2429
        %v2484 = vsel %vm2461, %v2426, %v2427
        %v2485 = vsel %vm2461, %v2425, %v2426
        %v2486 = vsel %vm2461, %v2423, %v2424
        %v2487 = vsel %vm2461, %v2422, %v2423
        %v2488 = vsel %vm2461, %v2420, %v2421
        %v2489 = vsel %vm2461, %v2419, %v2420
        %v2490 = vsel %vm2461, %v2417, %v2418
        %v2491 = vsel %vm2461, %v2416, %v2417
        %v2492 = vsel %vm2461, %v2414, %v2415
        %v2493 = vsel %vm2461, %v2413, %v2414
        %v2494 = vadd.f32 %v2412, %v2203
        %v2495 = vadd.f32 %v2411, %v2206
        %v2496 = vadd.f32 %v2410, %v2211
        %v2497 = vadd.f32 %v2409, %v2214
        %v2498 = vadd.f32 %v2408, %v2219
        %v2499 = vadd.f32 %v2407, %v2222
        %v2500 = vadd.f32 %v2406, %v2227
        %v2501 = vadd.f32 %v2405, %v2230
        %v2502 = vadd.f32 %v2404, %v2235
        %v2503 = vadd.f32 %v2403, %v2238
        %v2504 = vadd.f32 %v2402, %v2243
        %v2505 = vadd.f32 %v2401, %v2246
        %v2506 = vadd.f32 %v2400, %v2251
        %v2507 = vadd.f32 %v2399, %v2254
        %v2508 = vadd.f32 %v2398, %v2259
        %v2509 = vadd.f32 %v2397, %v2262
        %v2510 = vadd.f32 %v2396, %v2267
        %v2511 = vadd.f32 %v2395, %v2270
        %v2512 = vadd.f32 %v2394, %v2275
        %v2513 = vadd.f32 %v2393, %v2278
        %v2514 = vadd.f32 %v2392, %v2283
        %v2515 = vadd.f32 %v2391, %v2286
        %v2516 = vadd.f32 %v2390, %v2291
        %v2517 = vadd.f32 %v2389, %v2294
        %v2518 = vadd.f32 %v2388, %v2299
        %v2519 = vadd.f32 %v2387, %v2302
        %v2520 = vadd.f32 %v2386, %v2307
        %v2521 = vadd.f32 %v2385, %v2310
        %v2522 = vadd.f32 %v2384, %v2315
        %v2523 = vadd.f32 %v2383, %v2318
        %v2524 = vadd.f32 %v2382, %v2323
        %v2525 = vadd.f32 %v2381, %v2326
        %v2526 = vadd.f32 %v2494, %v2493
        %v2527 = vadd.f32 %v2495, %v2492
        %v2528 = vadd.f32 %v2496, %v2491
        %v2529 = vadd.f32 %v2497, %v2490
        %v2530 = vadd.f32 %v2498, %v2489
        %v2531 = vadd.f32 %v2499, %v2488
        %v2532 = vadd.f32 %v2500, %v2487
        %v2533 = vadd.f32 %v2501, %v2486
        %v2534 = vadd.f32 %v2502, %v2485
        %v2535 = vadd.f32 %v2503, %v2484
        %v2536 = vadd.f32 %v2504, %v2483
        %v2537 = vadd.f32 %v2505, %v2482
        %v2538 = vadd.f32 %v2506, %v2481
        %v2539 = vadd.f32 %v2507, %v2480
        %v2540 = vadd.f32 %v2508, %v2479
        %v2541 = vadd.f32 %v2509, %v2478
        %v2542 = vadd.f32 %v2510, %v2477
        %v2543 = vadd.f32 %v2511, %v2476
        %v2544 = vadd.f32 %v2512, %v2475
        %v2545 = vadd.f32 %v2513, %v2474
        %v2546 = vadd.f32 %v2514, %v2473
        %v2547 = vadd.f32 %v2515, %v2472
        %v2548 = vadd.f32 %v2516, %v2471
        %v2549 = vadd.f32 %v2517, %v2470
        %v2550 = vadd.f32 %v2518, %v2469
        %v2551 = vadd.f32 %v2519, %v2468
        %v2552 = vadd.f32 %v2520, %v2467
        %v2553 = vadd.f32 %v2521, %v2466
        %v2554 = vadd.f32 %v2522, %v2465
        %v2555 = vadd.f32 %v2523, %v2464
        %v2556 = vadd.f32 %v2524, %v2463
        %v2557 = vadd.f32 %v2525, %v2462
        %v2558 = vld [vmem:[%s2] sm:$0x1]
        %v2560 = vperm.slane %v2558, 0
        %v2562 = vadd.f32 %v2526, %v2560
        %v2563 = vadd.f32 %v2527, %v2560
        %v2564 = vadd.f32 %v2528, %v2560
        %v2565 = vadd.f32 %v2529, %v2560
        %v2566 = vadd.f32 %v2530, %v2560
        %v2567 = vadd.f32 %v2531, %v2560
        %v2568 = vadd.f32 %v2532, %v2560
        %v2569 = vadd.f32 %v2533, %v2560
        %v2570 = vadd.f32 %v2534, %v2560
        %v2571 = vadd.f32 %v2535, %v2560
        %v2572 = vadd.f32 %v2536, %v2560
        %v2573 = vadd.f32 %v2537, %v2560
        %v2574 = vadd.f32 %v2538, %v2560
        %v2575 = vadd.f32 %v2539, %v2560
        %v2576 = vadd.f32 %v2540, %v2560
        %v2577 = vadd.f32 %v2541, %v2560
        %v2578 = vadd.f32 %v2542, %v2560
        %v2579 = vadd.f32 %v2543, %v2560
        %v2580 = vadd.f32 %v2544, %v2560
        %v2581 = vadd.f32 %v2545, %v2560
        %v2582 = vadd.f32 %v2546, %v2560
        %v2583 = vadd.f32 %v2547, %v2560
        %v2584 = vadd.f32 %v2548, %v2560
        %v2585 = vadd.f32 %v2549, %v2560
        %v2586 = vadd.f32 %v2550, %v2560
        %v2587 = vadd.f32 %v2551, %v2560
        %v2588 = vadd.f32 %v2552, %v2560
        %v2589 = vadd.f32 %v2553, %v2560
        %v2590 = vadd.f32 %v2554, %v2560
        %v2591 = vadd.f32 %v2555, %v2560
        %v2592 = vadd.f32 %v2556, %v2560
        %v2593 = vadd.f32 %v2557, %v2560
        %v2594 = vmax.f32 %v2562, 0.0
        %v2595 = vmax.f32 %v2563, 0.0
        %v2596 = vmax.f32 %v2564, 0.0
        %v2597 = vmax.f32 %v2565, 0.0
        %v2598 = vmax.f32 %v2566, 0.0
        %v2599 = vmax.f32 %v2567, 0.0
        %v2600 = vmax.f32 %v2568, 0.0
        %v2601 = vmax.f32 %v2569, 0.0
        %v2602 = vmax.f32 %v2570, 0.0
        %v2603 = vmax.f32 %v2571, 0.0
        %v2604 = vmax.f32 %v2572, 0.0
        %v2605 = vmax.f32 %v2573, 0.0
        %v2606 = vmax.f32 %v2574, 0.0
        %v2607 = vmax.f32 %v2575, 0.0
        %v2608 = vmax.f32 %v2576, 0.0
        %v2609 = vmax.f32 %v2577, 0.0
        %v2610 = vmax.f32 %v2578, 0.0
        %v2611 = vmax.f32 %v2579, 0.0
        %v2612 = vmax.f32 %v2580, 0.0
        %v2613 = vmax.f32 %v2581, 0.0
        %v2614 = vmax.f32 %v2582, 0.0
        %v2615 = vmax.f32 %v2583, 0.0
        %v2616 = vmax.f32 %v2584, 0.0
        %v2617 = vmax.f32 %v2585, 0.0
        %v2618 = vmax.f32 %v2586, 0.0
        %v2619 = vmax.f32 %v2587, 0.0
        %v2620 = vmax.f32 %v2588, 0.0
        %v2621 = vmax.f32 %v2589, 0.0
        %v2622 = vmax.f32 %v2590, 0.0
        %v2623 = vmax.f32 %v2591, 0.0
        %v2624 = vmax.f32 %v2592, 0.0
        %v2625 = vmax.f32 %v2593, 0.0
        %2626 = vst [vmem:[%s309] sm:$0xff] %v2594
        %2627 = vst [vmem:[%s309 + $0x8] sm:$0xff] %v2595
        %2628 = vst [vmem:[%s309 + $0x18] sm:$0xff] %v2596
        %2629 = vst [vmem:[%s309 + $0x20] sm:$0xff] %v2597
        %2630 = vst [vmem:[%s309 + $0x30] sm:$0xff] %v2598
        %2631 = vst [vmem:[%s309 + $0x38] sm:$0xff] %v2599
        %2632 = vst [vmem:[%s309 + $0x48] sm:$0xff] %v2600
        %2633 = vst [vmem:[%s309 + $0x50] sm:$0xff] %v2601
        %2634 = vst [vmem:[%s309 + $0x60] sm:$0xff] %v2602
        %2635 = vst [vmem:[%s309 + $0x68] sm:$0xff] %v2603
        %2636 = vst [vmem:[%s309 + $0x78] sm:$0xff] %v2604
        %2637 = vst [vmem:[%s309 + $0x80] sm:$0xff] %v2605
        %2638 = vst [vmem:[%s309 + $0x90] sm:$0xff] %v2606
        %2639 = vst [vmem:[%s309 + $0x98] sm:$0xff] %v2607
        %2640 = vst [vmem:[%s309 + $0xa8] sm:$0xff] %v2608
        %2641 = vst [vmem:[%s309 + $0xb0] sm:$0xff] %v2609
        %2642 = vst [vmem:[%s309 + $0xc0] sm:$0xff] %v2610
        %2643 = vst [vmem:[%s309 + $0xc8] sm:$0xff] %v2611
        %2644 = vst [vmem:[%s309 + $0xd8] sm:$0xff] %v2612
        %2645 = vst [vmem:[%s309 + $0xe0] sm:$0xff] %v2613
        %2646 = vst [vmem:[%s309 + $0xf0] sm:$0xff] %v2614
        %2647 = vst [vmem:[%s309 + $0xf8] sm:$0xff] %v2615
        %2648 = vst [vmem:[%s309 + $0x108] sm:$0xff] %v2616
        %2649 = vst [vmem:[%s309 + $0x110] sm:$0xff] %v2617
        %2650 = vst [vmem:[%s309 + $0x120] sm:$0xff] %v2618
        %2651 = vst [vmem:[%s309 + $0x128] sm:$0xff] %v2619
        %2652 = vst [vmem:[%s309 + $0x138] sm:$0xff] %v2620
        %2653 = vst [vmem:[%s309 + $0x140] sm:$0xff] %v2621
        %2654 = vst [vmem:[%s309 + $0x150] sm:$0xff] %v2622
        %2655 = vst [vmem:[%s309 + $0x158] sm:$0xff] %v2623
        %2656 = vst [vmem:[%s309 + $0x168] sm:$0xff] %v2624
        %2657 = vst [vmem:[%s309 + $0x170] sm:$0xff] %v2625
        %v2658 = vld [vmem:[#allocation3] sm:$0xff]
        %v2659 = vld [vmem:[#allocation3 + $0x8] sm:$0xff]
        %v2660 = vld [vmem:[#allocation3 + $0x10] sm:$0xff]
        %v2661 = vld [vmem:[#allocation3 + $0x18] sm:$0xff]
        %v2662 = vld [vmem:[#allocation3 + $0x20] sm:$0xff]
        %v2663 = vld [vmem:[#allocation3 + $0x28] sm:$0xff]
        %v2664 = vld [vmem:[#allocation3 + $0x30] sm:$0xff]
        %v2665 = vld [vmem:[#allocation3 + $0x38] sm:$0xff]
        %v2666 = vld [vmem:[#allocation3 + $0x40] sm:$0xff]
        %v2667 = vld [vmem:[#allocation3 + $0x48] sm:$0xff]
        %v2668 = vld [vmem:[#allocation3 + $0x50] sm:$0xff]
        %v2669 = vld [vmem:[#allocation3 + $0x58] sm:$0xff]
        %v2670 = vld [vmem:[#allocation3 + $0x60] sm:$0xff]
        %v2671 = vld [vmem:[#allocation3 + $0x68] sm:$0xff]
        %v2672 = vld [vmem:[#allocation3 + $0x70] sm:$0xff]
        %v2673 = vld [vmem:[#allocation3 + $0x78] sm:$0xff]
        %v2674 = vld [vmem:[#allocation3 + $0x80] sm:$0xff]
        %v2675 = vld [vmem:[#allocation3 + $0x88] sm:$0xff]
        %v2676 = vld [vmem:[#allocation3 + $0x90] sm:$0xff]
        %v2677 = vld [vmem:[#allocation3 + $0x98] sm:$0xff]
        %v2678 = vld [vmem:[#allocation3 + $0xa0] sm:$0xff]
        %v2679 = vld [vmem:[#allocation3 + $0xa8] sm:$0xff]
        %v2680 = vld [vmem:[#allocation3 + $0xb0] sm:$0xff]
        %v2681 = vld [vmem:[#allocation3 + $0xb8] sm:$0xff]
        %v2682 = vld [vmem:[#allocation3 + $0xc0] sm:$0xff]
        %v2683 = vld [vmem:[#allocation3 + $0xc8] sm:$0xff]
        %v2684 = vld [vmem:[#allocation3 + $0xd0] sm:$0xff]
        %v2685 = vld [vmem:[#allocation3 + $0xd8] sm:$0xff]
        %v2686 = vld [vmem:[#allocation3 + $0xe0] sm:$0xff]
        %v2687 = vld [vmem:[#allocation3 + $0xe8] sm:$0xff]
        %v2688 = vld [vmem:[#allocation3 + $0xf0] sm:$0xff]
        %v2689 = vld [vmem:[#allocation3 + $0xf8] sm:$0xff]
        %v2690 = vld [vmem:[#allocation3 + $0x100] sm:$0xff]
        %v2691 = vld [vmem:[#allocation3 + $0x108] sm:$0xff]
        %v2692 = vld [vmem:[#allocation3 + $0x110] sm:$0xff]
        %v2693 = vld [vmem:[#allocation3 + $0x118] sm:$0xff]
        %v2694 = vld [vmem:[#allocation3 + $0x120] sm:$0xff]
        %v2695 = vld [vmem:[#allocation3 + $0x128] sm:$0xff]
        %v2696 = vld [vmem:[#allocation3 + $0x130] sm:$0xff]
        %v2697 = vld [vmem:[#allocation3 + $0x138] sm:$0xff]
        %v2698 = vld [vmem:[#allocation3 + $0x140] sm:$0xff]
        %v2699 = vld [vmem:[#allocation3 + $0x148] sm:$0xff]
        %v2700 = vld [vmem:[#allocation3 + $0x150] sm:$0xff]
        %v2701 = vld [vmem:[#allocation3 + $0x158] sm:$0xff]
        %v2702 = vld [vmem:[#allocation3 + $0x160] sm:$0xff]
        %v2703 = vld [vmem:[#allocation3 + $0x168] sm:$0xff]
        %v2704 = vld [vmem:[#allocation3 + $0x170] sm:$0xff]
        %v2705 = vld [vmem:[#allocation3 + $0x178] sm:$0xff]
        %v2706 = vpack.c.bf16 %v2659, %v2658
        %v2707 = vpack.c.bf16 %v2661, %v2660
        %v2708 = vpack.c.bf16 %v2663, %v2662
        %v2709 = vpack.c.bf16 %v2665, %v2664
        %v2710 = vpack.c.bf16 %v2667, %v2666
        %v2711 = vpack.c.bf16 %v2669, %v2668
        %v2712 = vpack.c.bf16 %v2671, %v2670
        %v2713 = vpack.c.bf16 %v2673, %v2672
        %v2714 = vpack.c.bf16 %v2675, %v2674
        %v2715 = vpack.c.bf16 %v2677, %v2676
        %v2716 = vpack.c.bf16 %v2679, %v2678
        %v2717 = vpack.c.bf16 %v2681, %v2680
        %v2718 = vpack.c.bf16 %v2683, %v2682
        %v2719 = vpack.c.bf16 %v2685, %v2684
        %v2720 = vpack.c.bf16 %v2687, %v2686
        %v2721 = vpack.c.bf16 %v2689, %v2688
        %v2722 = vpack.c.bf16 %v2691, %v2690
        %v2723 = vpack.c.bf16 %v2693, %v2692
        %v2724 = vpack.c.bf16 %v2695, %v2694
        %v2725 = vpack.c.bf16 %v2697, %v2696
        %v2726 = vpack.c.bf16 %v2699, %v2698
        %v2727 = vpack.c.bf16 %v2701, %v2700
        %v2728 = vpack.c.bf16 %v2703, %v2702
        %v2729 = vpack.c.bf16 %v2705, %v2704
        %v2730 = vld [vmem:[#allocation9] sm:$0xff]
        %v2731 = vld [vmem:[#allocation9 + $0x8] sm:$0xf]
        %v2732 = vld [vmem:[#allocation9 + $0xc] sm:$0xff]
        %v2733 = vld [vmem:[#allocation9 + $0x14] sm:$0xf]
        %v2734 = vld [vmem:[#allocation9 + $0x18] sm:$0xff]
        %v2735 = vld [vmem:[#allocation9 + $0x20] sm:$0xf]
        %v2736 = vld [vmem:[#allocation9 + $0x24] sm:$0xff]
        %v2737 = vld [vmem:[#allocation9 + $0x2c] sm:$0xf]
        %v2738 = vld [vmem:[#allocation9 + $0x30] sm:$0xff]
        %v2739 = vld [vmem:[#allocation9 + $0x38] sm:$0xf]
        %v2740 = vld [vmem:[#allocation9 + $0x3c] sm:$0xff]
        %v2741 = vld [vmem:[#allocation9 + $0x44] sm:$0xf]
        %v2742 = vld [vmem:[#allocation9 + $0x48] sm:$0xff]
        %v2743 = vld [vmem:[#allocation9 + $0x50] sm:$0xf]
        %v2744 = vld [vmem:[#allocation9 + $0x54] sm:$0xff]
        %v2745 = vld [vmem:[#allocation9 + $0x5c] sm:$0xf]
        %v2746 = vld [vmem:[#allocation9 + $0x60] sm:$0xff]
        %v2747 = vld [vmem:[#allocation9 + $0x68] sm:$0xf]
        %v2748 = vld [vmem:[#allocation9 + $0x6c] sm:$0xff]
        %v2749 = vld [vmem:[#allocation9 + $0x74] sm:$0xf]
        %v2750 = vld [vmem:[#allocation9 + $0x78] sm:$0xff]
        %v2751 = vld [vmem:[#allocation9 + $0x80] sm:$0xf]
        %v2752 = vld [vmem:[#allocation9 + $0x84] sm:$0xff]
        %v2753 = vld [vmem:[#allocation9 + $0x8c] sm:$0xf]
        %v2754 = vld [vmem:[#allocation9 + $0x90] sm:$0xff]
        %v2755 = vld [vmem:[#allocation9 + $0x98] sm:$0xf]
        %v2756 = vld [vmem:[#allocation9 + $0x9c] sm:$0xff]
        %v2757 = vld [vmem:[#allocation9 + $0xa4] sm:$0xf]
        %v2758 = vld [vmem:[#allocation9 + $0xa8] sm:$0xff]
        %v2759 = vld [vmem:[#allocation9 + $0xb0] sm:$0xf]
        %v2760 = vld [vmem:[#allocation9 + $0xb4] sm:$0xff]
        %v2761 = vld [vmem:[#allocation9 + $0xbc] sm:$0xf]
        %v2762 = vld [vmem:[%s309] sm:$0xff]
        %v2763 = vld [vmem:[%s309 + $0x8] sm:$0xff]
        %v2764 = vld [vmem:[%s309 + $0x10] sm:$0xff]
        %v2765 = vld [vmem:[%s309 + $0x18] sm:$0xff]
        %v2766 = vld [vmem:[%s309 + $0x20] sm:$0xff]
        %v2767 = vld [vmem:[%s309 + $0x28] sm:$0xff]
        %v2768 = vld [vmem:[%s309 + $0x30] sm:$0xff]
        %v2769 = vld [vmem:[%s309 + $0x38] sm:$0xff]
        %v2770 = vld [vmem:[%s309 + $0x40] sm:$0xff]
        %v2771 = vld [vmem:[%s309 + $0x48] sm:$0xff]
        %v2772 = vld [vmem:[%s309 + $0x50] sm:$0xff]
        %v2773 = vld [vmem:[%s309 + $0x58] sm:$0xff]
        %v2774 = vld [vmem:[%s309 + $0x60] sm:$0xff]
        %v2775 = vld [vmem:[%s309 + $0x68] sm:$0xff]
        %v2776 = vld [vmem:[%s309 + $0x70] sm:$0xff]
        %v2777 = vld [vmem:[%s309 + $0x78] sm:$0xff]
        %v2778 = vld [vmem:[%s309 + $0x80] sm:$0xff]
        %v2779 = vld [vmem:[%s309 + $0x88] sm:$0xff]
        %v2780 = vld [vmem:[%s309 + $0x90] sm:$0xff]
        %v2781 = vld [vmem:[%s309 + $0x98] sm:$0xff]
        %v2782 = vld [vmem:[%s309 + $0xa0] sm:$0xff]
        %v2783 = vld [vmem:[%s309 + $0xa8] sm:$0xff]
        %v2784 = vld [vmem:[%s309 + $0xb0] sm:$0xff]
        %v2785 = vld [vmem:[%s309 + $0xb8] sm:$0xff]
        %v2786 = vld [vmem:[%s309 + $0xc0] sm:$0xff]
        %v2787 = vld [vmem:[%s309 + $0xc8] sm:$0xff]
        %v2788 = vld [vmem:[%s309 + $0xd0] sm:$0xff]
        %v2789 = vld [vmem:[%s309 + $0xd8] sm:$0xff]
        %v2790 = vld [vmem:[%s309 + $0xe0] sm:$0xff]
        %v2791 = vld [vmem:[%s309 + $0xe8] sm:$0xff]
        %v2792 = vld [vmem:[%s309 + $0xf0] sm:$0xff]
        %v2793 = vld [vmem:[%s309 + $0xf8] sm:$0xff]
        %v2794 = vld [vmem:[%s309 + $0x100] sm:$0xff]
        %v2795 = vld [vmem:[%s309 + $0x108] sm:$0xff]
        %v2796 = vld [vmem:[%s309 + $0x110] sm:$0xff]
        %v2797 = vld [vmem:[%s309 + $0x118] sm:$0xff]
        %v2798 = vld [vmem:[%s309 + $0x120] sm:$0xff]
        %v2799 = vld [vmem:[%s309 + $0x128] sm:$0xff]
        %v2800 = vld [vmem:[%s309 + $0x130] sm:$0xff]
        %v2801 = vld [vmem:[%s309 + $0x138] sm:$0xff]
        %v2802 = vld [vmem:[%s309 + $0x140] sm:$0xff]
        %v2803 = vld [vmem:[%s309 + $0x148] sm:$0xff]
        %v2804 = vld [vmem:[%s309 + $0x150] sm:$0xff]
        %v2805 = vld [vmem:[%s309 + $0x158] sm:$0xff]
        %v2806 = vld [vmem:[%s309 + $0x160] sm:$0xff]
        %v2807 = vld [vmem:[%s309 + $0x168] sm:$0xff]
        %v2808 = vld [vmem:[%s309 + $0x170] sm:$0xff]
        %v2809 = vld [vmem:[%s309 + $0x178] sm:$0xff]
        %v2810 = vpack.c.bf16 %v2763, %v2762
        %v2811 = vpack.c.bf16 %v2765, %v2764
        %v2812 = vpack.c.bf16 %v2767, %v2766
        %v2813 = vpack.c.bf16 %v2769, %v2768
        %v2814 = vpack.c.bf16 %v2771, %v2770
        %v2815 = vpack.c.bf16 %v2773, %v2772
        %v2816 = vpack.c.bf16 %v2775, %v2774
        %v2817 = vpack.c.bf16 %v2777, %v2776
        %v2818 = vpack.c.bf16 %v2779, %v2778
        %v2819 = vpack.c.bf16 %v2781, %v2780
        %v2820 = vpack.c.bf16 %v2783, %v2782
        %v2821 = vpack.c.bf16 %v2785, %v2784
        %v2822 = vpack.c.bf16 %v2787, %v2786
        %v2823 = vpack.c.bf16 %v2789, %v2788
        %v2824 = vpack.c.bf16 %v2791, %v2790
        %v2825 = vpack.c.bf16 %v2793, %v2792
        %v2826 = vpack.c.bf16 %v2795, %v2794
        %v2827 = vpack.c.bf16 %v2797, %v2796
        %v2828 = vpack.c.bf16 %v2799, %v2798
        %v2829 = vpack.c.bf16 %v2801, %v2800
        %v2830 = vpack.c.bf16 %v2803, %v2802
        %v2831 = vpack.c.bf16 %v2805, %v2804
        %v2832 = vpack.c.bf16 %v2807, %v2806
        %v2833 = vpack.c.bf16 %v2809, %v2808
        %s2834 = scalar_lea.vmem [#allocation9], 192
        %v2835 = vld [vmem:[%s2834] sm:$0xff]
        %v2836 = vld [vmem:[%s2834 + $0x8] sm:$0xf]
        %v2837 = vld [vmem:[%s2834 + $0xc] sm:$0xff]
        %v2838 = vld [vmem:[%s2834 + $0x14] sm:$0xf]
        %v2839 = vld [vmem:[%s2834 + $0x18] sm:$0xff]
        %v2840 = vld [vmem:[%s2834 + $0x20] sm:$0xf]
        %v2841 = vld [vmem:[%s2834 + $0x24] sm:$0xff]
        %v2842 = vld [vmem:[%s2834 + $0x2c] sm:$0xf]
        %v2843 = vld [vmem:[%s2834 + $0x30] sm:$0xff]
        %v2844 = vld [vmem:[%s2834 + $0x38] sm:$0xf]
        %v2845 = vld [vmem:[%s2834 + $0x3c] sm:$0xff]
        %v2846 = vld [vmem:[%s2834 + $0x44] sm:$0xf]
        %v2847 = vld [vmem:[%s2834 + $0x48] sm:$0xff]
        %v2848 = vld [vmem:[%s2834 + $0x50] sm:$0xf]
        %v2849 = vld [vmem:[%s2834 + $0x54] sm:$0xff]
        %v2850 = vld [vmem:[%s2834 + $0x5c] sm:$0xf]
        %v2851 = vld [vmem:[%s2834 + $0x60] sm:$0xff]
        %v2852 = vld [vmem:[%s2834 + $0x68] sm:$0xf]
        %v2853 = vld [vmem:[%s2834 + $0x6c] sm:$0xff]
        %v2854 = vld [vmem:[%s2834 + $0x74] sm:$0xf]
        %v2855 = vld [vmem:[%s2834 + $0x78] sm:$0xff]
        %v2856 = vld [vmem:[%s2834 + $0x80] sm:$0xf]
        %v2857 = vld [vmem:[%s2834 + $0x84] sm:$0xff]
        %v2858 = vld [vmem:[%s2834 + $0x8c] sm:$0xf]
        %v2859 = vld [vmem:[%s2834 + $0x90] sm:$0xff]
        %v2860 = vld [vmem:[%s2834 + $0x98] sm:$0xf]
        %v2861 = vld [vmem:[%s2834 + $0x9c] sm:$0xff]
        %v2862 = vld [vmem:[%s2834 + $0xa4] sm:$0xf]
        %v2863 = vld [vmem:[%s2834 + $0xa8] sm:$0xff]
        %v2864 = vld [vmem:[%s2834 + $0xb0] sm:$0xf]
        %v2865 = vld [vmem:[%s2834 + $0xb4] sm:$0xff]
        %v2866 = vld [vmem:[%s2834 + $0xbc] sm:$0xf]
        %v2899 = vunpack.c.l.b16 %v2835
        %v2900 = vunpack.c.h.b16 %v2835
        %v2901 = vunpack.c.l.b16 %v2836
        %v2902 = vunpack.c.l.b16 %v2837
        %v2903 = vunpack.c.h.b16 %v2837
        %v2904 = vunpack.c.l.b16 %v2838
        %v2905 = vunpack.c.l.b16 %v2839
        %v2906 = vunpack.c.h.b16 %v2839
        %v2907 = vunpack.c.l.b16 %v2840
        %v2908 = vunpack.c.l.b16 %v2841
        %v2909 = vunpack.c.h.b16 %v2841
        %v2910 = vunpack.c.l.b16 %v2842
        %v2911 = vunpack.c.l.b16 %v2843
        %v2912 = vunpack.c.h.b16 %v2843
        %v2913 = vunpack.c.l.b16 %v2844
        %v2914 = vunpack.c.l.b16 %v2845
        %v2915 = vunpack.c.h.b16 %v2845
        %v2916 = vunpack.c.l.b16 %v2846
        %v2917 = vunpack.c.l.b16 %v2847
        %v2918 = vunpack.c.h.b16 %v2847
        %v2919 = vunpack.c.l.b16 %v2848
        %v2920 = vunpack.c.l.b16 %v2849
        %v2921 = vunpack.c.h.b16 %v2849
        %v2922 = vunpack.c.l.b16 %v2850
        %v2923 = vunpack.c.l.b16 %v2851
        %v2924 = vunpack.c.h.b16 %v2851
        %v2925 = vunpack.c.l.b16 %v2852
        %v2926 = vunpack.c.l.b16 %v2853
        %v2927 = vunpack.c.h.b16 %v2853
        %v2928 = vunpack.c.l.b16 %v2854
        %v2929 = vunpack.c.l.b16 %v2855
        %v2930 = vunpack.c.h.b16 %v2855
        %v2931 = vunpack.c.l.b16 %v2856
        %v2932 = vunpack.c.l.b16 %v2857
        %v2933 = vunpack.c.h.b16 %v2857
        %v2934 = vunpack.c.l.b16 %v2858
        %v2935 = vunpack.c.l.b16 %v2859
        %v2936 = vunpack.c.h.b16 %v2859
        %v2937 = vunpack.c.l.b16 %v2860
        %v2938 = vunpack.c.l.b16 %v2861
        %v2939 = vunpack.c.h.b16 %v2861
        %v2940 = vunpack.c.l.b16 %v2862
        %v2941 = vunpack.c.l.b16 %v2863
        %v2942 = vunpack.c.h.b16 %v2863
        %v2943 = vunpack.c.l.b16 %v2864
        %v2944 = vunpack.c.l.b16 %v2865
        %v2945 = vunpack.c.h.b16 %v2865
        %v2946 = vunpack.c.l.b16 %v2866
        %v2947 = vpack.c.b16 %v2902, %v2899
        %v2948 = vpack.c.b16 %v2903, %v2900
        %v2949 = vpack.c.b16 %v2904, %v2901
        %v2950 = vpack.c.b16 %v2908, %v2905
        %v2951 = vpack.c.b16 %v2909, %v2906
        %v2952 = vpack.c.b16 %v2910, %v2907
        %v2953 = vpack.c.b16 %v2914, %v2911
        %v2954 = vpack.c.b16 %v2915, %v2912
        %v2955 = vpack.c.b16 %v2916, %v2913
        %v2956 = vpack.c.b16 %v2920, %v2917
        %v2957 = vpack.c.b16 %v2921, %v2918
        %v2958 = vpack.c.b16 %v2922, %v2919
        %v2959 = vpack.c.b16 %v2926, %v2923
        %v2960 = vpack.c.b16 %v2927, %v2924
        %v2961 = vpack.c.b16 %v2928, %v2925
        %v2962 = vpack.c.b16 %v2932, %v2929
        %v2963 = vpack.c.b16 %v2933, %v2930
        %v2964 = vpack.c.b16 %v2934, %v2931
        %v2965 = vpack.c.b16 %v2938, %v2935
        %v2966 = vpack.c.b16 %v2939, %v2936
        %v2967 = vpack.c.b16 %v2940, %v2937
        %v2968 = vpack.c.b16 %v2944, %v2941
        %v2969 = vpack.c.b16 %v2945, %v2942
        %v2970 = vpack.c.b16 %v2946, %v2943
        %2995 = vmatpush.bf16.msra.mxu0 %v2968
        %2996 = vmatpush.bf16.msra.mxu0 %v2965
        %2997 = vmatpush.bf16.msra.mxu0 %v2962
        %2998 = vmatpush.bf16.msra.mxu0 %v2959
        %2999 = vmatpush.bf16.msra.mxu0 %v2956
        %3000 = vmatpush.bf16.msra.mxu0 %v2953
        %3001 = vmatpush.bf16.msra.mxu0 %v2950
        %3002 = vmatpush.bf16.msra.mxu0 %v2947
        %3003 = vmatmul.bf16.gmra.mxu0 %v2810
        %v3004 = vpop.f32.mrf.mxu0
        %v3005 = vadd.f32 0.0, %v3004
        %v3006 = vpop.f32.mrf.mxu0
        %v3007 = vadd.f32 0.0, %v3006
        %3008 = vmatmul.bf16.gmra.mxu0 %v2811
        %v3009 = vpop.f32.mrf.mxu0
        %v3010 = vadd.f32 0.0, %v3009
        %v3011 = vpop.f32.mrf.mxu0
        %v3012 = vadd.f32 0.0, %v3011
        %3013 = vmatmul.bf16.gmra.mxu0 %v2812
        %v3014 = vpop.f32.mrf.mxu0
        %v3015 = vadd.f32 0.0, %v3014
        %v3016 = vpop.f32.mrf.mxu0
        %v3017 = vadd.f32 0.0, %v3016
        %3018 = vmatmul.bf16.gmra.mxu0 %v2813
        %v3019 = vpop.f32.mrf.mxu0
        %v3020 = vadd.f32 0.0, %v3019
        %v3021 = vpop.f32.mrf.mxu0
        %v3022 = vadd.f32 0.0, %v3021
        %3023 = vmatmul.bf16.gmra.mxu0 %v2814
        %v3024 = vpop.f32.mrf.mxu0
        %v3025 = vadd.f32 0.0, %v3024
        %v3026 = vpop.f32.mrf.mxu0
        %v3027 = vadd.f32 0.0, %v3026
        %3028 = vmatmul.bf16.gmra.mxu0 %v2815
        %v3029 = vpop.f32.mrf.mxu0
        %v3030 = vadd.f32 0.0, %v3029
        %v3031 = vpop.f32.mrf.mxu0
        %v3032 = vadd.f32 0.0, %v3031
        %3033 = vmatmul.bf16.gmra.mxu0 %v2816
        %v3034 = vpop.f32.mrf.mxu0
        %v3035 = vadd.f32 0.0, %v3034
        %v3036 = vpop.f32.mrf.mxu0
        %v3037 = vadd.f32 0.0, %v3036
        %3038 = vmatmul.bf16.gmra.mxu0 %v2817
        %v3039 = vpop.f32.mrf.mxu0
        %v3040 = vadd.f32 0.0, %v3039
        %v3041 = vpop.f32.mrf.mxu0
        %v3042 = vadd.f32 0.0, %v3041
        %3043 = vmatmul.bf16.gmra.mxu0 %v2818
        %v3044 = vpop.f32.mrf.mxu0
        %v3045 = vadd.f32 0.0, %v3044
        %v3046 = vpop.f32.mrf.mxu0
        %v3047 = vadd.f32 0.0, %v3046
        %3048 = vmatmul.bf16.gmra.mxu0 %v2819
        %v3049 = vpop.f32.mrf.mxu0
        %v3050 = vadd.f32 0.0, %v3049
        %v3051 = vpop.f32.mrf.mxu0
        %v3052 = vadd.f32 0.0, %v3051
        %3053 = vmatmul.bf16.gmra.mxu0 %v2820
        %v3054 = vpop.f32.mrf.mxu0
        %v3055 = vadd.f32 0.0, %v3054
        %v3056 = vpop.f32.mrf.mxu0
        %v3057 = vadd.f32 0.0, %v3056
        %3058 = vmatmul.bf16.gmra.mxu0 %v2821
        %v3059 = vpop.f32.mrf.mxu0
        %v3060 = vadd.f32 0.0, %v3059
        %v3061 = vpop.f32.mrf.mxu0
        %v3062 = vadd.f32 0.0, %v3061
        %3063 = vmatmul.bf16.gmra.mxu0 %v2822
        %v3064 = vpop.f32.mrf.mxu0
        %v3065 = vadd.f32 0.0, %v3064
        %v3066 = vpop.f32.mrf.mxu0
        %v3067 = vadd.f32 0.0, %v3066
        %3068 = vmatmul.bf16.gmra.mxu0 %v2823
        %v3069 = vpop.f32.mrf.mxu0
        %v3070 = vadd.f32 0.0, %v3069
        %v3071 = vpop.f32.mrf.mxu0
        %v3072 = vadd.f32 0.0, %v3071
        %3073 = vmatmul.bf16.gmra.mxu0 %v2824
        %v3074 = vpop.f32.mrf.mxu0
        %v3075 = vadd.f32 0.0, %v3074
        %v3076 = vpop.f32.mrf.mxu0
        %v3077 = vadd.f32 0.0, %v3076
        %3078 = vmatmul.bf16.gmra.mxu0 %v2825
        %v3079 = vpop.f32.mrf.mxu0
        %v3080 = vadd.f32 0.0, %v3079
        %v3081 = vpop.f32.mrf.mxu0
        %v3082 = vadd.f32 0.0, %v3081
        %3083 = vmatmul.bf16.gmra.mxu0 %v2826
        %v3084 = vpop.f32.mrf.mxu0
        %v3085 = vadd.f32 0.0, %v3084
        %v3086 = vpop.f32.mrf.mxu0
        %v3087 = vadd.f32 0.0, %v3086
        %3088 = vmatmul.bf16.gmra.mxu0 %v2827
        %v3089 = vpop.f32.mrf.mxu0
        %v3090 = vadd.f32 0.0, %v3089
        %v3091 = vpop.f32.mrf.mxu0
        %v3092 = vadd.f32 0.0, %v3091
        %3093 = vmatmul.bf16.gmra.mxu0 %v2828
        %v3094 = vpop.f32.mrf.mxu0
        %v3095 = vadd.f32 0.0, %v3094
        %v3096 = vpop.f32.mrf.mxu0
        %v3097 = vadd.f32 0.0, %v3096
        %3098 = vmatmul.bf16.gmra.mxu0 %v2829
        %v3099 = vpop.f32.mrf.mxu0
        %v3100 = vadd.f32 0.0, %v3099
        %v3101 = vpop.f32.mrf.mxu0
        %v3102 = vadd.f32 0.0, %v3101
        %3103 = vmatmul.bf16.gmra.mxu0 %v2830
        %v3104 = vpop.f32.mrf.mxu0
        %v3105 = vadd.f32 0.0, %v3104
        %v3106 = vpop.f32.mrf.mxu0
        %v3107 = vadd.f32 0.0, %v3106
        %3108 = vmatmul.bf16.gmra.mxu0 %v2831
        %v3109 = vpop.f32.mrf.mxu0
        %v3110 = vadd.f32 0.0, %v3109
        %v3111 = vpop.f32.mrf.mxu0
        %v3112 = vadd.f32 0.0, %v3111
        %3113 = vmatmul.bf16.gmra.mxu0 %v2832
        %v3114 = vpop.f32.mrf.mxu0
        %v3115 = vadd.f32 0.0, %v3114
        %v3116 = vpop.f32.mrf.mxu0
        %v3117 = vadd.f32 0.0, %v3116
        %3118 = vmatmul.bf16.gmra.mxu0 %v2833
        %v3119 = vpop.f32.mrf.mxu0
        %v3120 = vadd.f32 0.0, %v3119
        %v3121 = vpop.f32.mrf.mxu0
        %v3122 = vadd.f32 0.0, %v3121
        %3123 = vdwg.mxu0
        %3124 = vmatpush.bf16.msra.mxu0 %v2969
        %3125 = vmatpush.bf16.msra.mxu0 %v2966
        %3126 = vmatpush.bf16.msra.mxu0 %v2963
        %3127 = vmatpush.bf16.msra.mxu0 %v2960
        %3128 = vmatpush.bf16.msra.mxu0 %v2957
        %3129 = vmatpush.bf16.msra.mxu0 %v2954
        %3130 = vmatpush.bf16.msra.mxu0 %v2951
        %3131 = vmatpush.bf16.msra.mxu0 %v2948
        %3132 = vmatmul.bf16.gmra.mxu0 %v2810
        %v3133 = vpop.f32.mrf.mxu0
        %v3134 = vadd.f32 0.0, %v3133
        %v3135 = vpop.f32.mrf.mxu0
        %v3136 = vadd.f32 0.0, %v3135
        %3137 = vmatmul.bf16.gmra.mxu0 %v2811
        %v3138 = vpop.f32.mrf.mxu0
        %v3139 = vpop.f32.mrf.mxu0
        %v3140 = vadd.f32 0.0, %v3139
        %3141 = vmatmul.bf16.gmra.mxu0 %v2812
        %v3142 = vpop.f32.mrf.mxu0
        %v3143 = vadd.f32 0.0, %v3142
        %v3144 = vpop.f32.mrf.mxu0
        %3145 = vmatmul.bf16.gmra.mxu0 %v2813
        %v3146 = vpop.f32.mrf.mxu0
        %v3147 = vadd.f32 0.0, %v3146
        %v3148 = vpop.f32.mrf.mxu0
        %v3149 = vadd.f32 0.0, %v3148
        %3150 = vmatmul.bf16.gmra.mxu0 %v2814
        %v3151 = vpop.f32.mrf.mxu0
        %v3152 = vpop.f32.mrf.mxu0
        %v3153 = vadd.f32 0.0, %v3152
        %3154 = vmatmul.bf16.gmra.mxu0 %v2815
        %v3155 = vpop.f32.mrf.mxu0
        %v3156 = vadd.f32 0.0, %v3155
        %v3157 = vpop.f32.mrf.mxu0
        %3158 = vmatmul.bf16.gmra.mxu0 %v2816
        %v3159 = vpop.f32.mrf.mxu0
        %v3160 = vadd.f32 0.0, %v3159
        %v3161 = vpop.f32.mrf.mxu0
        %v3162 = vadd.f32 0.0, %v3161
        %3163 = vmatmul.bf16.gmra.mxu0 %v2817
        %v3164 = vpop.f32.mrf.mxu0
        %v3165 = vpop.f32.mrf.mxu0
        %v3166 = vadd.f32 0.0, %v3165
        %3167 = vmatmul.bf16.gmra.mxu0 %v2818
        %v3168 = vpop.f32.mrf.mxu0
        %v3169 = vadd.f32 0.0, %v3168
        %v3170 = vpop.f32.mrf.mxu0
        %3171 = vmatmul.bf16.gmra.mxu0 %v2819
        %v3172 = vpop.f32.mrf.mxu0
        %v3173 = vadd.f32 0.0, %v3172
        %v3174 = vpop.f32.mrf.mxu0
        %v3175 = vadd.f32 0.0, %v3174
        %3176 = vmatmul.bf16.gmra.mxu0 %v2820
        %v3177 = vpop.f32.mrf.mxu0
        %v3178 = vpop.f32.mrf.mxu0
        %v3179 = vadd.f32 0.0, %v3178
        %3180 = vmatmul.bf16.gmra.mxu0 %v2821
        %v3181 = vpop.f32.mrf.mxu0
        %v3182 = vadd.f32 0.0, %v3181
        %v3183 = vpop.f32.mrf.mxu0
        %3184 = vmatmul.bf16.gmra.mxu0 %v2822
        %v3185 = vpop.f32.mrf.mxu0
        %v3186 = vadd.f32 0.0, %v3185
        %v3187 = vpop.f32.mrf.mxu0
        %v3188 = vadd.f32 0.0, %v3187
        %3189 = vmatmul.bf16.gmra.mxu0 %v2823
        %v3190 = vpop.f32.mrf.mxu0
        %v3191 = vpop.f32.mrf.mxu0
        %v3192 = vadd.f32 0.0, %v3191
        %3193 = vmatmul.bf16.gmra.mxu0 %v2824
        %v3194 = vpop.f32.mrf.mxu0
        %v3195 = vadd.f32 0.0, %v3194
        %v3196 = vpop.f32.mrf.mxu0
        %3197 = vmatmul.bf16.gmra.mxu0 %v2825
        %v3198 = vpop.f32.mrf.mxu0
        %v3199 = vadd.f32 0.0, %v3198
        %v3200 = vpop.f32.mrf.mxu0
        %v3201 = vadd.f32 0.0, %v3200
        %3202 = vmatmul.bf16.gmra.mxu0 %v2826
        %v3203 = vpop.f32.mrf.mxu0
        %v3204 = vpop.f32.mrf.mxu0
        %v3205 = vadd.f32 0.0, %v3204
        %3206 = vmatmul.bf16.gmra.mxu0 %v2827
        %v3207 = vpop.f32.mrf.mxu0
        %v3208 = vadd.f32 0.0, %v3207
        %v3209 = vpop.f32.mrf.mxu0
        %3210 = vmatmul.bf16.gmra.mxu0 %v2828
        %v3211 = vpop.f32.mrf.mxu0
        %v3212 = vadd.f32 0.0, %v3211
        %v3213 = vpop.f32.mrf.mxu0
        %v3214 = vadd.f32 0.0, %v3213
        %3215 = vmatmul.bf16.gmra.mxu0 %v2829
        %v3216 = vpop.f32.mrf.mxu0
        %v3217 = vpop.f32.mrf.mxu0
        %v3218 = vadd.f32 0.0, %v3217
        %3219 = vmatmul.bf16.gmra.mxu0 %v2830
        %v3220 = vpop.f32.mrf.mxu0
        %v3221 = vadd.f32 0.0, %v3220
        %v3222 = vpop.f32.mrf.mxu0
        %3223 = vmatmul.bf16.gmra.mxu0 %v2831
        %v3224 = vpop.f32.mrf.mxu0
        %v3225 = vadd.f32 0.0, %v3224
        %v3226 = vpop.f32.mrf.mxu0
        %v3227 = vadd.f32 0.0, %v3226
        %3228 = vmatmul.bf16.gmra.mxu0 %v2832
        %v3229 = vpop.f32.mrf.mxu0
        %v3230 = vpop.f32.mrf.mxu0
        %v3231 = vadd.f32 0.0, %v3230
        %3232 = vmatmul.bf16.gmra.mxu0 %v2833
        %v3233 = vpop.f32.mrf.mxu0
        %v3234 = vadd.f32 0.0, %v3233
        %v3235 = vpop.f32.mrf.mxu0
        %3236 = vdwg.mxu0
        %3237 = vmatpush.bf16.msra.mxu0 %v2970
        %3238 = vmatpush.bf16.msra.mxu0 %v2967
        %3239 = vmatpush.bf16.msra.mxu0 %v2964
        %3240 = vmatpush.bf16.msra.mxu0 %v2961
        %3241 = vmatpush.bf16.msra.mxu0 %v2958
        %3242 = vmatpush.bf16.msra.mxu0 %v2955
        %3243 = vmatpush.bf16.msra.mxu0 %v2952
        %3244 = vmatpush.bf16.msra.mxu0 %v2949
        %3245 = vmatmul.bf16.gmra.mxu0 %v2810
        %v3246 = vpop.f32.mrf.mxu0
        %v3247 = vadd.f32 0.0, %v3246
        %v3248 = vpop.f32.mrf.mxu0
        %v3249 = vadd.f32 0.0, %v3248
        %3250 = vmatmul.bf16.gmra.mxu0 %v2811
        %v3251 = vpop.f32.mrf.mxu0
        %v3252 = vadd.f32 0.0, %v3251
        %v3253 = vpop.f32.mrf.mxu0
        %v3254 = vadd.f32 0.0, %v3253
        %3255 = vmatmul.bf16.gmra.mxu0 %v2812
        %v3256 = vpop.f32.mrf.mxu0
        %v3257 = vadd.f32 0.0, %v3256
        %v3258 = vpop.f32.mrf.mxu0
        %v3259 = vadd.f32 0.0, %v3258
        %3260 = vmatmul.bf16.gmra.mxu0 %v2813
        %v3261 = vpop.f32.mrf.mxu0
        %v3262 = vadd.f32 0.0, %v3261
        %v3263 = vpop.f32.mrf.mxu0
        %v3264 = vadd.f32 0.0, %v3263
        %3265 = vmatmul.bf16.gmra.mxu0 %v2814
        %v3266 = vpop.f32.mrf.mxu0
        %v3267 = vadd.f32 0.0, %v3266
        %v3268 = vpop.f32.mrf.mxu0
        %v3269 = vadd.f32 0.0, %v3268
        %3270 = vmatmul.bf16.gmra.mxu0 %v2815
        %v3271 = vpop.f32.mrf.mxu0
        %v3272 = vadd.f32 0.0, %v3271
        %v3273 = vpop.f32.mrf.mxu0
        %v3274 = vadd.f32 0.0, %v3273
        %3275 = vmatmul.bf16.gmra.mxu0 %v2816
        %v3276 = vpop.f32.mrf.mxu0
        %v3277 = vadd.f32 0.0, %v3276
        %v3278 = vpop.f32.mrf.mxu0
        %v3279 = vadd.f32 0.0, %v3278
        %3280 = vmatmul.bf16.gmra.mxu0 %v2817
        %v3281 = vpop.f32.mrf.mxu0
        %v3282 = vadd.f32 0.0, %v3281
        %v3283 = vpop.f32.mrf.mxu0
        %v3284 = vadd.f32 0.0, %v3283
        %3285 = vmatmul.bf16.gmra.mxu0 %v2818
        %v3286 = vpop.f32.mrf.mxu0
        %v3287 = vadd.f32 0.0, %v3286
        %v3288 = vpop.f32.mrf.mxu0
        %v3289 = vadd.f32 0.0, %v3288
        %3290 = vmatmul.bf16.gmra.mxu0 %v2819
        %v3291 = vpop.f32.mrf.mxu0
        %v3292 = vadd.f32 0.0, %v3291
        %v3293 = vpop.f32.mrf.mxu0
        %v3294 = vadd.f32 0.0, %v3293
        %3295 = vmatmul.bf16.gmra.mxu0 %v2820
        %v3296 = vpop.f32.mrf.mxu0
        %v3297 = vadd.f32 0.0, %v3296
        %v3298 = vpop.f32.mrf.mxu0
        %v3299 = vadd.f32 0.0, %v3298
        %3300 = vmatmul.bf16.gmra.mxu0 %v2821
        %v3301 = vpop.f32.mrf.mxu0
        %v3302 = vadd.f32 0.0, %v3301
        %v3303 = vpop.f32.mrf.mxu0
        %v3304 = vadd.f32 0.0, %v3303
        %3305 = vmatmul.bf16.gmra.mxu0 %v2822
        %v3306 = vpop.f32.mrf.mxu0
        %v3307 = vadd.f32 0.0, %v3306
        %v3308 = vpop.f32.mrf.mxu0
        %v3309 = vadd.f32 0.0, %v3308
        %3310 = vmatmul.bf16.gmra.mxu0 %v2823
        %v3311 = vpop.f32.mrf.mxu0
        %v3312 = vadd.f32 0.0, %v3311
        %v3313 = vpop.f32.mrf.mxu0
        %v3314 = vadd.f32 0.0, %v3313
        %3315 = vmatmul.bf16.gmra.mxu0 %v2824
        %v3316 = vpop.f32.mrf.mxu0
        %v3317 = vadd.f32 0.0, %v3316
        %v3318 = vpop.f32.mrf.mxu0
        %v3319 = vadd.f32 0.0, %v3318
        %3320 = vmatmul.bf16.gmra.mxu0 %v2825
        %v3321 = vpop.f32.mrf.mxu0
        %v3322 = vadd.f32 0.0, %v3321
        %v3323 = vpop.f32.mrf.mxu0
        %v3324 = vadd.f32 0.0, %v3323
        %3325 = vmatmul.bf16.gmra.mxu0 %v2826
        %v3326 = vpop.f32.mrf.mxu0
        %v3327 = vadd.f32 0.0, %v3326
        %v3328 = vpop.f32.mrf.mxu0
        %v3329 = vadd.f32 0.0, %v3328
        %3330 = vmatmul.bf16.gmra.mxu0 %v2827
        %v3331 = vpop.f32.mrf.mxu0
        %v3332 = vadd.f32 0.0, %v3331
        %v3333 = vpop.f32.mrf.mxu0
        %v3334 = vadd.f32 0.0, %v3333
        %3335 = vmatmul.bf16.gmra.mxu0 %v2828
        %v3336 = vpop.f32.mrf.mxu0
        %v3337 = vadd.f32 0.0, %v3336
        %v3338 = vpop.f32.mrf.mxu0
        %v3339 = vadd.f32 0.0, %v3338
        %3340 = vmatmul.bf16.gmra.mxu0 %v2829
        %v3341 = vpop.f32.mrf.mxu0
        %v3342 = vadd.f32 0.0, %v3341
        %v3343 = vpop.f32.mrf.mxu0
        %v3344 = vadd.f32 0.0, %v3343
        %3345 = vmatmul.bf16.gmra.mxu0 %v2830
        %v3346 = vpop.f32.mrf.mxu0
        %v3347 = vadd.f32 0.0, %v3346
        %v3348 = vpop.f32.mrf.mxu0
        %v3349 = vadd.f32 0.0, %v3348
        %3350 = vmatmul.bf16.gmra.mxu0 %v2831
        %v3351 = vpop.f32.mrf.mxu0
        %v3352 = vadd.f32 0.0, %v3351
        %v3353 = vpop.f32.mrf.mxu0
        %v3354 = vadd.f32 0.0, %v3353
        %3355 = vmatmul.bf16.gmra.mxu0 %v2832
        %v3356 = vpop.f32.mrf.mxu0
        %v3357 = vadd.f32 0.0, %v3356
        %v3358 = vpop.f32.mrf.mxu0
        %v3359 = vadd.f32 0.0, %v3358
        %3360 = vmatmul.bf16.gmra.mxu0 %v2833
        %v3361 = vpop.f32.mrf.mxu0
        %v3362 = vadd.f32 0.0, %v3361
        %v3363 = vpop.f32.mrf.mxu0
        %v3364 = vadd.f32 0.0, %v3363
        %3365 = vdwg.mxu0
        %v3398 = vunpack.c.l.b16 %v2730
        %v3399 = vunpack.c.h.b16 %v2730
        %v3400 = vunpack.c.l.b16 %v2731
        %v3401 = vunpack.c.l.b16 %v2732
        %v3402 = vunpack.c.h.b16 %v2732
        %v3403 = vunpack.c.l.b16 %v2733
        %v3404 = vunpack.c.l.b16 %v2734
        %v3405 = vunpack.c.h.b16 %v2734
        %v3406 = vunpack.c.l.b16 %v2735
        %v3407 = vunpack.c.l.b16 %v2736
        %v3408 = vunpack.c.h.b16 %v2736
        %v3409 = vunpack.c.l.b16 %v2737
        %v3410 = vunpack.c.l.b16 %v2738
        %v3411 = vunpack.c.h.b16 %v2738
        %v3412 = vunpack.c.l.b16 %v2739
        %v3413 = vunpack.c.l.b16 %v2740
        %v3414 = vunpack.c.h.b16 %v2740
        %v3415 = vunpack.c.l.b16 %v2741
        %v3416 = vunpack.c.l.b16 %v2742
        %v3417 = vunpack.c.h.b16 %v2742
        %v3418 = vunpack.c.l.b16 %v2743
        %v3419 = vunpack.c.l.b16 %v2744
        %v3420 = vunpack.c.h.b16 %v2744
        %v3421 = vunpack.c.l.b16 %v2745
        %v3422 = vunpack.c.l.b16 %v2746
        %v3423 = vunpack.c.h.b16 %v2746
        %v3424 = vunpack.c.l.b16 %v2747
        %v3425 = vunpack.c.l.b16 %v2748
        %v3426 = vunpack.c.h.b16 %v2748
        %v3427 = vunpack.c.l.b16 %v2749
        %v3428 = vunpack.c.l.b16 %v2750
        %v3429 = vunpack.c.h.b16 %v2750
        %v3430 = vunpack.c.l.b16 %v2751
        %v3431 = vunpack.c.l.b16 %v2752
        %v3432 = vunpack.c.h.b16 %v2752
        %v3433 = vunpack.c.l.b16 %v2753
        %v3434 = vunpack.c.l.b16 %v2754
        %v3435 = vunpack.c.h.b16 %v2754
        %v3436 = vunpack.c.l.b16 %v2755
        %v3437 = vunpack.c.l.b16 %v2756
        %v3438 = vunpack.c.h.b16 %v2756
        %v3439 = vunpack.c.l.b16 %v2757
        %v3440 = vunpack.c.l.b16 %v2758
        %v3441 = vunpack.c.h.b16 %v2758
        %v3442 = vunpack.c.l.b16 %v2759
        %v3443 = vunpack.c.l.b16 %v2760
        %v3444 = vunpack.c.h.b16 %v2760
        %v3445 = vunpack.c.l.b16 %v2761
        %v3446 = vpack.c.b16 %v3401, %v3398
        %v3447 = vpack.c.b16 %v3402, %v3399
        %v3448 = vpack.c.b16 %v3403, %v3400
        %v3449 = vpack.c.b16 %v3407, %v3404
        %v3450 = vpack.c.b16 %v3408, %v3405
        %v3451 = vpack.c.b16 %v3409, %v3406
        %v3452 = vpack.c.b16 %v3413, %v3410
        %v3453 = vpack.c.b16 %v3414, %v3411
        %v3454 = vpack.c.b16 %v3415, %v3412
        %v3455 = vpack.c.b16 %v3419, %v3416
        %v3456 = vpack.c.b16 %v3420, %v3417
        %v3457 = vpack.c.b16 %v3421, %v3418
        %v3458 = vpack.c.b16 %v3425, %v3422
        %v3459 = vpack.c.b16 %v3426, %v3423
        %v3460 = vpack.c.b16 %v3427, %v3424
        %v3461 = vpack.c.b16 %v3431, %v3428
        %v3462 = vpack.c.b16 %v3432, %v3429
        %v3463 = vpack.c.b16 %v3433, %v3430
        %v3464 = vpack.c.b16 %v3437, %v3434
        %v3465 = vpack.c.b16 %v3438, %v3435
        %v3466 = vpack.c.b16 %v3439, %v3436
        %v3467 = vpack.c.b16 %v3443, %v3440
        %v3468 = vpack.c.b16 %v3444, %v3441
        %v3469 = vpack.c.b16 %v3445, %v3442
        %3494 = vmatpush.bf16.msra.mxu0 %v3467
        %3495 = vmatpush.bf16.msra.mxu0 %v3464
        %3496 = vmatpush.bf16.msra.mxu0 %v3461
        %3497 = vmatpush.bf16.msra.mxu0 %v3458
        %3498 = vmatpush.bf16.msra.mxu0 %v3455
        %3499 = vmatpush.bf16.msra.mxu0 %v3452
        %3500 = vmatpush.bf16.msra.mxu0 %v3449
        %3501 = vmatpush.bf16.msra.mxu0 %v3446
        %3502 = vmatmul.bf16.gmra.mxu0 %v2706
        %v3503 = vpop.f32.mrf.mxu0
        %v3504 = vadd.f32 %v3005, %v3503
        %v3505 = vpop.f32.mrf.mxu0
        %v3506 = vadd.f32 %v3007, %v3505
        %3507 = vmatmul.bf16.gmra.mxu0 %v2707
        %v3508 = vpop.f32.mrf.mxu0
        %v3509 = vadd.f32 %v3010, %v3508
        %v3510 = vpop.f32.mrf.mxu0
        %v3511 = vadd.f32 %v3012, %v3510
        %3512 = vmatmul.bf16.gmra.mxu0 %v2708
        %v3513 = vpop.f32.mrf.mxu0
        %v3514 = vadd.f32 %v3015, %v3513
        %v3515 = vpop.f32.mrf.mxu0
        %v3516 = vadd.f32 %v3017, %v3515
        %3517 = vmatmul.bf16.gmra.mxu0 %v2709
        %v3518 = vpop.f32.mrf.mxu0
        %v3519 = vadd.f32 %v3020, %v3518
        %v3520 = vpop.f32.mrf.mxu0
        %v3521 = vadd.f32 %v3022, %v3520
        %3522 = vmatmul.bf16.gmra.mxu0 %v2710
        %v3523 = vpop.f32.mrf.mxu0
        %v3524 = vadd.f32 %v3025, %v3523
        %v3525 = vpop.f32.mrf.mxu0
        %v3526 = vadd.f32 %v3027, %v3525
        %3527 = vmatmul.bf16.gmra.mxu0 %v2711
        %v3528 = vpop.f32.mrf.mxu0
        %v3529 = vadd.f32 %v3030, %v3528
        %v3530 = vpop.f32.mrf.mxu0
        %v3531 = vadd.f32 %v3032, %v3530
        %3532 = vmatmul.bf16.gmra.mxu0 %v2712
        %v3533 = vpop.f32.mrf.mxu0
        %v3534 = vadd.f32 %v3035, %v3533
        %v3535 = vpop.f32.mrf.mxu0
        %v3536 = vadd.f32 %v3037, %v3535
        %3537 = vmatmul.bf16.gmra.mxu0 %v2713
        %v3538 = vpop.f32.mrf.mxu0
        %v3539 = vadd.f32 %v3040, %v3538
        %v3540 = vpop.f32.mrf.mxu0
        %v3541 = vadd.f32 %v3042, %v3540
        %3542 = vmatmul.bf16.gmra.mxu0 %v2714
        %v3543 = vpop.f32.mrf.mxu0
        %v3544 = vadd.f32 %v3045, %v3543
        %v3545 = vpop.f32.mrf.mxu0
        %v3546 = vadd.f32 %v3047, %v3545
        %3547 = vmatmul.bf16.gmra.mxu0 %v2715
        %v3548 = vpop.f32.mrf.mxu0
        %v3549 = vadd.f32 %v3050, %v3548
        %v3550 = vpop.f32.mrf.mxu0
        %v3551 = vadd.f32 %v3052, %v3550
        %3552 = vmatmul.bf16.gmra.mxu0 %v2716
        %v3553 = vpop.f32.mrf.mxu0
        %v3554 = vadd.f32 %v3055, %v3553
        %v3555 = vpop.f32.mrf.mxu0
        %v3556 = vadd.f32 %v3057, %v3555
        %3557 = vmatmul.bf16.gmra.mxu0 %v2717
        %v3558 = vpop.f32.mrf.mxu0
        %v3559 = vadd.f32 %v3060, %v3558
        %v3560 = vpop.f32.mrf.mxu0
        %v3561 = vadd.f32 %v3062, %v3560
        %3562 = vmatmul.bf16.gmra.mxu0 %v2718
        %v3563 = vpop.f32.mrf.mxu0
        %v3564 = vadd.f32 %v3065, %v3563
        %v3565 = vpop.f32.mrf.mxu0
        %v3566 = vadd.f32 %v3067, %v3565
        %3567 = vmatmul.bf16.gmra.mxu0 %v2719
        %v3568 = vpop.f32.mrf.mxu0
        %v3569 = vadd.f32 %v3070, %v3568
        %v3570 = vpop.f32.mrf.mxu0
        %v3571 = vadd.f32 %v3072, %v3570
        %3572 = vmatmul.bf16.gmra.mxu0 %v2720
        %v3573 = vpop.f32.mrf.mxu0
        %v3574 = vadd.f32 %v3075, %v3573
        %v3575 = vpop.f32.mrf.mxu0
        %v3576 = vadd.f32 %v3077, %v3575
        %3577 = vmatmul.bf16.gmra.mxu0 %v2721
        %v3578 = vpop.f32.mrf.mxu0
        %v3579 = vadd.f32 %v3080, %v3578
        %v3580 = vpop.f32.mrf.mxu0
        %v3581 = vadd.f32 %v3082, %v3580
        %3582 = vmatmul.bf16.gmra.mxu0 %v2722
        %v3583 = vpop.f32.mrf.mxu0
        %v3584 = vadd.f32 %v3085, %v3583
        %v3585 = vpop.f32.mrf.mxu0
        %v3586 = vadd.f32 %v3087, %v3585
        %3587 = vmatmul.bf16.gmra.mxu0 %v2723
        %v3588 = vpop.f32.mrf.mxu0
        %v3589 = vadd.f32 %v3090, %v3588
        %v3590 = vpop.f32.mrf.mxu0
        %v3591 = vadd.f32 %v3092, %v3590
        %3592 = vmatmul.bf16.gmra.mxu0 %v2724
        %v3593 = vpop.f32.mrf.mxu0
        %v3594 = vadd.f32 %v3095, %v3593
        %v3595 = vpop.f32.mrf.mxu0
        %v3596 = vadd.f32 %v3097, %v3595
        %3597 = vmatmul.bf16.gmra.mxu0 %v2725
        %v3598 = vpop.f32.mrf.mxu0
        %v3599 = vadd.f32 %v3100, %v3598
        %v3600 = vpop.f32.mrf.mxu0
        %v3601 = vadd.f32 %v3102, %v3600
        %3602 = vmatmul.bf16.gmra.mxu0 %v2726
        %v3603 = vpop.f32.mrf.mxu0
        %v3604 = vadd.f32 %v3105, %v3603
        %v3605 = vpop.f32.mrf.mxu0
        %v3606 = vadd.f32 %v3107, %v3605
        %3607 = vmatmul.bf16.gmra.mxu0 %v2727
        %v3608 = vpop.f32.mrf.mxu0
        %v3609 = vadd.f32 %v3110, %v3608
        %v3610 = vpop.f32.mrf.mxu0
        %v3611 = vadd.f32 %v3112, %v3610
        %3612 = vmatmul.bf16.gmra.mxu0 %v2728
        %v3613 = vpop.f32.mrf.mxu0
        %v3614 = vadd.f32 %v3115, %v3613
        %v3615 = vpop.f32.mrf.mxu0
        %v3616 = vadd.f32 %v3117, %v3615
        %3617 = vmatmul.bf16.gmra.mxu0 %v2729
        %v3618 = vpop.f32.mrf.mxu0
        %v3619 = vadd.f32 %v3120, %v3618
        %v3620 = vpop.f32.mrf.mxu0
        %v3621 = vadd.f32 %v3122, %v3620
        %3622 = vdwg.mxu0
        %3623 = vmatpush.bf16.msra.mxu0 %v3468
        %3624 = vmatpush.bf16.msra.mxu0 %v3465
        %3625 = vmatpush.bf16.msra.mxu0 %v3462
        %3626 = vmatpush.bf16.msra.mxu0 %v3459
        %3627 = vmatpush.bf16.msra.mxu0 %v3456
        %3628 = vmatpush.bf16.msra.mxu0 %v3453
        %3629 = vmatpush.bf16.msra.mxu0 %v3450
        %3630 = vmatpush.bf16.msra.mxu0 %v3447
        %3631 = vmatmul.bf16.gmra.mxu0 %v2706
        %v3632 = vpop.f32.mrf.mxu0
        %v3633 = vadd.f32 %v3134, %v3632
        %v3634 = vpop.f32.mrf.mxu0
        %v3635 = vadd.f32 %v3136, %v3634
        %3636 = vmatmul.bf16.gmra.mxu0 %v2707
        %v3637 = vpop.f32.mrf.mxu0
        %v3638 = vpop.f32.mrf.mxu0
        %v3639 = vadd.f32 %v3140, %v3638
        %3640 = vmatmul.bf16.gmra.mxu0 %v2708
        %v3641 = vpop.f32.mrf.mxu0
        %v3642 = vadd.f32 %v3143, %v3641
        %v3643 = vpop.f32.mrf.mxu0
        %3644 = vmatmul.bf16.gmra.mxu0 %v2709
        %v3645 = vpop.f32.mrf.mxu0
        %v3646 = vadd.f32 %v3147, %v3645
        %v3647 = vpop.f32.mrf.mxu0
        %v3648 = vadd.f32 %v3149, %v3647
        %3649 = vmatmul.bf16.gmra.mxu0 %v2710
        %v3650 = vpop.f32.mrf.mxu0
        %v3651 = vpop.f32.mrf.mxu0
        %v3652 = vadd.f32 %v3153, %v3651
        %3653 = vmatmul.bf16.gmra.mxu0 %v2711
        %v3654 = vpop.f32.mrf.mxu0
        %v3655 = vadd.f32 %v3156, %v3654
        %v3656 = vpop.f32.mrf.mxu0
        %3657 = vmatmul.bf16.gmra.mxu0 %v2712
        %v3658 = vpop.f32.mrf.mxu0
        %v3659 = vadd.f32 %v3160, %v3658
        %v3660 = vpop.f32.mrf.mxu0
        %v3661 = vadd.f32 %v3162, %v3660
        %3662 = vmatmul.bf16.gmra.mxu0 %v2713
        %v3663 = vpop.f32.mrf.mxu0
        %v3664 = vpop.f32.mrf.mxu0
        %v3665 = vadd.f32 %v3166, %v3664
        %3666 = vmatmul.bf16.gmra.mxu0 %v2714
        %v3667 = vpop.f32.mrf.mxu0
        %v3668 = vadd.f32 %v3169, %v3667
        %v3669 = vpop.f32.mrf.mxu0
        %3670 = vmatmul.bf16.gmra.mxu0 %v2715
        %v3671 = vpop.f32.mrf.mxu0
        %v3672 = vadd.f32 %v3173, %v3671
        %v3673 = vpop.f32.mrf.mxu0
        %v3674 = vadd.f32 %v3175, %v3673
        %3675 = vmatmul.bf16.gmra.mxu0 %v2716
        %v3676 = vpop.f32.mrf.mxu0
        %v3677 = vpop.f32.mrf.mxu0
        %v3678 = vadd.f32 %v3179, %v3677
        %3679 = vmatmul.bf16.gmra.mxu0 %v2717
        %v3680 = vpop.f32.mrf.mxu0
        %v3681 = vadd.f32 %v3182, %v3680
        %v3682 = vpop.f32.mrf.mxu0
        %3683 = vmatmul.bf16.gmra.mxu0 %v2718
        %v3684 = vpop.f32.mrf.mxu0
        %v3685 = vadd.f32 %v3186, %v3684
        %v3686 = vpop.f32.mrf.mxu0
        %v3687 = vadd.f32 %v3188, %v3686
        %3688 = vmatmul.bf16.gmra.mxu0 %v2719
        %v3689 = vpop.f32.mrf.mxu0
        %v3690 = vpop.f32.mrf.mxu0
        %v3691 = vadd.f32 %v3192, %v3690
        %3692 = vmatmul.bf16.gmra.mxu0 %v2720
        %v3693 = vpop.f32.mrf.mxu0
        %v3694 = vadd.f32 %v3195, %v3693
        %v3695 = vpop.f32.mrf.mxu0
        %3696 = vmatmul.bf16.gmra.mxu0 %v2721
        %v3697 = vpop.f32.mrf.mxu0
        %v3698 = vadd.f32 %v3199, %v3697
        %v3699 = vpop.f32.mrf.mxu0
        %v3700 = vadd.f32 %v3201, %v3699
        %3701 = vmatmul.bf16.gmra.mxu0 %v2722
        %v3702 = vpop.f32.mrf.mxu0
        %v3703 = vpop.f32.mrf.mxu0
        %v3704 = vadd.f32 %v3205, %v3703
        %3705 = vmatmul.bf16.gmra.mxu0 %v2723
        %v3706 = vpop.f32.mrf.mxu0
        %v3707 = vadd.f32 %v3208, %v3706
        %v3708 = vpop.f32.mrf.mxu0
        %3709 = vmatmul.bf16.gmra.mxu0 %v2724
        %v3710 = vpop.f32.mrf.mxu0
        %v3711 = vadd.f32 %v3212, %v3710
        %v3712 = vpop.f32.mrf.mxu0
        %v3713 = vadd.f32 %v3214, %v3712
        %3714 = vmatmul.bf16.gmra.mxu0 %v2725
        %v3715 = vpop.f32.mrf.mxu0
        %v3716 = vpop.f32.mrf.mxu0
        %v3717 = vadd.f32 %v3218, %v3716
        %3718 = vmatmul.bf16.gmra.mxu0 %v2726
        %v3719 = vpop.f32.mrf.mxu0
        %v3720 = vadd.f32 %v3221, %v3719
        %v3721 = vpop.f32.mrf.mxu0
        %3722 = vmatmul.bf16.gmra.mxu0 %v2727
        %v3723 = vpop.f32.mrf.mxu0
        %v3724 = vadd.f32 %v3225, %v3723
        %v3725 = vpop.f32.mrf.mxu0
        %v3726 = vadd.f32 %v3227, %v3725
        %3727 = vmatmul.bf16.gmra.mxu0 %v2728
        %v3728 = vpop.f32.mrf.mxu0
        %v3729 = vpop.f32.mrf.mxu0
        %v3730 = vadd.f32 %v3231, %v3729
        %3731 = vmatmul.bf16.gmra.mxu0 %v2729
        %v3732 = vpop.f32.mrf.mxu0
        %v3733 = vadd.f32 %v3234, %v3732
        %v3734 = vpop.f32.mrf.mxu0
        %3735 = vdwg.mxu0
        %3736 = vmatpush.bf16.msra.mxu0 %v3469
        %3737 = vmatpush.bf16.msra.mxu0 %v3466
        %3738 = vmatpush.bf16.msra.mxu0 %v3463
        %3739 = vmatpush.bf16.msra.mxu0 %v3460
        %3740 = vmatpush.bf16.msra.mxu0 %v3457
        %3741 = vmatpush.bf16.msra.mxu0 %v3454
        %3742 = vmatpush.bf16.msra.mxu0 %v3451
        %3743 = vmatpush.bf16.msra.mxu0 %v3448
        %3744 = vmatmul.bf16.gmra.mxu0 %v2706
        %v3745 = vpop.f32.mrf.mxu0
        %v3746 = vadd.f32 %v3247, %v3745
        %v3747 = vpop.f32.mrf.mxu0
        %v3748 = vadd.f32 %v3249, %v3747
        %3749 = vmatmul.bf16.gmra.mxu0 %v2707
        %v3750 = vpop.f32.mrf.mxu0
        %v3751 = vadd.f32 %v3252, %v3750
        %v3752 = vpop.f32.mrf.mxu0
        %v3753 = vadd.f32 %v3254, %v3752
        %3754 = vmatmul.bf16.gmra.mxu0 %v2708
        %v3755 = vpop.f32.mrf.mxu0
        %v3756 = vadd.f32 %v3257, %v3755
        %v3757 = vpop.f32.mrf.mxu0
        %v3758 = vadd.f32 %v3259, %v3757
        %3759 = vmatmul.bf16.gmra.mxu0 %v2709
        %v3760 = vpop.f32.mrf.mxu0
        %v3761 = vadd.f32 %v3262, %v3760
        %v3762 = vpop.f32.mrf.mxu0
        %v3763 = vadd.f32 %v3264, %v3762
        %3764 = vmatmul.bf16.gmra.mxu0 %v2710
        %v3765 = vpop.f32.mrf.mxu0
        %v3766 = vadd.f32 %v3267, %v3765
        %v3767 = vpop.f32.mrf.mxu0
        %v3768 = vadd.f32 %v3269, %v3767
        %3769 = vmatmul.bf16.gmra.mxu0 %v2711
        %v3770 = vpop.f32.mrf.mxu0
        %v3771 = vadd.f32 %v3272, %v3770
        %v3772 = vpop.f32.mrf.mxu0
        %v3773 = vadd.f32 %v3274, %v3772
        %3774 = vmatmul.bf16.gmra.mxu0 %v2712
        %v3775 = vpop.f32.mrf.mxu0
        %v3776 = vadd.f32 %v3277, %v3775
        %v3777 = vpop.f32.mrf.mxu0
        %v3778 = vadd.f32 %v3279, %v3777
        %3779 = vmatmul.bf16.gmra.mxu0 %v2713
        %v3780 = vpop.f32.mrf.mxu0
        %v3781 = vadd.f32 %v3282, %v3780
        %v3782 = vpop.f32.mrf.mxu0
        %v3783 = vadd.f32 %v3284, %v3782
        %3784 = vmatmul.bf16.gmra.mxu0 %v2714
        %v3785 = vpop.f32.mrf.mxu0
        %v3786 = vadd.f32 %v3287, %v3785
        %v3787 = vpop.f32.mrf.mxu0
        %v3788 = vadd.f32 %v3289, %v3787
        %3789 = vmatmul.bf16.gmra.mxu0 %v2715
        %v3790 = vpop.f32.mrf.mxu0
        %v3791 = vadd.f32 %v3292, %v3790
        %v3792 = vpop.f32.mrf.mxu0
        %v3793 = vadd.f32 %v3294, %v3792
        %3794 = vmatmul.bf16.gmra.mxu0 %v2716
        %v3795 = vpop.f32.mrf.mxu0
        %v3796 = vadd.f32 %v3297, %v3795
        %v3797 = vpop.f32.mrf.mxu0
        %v3798 = vadd.f32 %v3299, %v3797
        %3799 = vmatmul.bf16.gmra.mxu0 %v2717
        %v3800 = vpop.f32.mrf.mxu0
        %v3801 = vadd.f32 %v3302, %v3800
        %v3802 = vpop.f32.mrf.mxu0
        %v3803 = vadd.f32 %v3304, %v3802
        %3804 = vmatmul.bf16.gmra.mxu0 %v2718
        %v3805 = vpop.f32.mrf.mxu0
        %v3806 = vadd.f32 %v3307, %v3805
        %v3807 = vpop.f32.mrf.mxu0
        %v3808 = vadd.f32 %v3309, %v3807
        %3809 = vmatmul.bf16.gmra.mxu0 %v2719
        %v3810 = vpop.f32.mrf.mxu0
        %v3811 = vadd.f32 %v3312, %v3810
        %v3812 = vpop.f32.mrf.mxu0
        %v3813 = vadd.f32 %v3314, %v3812
        %3814 = vmatmul.bf16.gmra.mxu0 %v2720
        %v3815 = vpop.f32.mrf.mxu0
        %v3816 = vadd.f32 %v3317, %v3815
        %v3817 = vpop.f32.mrf.mxu0
        %v3818 = vadd.f32 %v3319, %v3817
        %3819 = vmatmul.bf16.gmra.mxu0 %v2721
        %v3820 = vpop.f32.mrf.mxu0
        %v3821 = vadd.f32 %v3322, %v3820
        %v3822 = vpop.f32.mrf.mxu0
        %v3823 = vadd.f32 %v3324, %v3822
        %3824 = vmatmul.bf16.gmra.mxu0 %v2722
        %v3825 = vpop.f32.mrf.mxu0
        %v3826 = vadd.f32 %v3327, %v3825
        %v3827 = vpop.f32.mrf.mxu0
        %v3828 = vadd.f32 %v3329, %v3827
        %3829 = vmatmul.bf16.gmra.mxu0 %v2723
        %v3830 = vpop.f32.mrf.mxu0
        %v3831 = vadd.f32 %v3332, %v3830
        %v3832 = vpop.f32.mrf.mxu0
        %v3833 = vadd.f32 %v3334, %v3832
        %3834 = vmatmul.bf16.gmra.mxu0 %v2724
        %v3835 = vpop.f32.mrf.mxu0
        %v3836 = vadd.f32 %v3337, %v3835
        %v3837 = vpop.f32.mrf.mxu0
        %v3838 = vadd.f32 %v3339, %v3837
        %3839 = vmatmul.bf16.gmra.mxu0 %v2725
        %v3840 = vpop.f32.mrf.mxu0
        %v3841 = vadd.f32 %v3342, %v3840
        %v3842 = vpop.f32.mrf.mxu0
        %v3843 = vadd.f32 %v3344, %v3842
        %3844 = vmatmul.bf16.gmra.mxu0 %v2726
        %v3845 = vpop.f32.mrf.mxu0
        %v3846 = vadd.f32 %v3347, %v3845
        %v3847 = vpop.f32.mrf.mxu0
        %v3848 = vadd.f32 %v3349, %v3847
        %3849 = vmatmul.bf16.gmra.mxu0 %v2727
        %v3850 = vpop.f32.mrf.mxu0
        %v3851 = vadd.f32 %v3352, %v3850
        %v3852 = vpop.f32.mrf.mxu0
        %v3853 = vadd.f32 %v3354, %v3852
        %3854 = vmatmul.bf16.gmra.mxu0 %v2728
        %v3855 = vpop.f32.mrf.mxu0
        %v3856 = vadd.f32 %v3357, %v3855
        %v3857 = vpop.f32.mrf.mxu0
        %v3858 = vadd.f32 %v3359, %v3857
        %3859 = vmatmul.bf16.gmra.mxu0 %v2729
        %v3860 = vpop.f32.mrf.mxu0
        %v3861 = vadd.f32 %v3362, %v3860
        %v3862 = vpop.f32.mrf.mxu0
        %v3863 = vadd.f32 %v3364, %v3862
        %3864 = vdwg.mxu0
        %s3865 = scalar_lea.vmem [#allocation3], 48
        %v3866 = vld [vmem:[%s3865] sm:$0xff]
        %v3867 = vld [vmem:[%s3865 + $0x8] sm:$0xff]
        %v3868 = vld [vmem:[%s3865 + $0x10] sm:$0xff]
        %v3869 = vld [vmem:[%s3865 + $0x18] sm:$0xff]
        %v3870 = vld [vmem:[%s3865 + $0x20] sm:$0xff]
        %v3871 = vld [vmem:[%s3865 + $0x28] sm:$0xff]
        %v3872 = vld [vmem:[%s3865 + $0x30] sm:$0xff]
        %v3873 = vld [vmem:[%s3865 + $0x38] sm:$0xff]
        %v3874 = vld [vmem:[%s3865 + $0x40] sm:$0xff]
        %v3875 = vld [vmem:[%s3865 + $0x48] sm:$0xff]
        %v3876 = vld [vmem:[%s3865 + $0x50] sm:$0xff]
        %v3877 = vld [vmem:[%s3865 + $0x58] sm:$0xff]
        %v3878 = vld [vmem:[%s3865 + $0x60] sm:$0xff]
        %v3879 = vld [vmem:[%s3865 + $0x68] sm:$0xff]
        %v3880 = vld [vmem:[%s3865 + $0x70] sm:$0xff]
        %v3881 = vld [vmem:[%s3865 + $0x78] sm:$0xff]
        %v3882 = vld [vmem:[%s3865 + $0x80] sm:$0xff]
        %v3883 = vld [vmem:[%s3865 + $0x88] sm:$0xff]
        %v3884 = vld [vmem:[%s3865 + $0x90] sm:$0xff]
        %v3885 = vld [vmem:[%s3865 + $0x98] sm:$0xff]
        %v3886 = vld [vmem:[%s3865 + $0xa0] sm:$0xff]
        %v3887 = vld [vmem:[%s3865 + $0xa8] sm:$0xff]
        %v3888 = vld [vmem:[%s3865 + $0xb0] sm:$0xff]
        %v3889 = vld [vmem:[%s3865 + $0xb8] sm:$0xff]
        %v3890 = vld [vmem:[%s3865 + $0xc0] sm:$0xff]
        %v3891 = vld [vmem:[%s3865 + $0xc8] sm:$0xff]
        %v3892 = vld [vmem:[%s3865 + $0xd0] sm:$0xff]
        %v3893 = vld [vmem:[%s3865 + $0xd8] sm:$0xff]
        %v3894 = vld [vmem:[%s3865 + $0xe0] sm:$0xff]
        %v3895 = vld [vmem:[%s3865 + $0xe8] sm:$0xff]
        %v3896 = vld [vmem:[%s3865 + $0xf0] sm:$0xff]
        %v3897 = vld [vmem:[%s3865 + $0xf8] sm:$0xff]
        %v3898 = vld [vmem:[%s3865 + $0x100] sm:$0xff]
        %v3899 = vld [vmem:[%s3865 + $0x108] sm:$0xff]
        %v3900 = vld [vmem:[%s3865 + $0x110] sm:$0xff]
        %v3901 = vld [vmem:[%s3865 + $0x118] sm:$0xff]
        %v3902 = vld [vmem:[%s3865 + $0x120] sm:$0xff]
        %v3903 = vld [vmem:[%s3865 + $0x128] sm:$0xff]
        %v3904 = vld [vmem:[%s3865 + $0x130] sm:$0xff]
        %v3905 = vld [vmem:[%s3865 + $0x138] sm:$0xff]
        %v3906 = vld [vmem:[%s3865 + $0x140] sm:$0xff]
        %v3907 = vld [vmem:[%s3865 + $0x148] sm:$0xff]
        %v3908 = vld [vmem:[%s3865 + $0x150] sm:$0xff]
        %v3909 = vld [vmem:[%s3865 + $0x158] sm:$0xff]
        %v3910 = vld [vmem:[%s3865 + $0x160] sm:$0xff]
        %v3911 = vld [vmem:[%s3865 + $0x168] sm:$0xff]
        %v3912 = vld [vmem:[%s3865 + $0x170] sm:$0xff]
        %v3913 = vld [vmem:[%s3865 + $0x178] sm:$0xff]
        %v3914 = vpack.c.bf16 %v3867, %v3866
        %v3915 = vpack.c.bf16 %v3869, %v3868
        %v3916 = vpack.c.bf16 %v3871, %v3870
        %v3917 = vpack.c.bf16 %v3873, %v3872
        %v3918 = vpack.c.bf16 %v3875, %v3874
        %v3919 = vpack.c.bf16 %v3877, %v3876
        %v3920 = vpack.c.bf16 %v3879, %v3878
        %v3921 = vpack.c.bf16 %v3881, %v3880
        %v3922 = vpack.c.bf16 %v3883, %v3882
        %v3923 = vpack.c.bf16 %v3885, %v3884
        %v3924 = vpack.c.bf16 %v3887, %v3886
        %v3925 = vpack.c.bf16 %v3889, %v3888
        %v3926 = vpack.c.bf16 %v3891, %v3890
        %v3927 = vpack.c.bf16 %v3893, %v3892
        %v3928 = vpack.c.bf16 %v3895, %v3894
        %v3929 = vpack.c.bf16 %v3897, %v3896
        %v3930 = vpack.c.bf16 %v3899, %v3898
        %v3931 = vpack.c.bf16 %v3901, %v3900
        %v3932 = vpack.c.bf16 %v3903, %v3902
        %v3933 = vpack.c.bf16 %v3905, %v3904
        %v3934 = vpack.c.bf16 %v3907, %v3906
        %v3935 = vpack.c.bf16 %v3909, %v3908
        %v3936 = vpack.c.bf16 %v3911, %v3910
        %v3937 = vpack.c.bf16 %v3913, %v3912
        %s3938 = scalar_lea.vmem [#allocation9], 384
        %v3939 = vld [vmem:[%s3938] sm:$0xff]
        %v3940 = vld [vmem:[%s3938 + $0x8] sm:$0xf]
        %v3941 = vld [vmem:[%s3938 + $0xc] sm:$0xff]
        %v3942 = vld [vmem:[%s3938 + $0x14] sm:$0xf]
        %v3943 = vld [vmem:[%s3938 + $0x18] sm:$0xff]
        %v3944 = vld [vmem:[%s3938 + $0x20] sm:$0xf]
        %v3945 = vld [vmem:[%s3938 + $0x24] sm:$0xff]
        %v3946 = vld [vmem:[%s3938 + $0x2c] sm:$0xf]
        %v3947 = vld [vmem:[%s3938 + $0x30] sm:$0xff]
        %v3948 = vld [vmem:[%s3938 + $0x38] sm:$0xf]
        %v3949 = vld [vmem:[%s3938 + $0x3c] sm:$0xff]
        %v3950 = vld [vmem:[%s3938 + $0x44] sm:$0xf]
        %v3951 = vld [vmem:[%s3938 + $0x48] sm:$0xff]
        %v3952 = vld [vmem:[%s3938 + $0x50] sm:$0xf]
        %v3953 = vld [vmem:[%s3938 + $0x54] sm:$0xff]
        %v3954 = vld [vmem:[%s3938 + $0x5c] sm:$0xf]
        %v3955 = vld [vmem:[%s3938 + $0x60] sm:$0xff]
        %v3956 = vld [vmem:[%s3938 + $0x68] sm:$0xf]
        %v3957 = vld [vmem:[%s3938 + $0x6c] sm:$0xff]
        %v3958 = vld [vmem:[%s3938 + $0x74] sm:$0xf]
        %v3959 = vld [vmem:[%s3938 + $0x78] sm:$0xff]
        %v3960 = vld [vmem:[%s3938 + $0x80] sm:$0xf]
        %v3961 = vld [vmem:[%s3938 + $0x84] sm:$0xff]
        %v3962 = vld [vmem:[%s3938 + $0x8c] sm:$0xf]
        %v3963 = vld [vmem:[%s3938 + $0x90] sm:$0xff]
        %v3964 = vld [vmem:[%s3938 + $0x98] sm:$0xf]
        %v3965 = vld [vmem:[%s3938 + $0x9c] sm:$0xff]
        %v3966 = vld [vmem:[%s3938 + $0xa4] sm:$0xf]
        %v3967 = vld [vmem:[%s3938 + $0xa8] sm:$0xff]
        %v3968 = vld [vmem:[%s3938 + $0xb0] sm:$0xf]
        %v3969 = vld [vmem:[%s3938 + $0xb4] sm:$0xff]
        %v3970 = vld [vmem:[%s3938 + $0xbc] sm:$0xf]
        %v4003 = vunpack.c.l.b16 %v3939
        %v4004 = vunpack.c.h.b16 %v3939
        %v4005 = vunpack.c.l.b16 %v3940
        %v4006 = vunpack.c.l.b16 %v3941
        %v4007 = vunpack.c.h.b16 %v3941
        %v4008 = vunpack.c.l.b16 %v3942
        %v4009 = vunpack.c.l.b16 %v3943
        %v4010 = vunpack.c.h.b16 %v3943
        %v4011 = vunpack.c.l.b16 %v3944
        %v4012 = vunpack.c.l.b16 %v3945
        %v4013 = vunpack.c.h.b16 %v3945
        %v4014 = vunpack.c.l.b16 %v3946
        %v4015 = vunpack.c.l.b16 %v3947
        %v4016 = vunpack.c.h.b16 %v3947
        %v4017 = vunpack.c.l.b16 %v3948
        %v4018 = vunpack.c.l.b16 %v3949
        %v4019 = vunpack.c.h.b16 %v3949
        %v4020 = vunpack.c.l.b16 %v3950
        %v4021 = vunpack.c.l.b16 %v3951
        %v4022 = vunpack.c.h.b16 %v3951
        %v4023 = vunpack.c.l.b16 %v3952
        %v4024 = vunpack.c.l.b16 %v3953
        %v4025 = vunpack.c.h.b16 %v3953
        %v4026 = vunpack.c.l.b16 %v3954
        %v4027 = vunpack.c.l.b16 %v3955
        %v4028 = vunpack.c.h.b16 %v3955
        %v4029 = vunpack.c.l.b16 %v3956
        %v4030 = vunpack.c.l.b16 %v3957
        %v4031 = vunpack.c.h.b16 %v3957
        %v4032 = vunpack.c.l.b16 %v3958
        %v4033 = vunpack.c.l.b16 %v3959
        %v4034 = vunpack.c.h.b16 %v3959
        %v4035 = vunpack.c.l.b16 %v3960
        %v4036 = vunpack.c.l.b16 %v3961
        %v4037 = vunpack.c.h.b16 %v3961
        %v4038 = vunpack.c.l.b16 %v3962
        %v4039 = vunpack.c.l.b16 %v3963
        %v4040 = vunpack.c.h.b16 %v3963
        %v4041 = vunpack.c.l.b16 %v3964
        %v4042 = vunpack.c.l.b16 %v3965
        %v4043 = vunpack.c.h.b16 %v3965
        %v4044 = vunpack.c.l.b16 %v3966
        %v4045 = vunpack.c.l.b16 %v3967
        %v4046 = vunpack.c.h.b16 %v3967
        %v4047 = vunpack.c.l.b16 %v3968
        %v4048 = vunpack.c.l.b16 %v3969
        %v4049 = vunpack.c.h.b16 %v3969
        %v4050 = vunpack.c.l.b16 %v3970
        %v4051 = vpack.c.b16 %v4006, %v4003
        %v4052 = vpack.c.b16 %v4007, %v4004
        %v4053 = vpack.c.b16 %v4008, %v4005
        %v4054 = vpack.c.b16 %v4012, %v4009
        %v4055 = vpack.c.b16 %v4013, %v4010
        %v4056 = vpack.c.b16 %v4014, %v4011
        %v4057 = vpack.c.b16 %v4018, %v4015
        %v4058 = vpack.c.b16 %v4019, %v4016
        %v4059 = vpack.c.b16 %v4020, %v4017
        %v4060 = vpack.c.b16 %v4024, %v4021
        %v4061 = vpack.c.b16 %v4025, %v4022
        %v4062 = vpack.c.b16 %v4026, %v4023
        %v4063 = vpack.c.b16 %v4030, %v4027
        %v4064 = vpack.c.b16 %v4031, %v4028
        %v4065 = vpack.c.b16 %v4032, %v4029
        %v4066 = vpack.c.b16 %v4036, %v4033
        %v4067 = vpack.c.b16 %v4037, %v4034
        %v4068 = vpack.c.b16 %v4038, %v4035
        %v4069 = vpack.c.b16 %v4042, %v4039
        %v4070 = vpack.c.b16 %v4043, %v4040
        %v4071 = vpack.c.b16 %v4044, %v4041
        %v4072 = vpack.c.b16 %v4048, %v4045
        %v4073 = vpack.c.b16 %v4049, %v4046
        %v4074 = vpack.c.b16 %v4050, %v4047
        %4099 = vmatpush.bf16.msra.mxu0 %v4072
        %4100 = vmatpush.bf16.msra.mxu0 %v4069
        %4101 = vmatpush.bf16.msra.mxu0 %v4066
        %4102 = vmatpush.bf16.msra.mxu0 %v4063
        %4103 = vmatpush.bf16.msra.mxu0 %v4060
        %4104 = vmatpush.bf16.msra.mxu0 %v4057
        %4105 = vmatpush.bf16.msra.mxu0 %v4054
        %4106 = vmatpush.bf16.msra.mxu0 %v4051
        %4107 = vmatmul.bf16.gmra.mxu0 %v3914
        %v4108 = vpop.f32.mrf.mxu0
        %v4109 = vadd.f32 0.0, %v4108
        %v4110 = vpop.f32.mrf.mxu0
        %v4111 = vadd.f32 0.0, %v4110
        %4112 = vmatmul.bf16.gmra.mxu0 %v3915
        %v4113 = vpop.f32.mrf.mxu0
        %v4114 = vadd.f32 0.0, %v4113
        %v4115 = vpop.f32.mrf.mxu0
        %v4116 = vadd.f32 0.0, %v4115
        %4117 = vmatmul.bf16.gmra.mxu0 %v3916
        %v4118 = vpop.f32.mrf.mxu0
        %v4119 = vadd.f32 0.0, %v4118
        %v4120 = vpop.f32.mrf.mxu0
        %v4121 = vadd.f32 0.0, %v4120
        %4122 = vmatmul.bf16.gmra.mxu0 %v3917
        %v4123 = vpop.f32.mrf.mxu0
        %v4124 = vadd.f32 0.0, %v4123
        %v4125 = vpop.f32.mrf.mxu0
        %v4126 = vadd.f32 0.0, %v4125
        %4127 = vmatmul.bf16.gmra.mxu0 %v3918
        %v4128 = vpop.f32.mrf.mxu0
        %v4129 = vadd.f32 0.0, %v4128
        %v4130 = vpop.f32.mrf.mxu0
        %v4131 = vadd.f32 0.0, %v4130
        %4132 = vmatmul.bf16.gmra.mxu0 %v3919
        %v4133 = vpop.f32.mrf.mxu0
        %v4134 = vadd.f32 0.0, %v4133
        %v4135 = vpop.f32.mrf.mxu0
        %v4136 = vadd.f32 0.0, %v4135
        %4137 = vmatmul.bf16.gmra.mxu0 %v3920
        %v4138 = vpop.f32.mrf.mxu0
        %v4139 = vadd.f32 0.0, %v4138
        %v4140 = vpop.f32.mrf.mxu0
        %v4141 = vadd.f32 0.0, %v4140
        %4142 = vmatmul.bf16.gmra.mxu0 %v3921
        %v4143 = vpop.f32.mrf.mxu0
        %v4144 = vadd.f32 0.0, %v4143
        %v4145 = vpop.f32.mrf.mxu0
        %v4146 = vadd.f32 0.0, %v4145
        %4147 = vmatmul.bf16.gmra.mxu0 %v3922
        %v4148 = vpop.f32.mrf.mxu0
        %v4149 = vadd.f32 0.0, %v4148
        %v4150 = vpop.f32.mrf.mxu0
        %v4151 = vadd.f32 0.0, %v4150
        %4152 = vmatmul.bf16.gmra.mxu0 %v3923
        %v4153 = vpop.f32.mrf.mxu0
        %v4154 = vadd.f32 0.0, %v4153
        %v4155 = vpop.f32.mrf.mxu0
        %v4156 = vadd.f32 0.0, %v4155
        %4157 = vmatmul.bf16.gmra.mxu0 %v3924
        %v4158 = vpop.f32.mrf.mxu0
        %v4159 = vadd.f32 0.0, %v4158
        %v4160 = vpop.f32.mrf.mxu0
        %v4161 = vadd.f32 0.0, %v4160
        %4162 = vmatmul.bf16.gmra.mxu0 %v3925
        %v4163 = vpop.f32.mrf.mxu0
        %v4164 = vadd.f32 0.0, %v4163
        %v4165 = vpop.f32.mrf.mxu0
        %v4166 = vadd.f32 0.0, %v4165
        %4167 = vmatmul.bf16.gmra.mxu0 %v3926
        %v4168 = vpop.f32.mrf.mxu0
        %v4169 = vadd.f32 0.0, %v4168
        %v4170 = vpop.f32.mrf.mxu0
        %v4171 = vadd.f32 0.0, %v4170
        %4172 = vmatmul.bf16.gmra.mxu0 %v3927
        %v4173 = vpop.f32.mrf.mxu0
        %v4174 = vadd.f32 0.0, %v4173
        %v4175 = vpop.f32.mrf.mxu0
        %v4176 = vadd.f32 0.0, %v4175
        %4177 = vmatmul.bf16.gmra.mxu0 %v3928
        %v4178 = vpop.f32.mrf.mxu0
        %v4179 = vadd.f32 0.0, %v4178
        %v4180 = vpop.f32.mrf.mxu0
        %v4181 = vadd.f32 0.0, %v4180
        %4182 = vmatmul.bf16.gmra.mxu0 %v3929
        %v4183 = vpop.f32.mrf.mxu0
        %v4184 = vadd.f32 0.0, %v4183
        %v4185 = vpop.f32.mrf.mxu0
        %v4186 = vadd.f32 0.0, %v4185
        %4187 = vmatmul.bf16.gmra.mxu0 %v3930
        %v4188 = vpop.f32.mrf.mxu0
        %v4189 = vadd.f32 0.0, %v4188
        %v4190 = vpop.f32.mrf.mxu0
        %v4191 = vadd.f32 0.0, %v4190
        %4192 = vmatmul.bf16.gmra.mxu0 %v3931
        %v4193 = vpop.f32.mrf.mxu0
        %v4194 = vadd.f32 0.0, %v4193
        %v4195 = vpop.f32.mrf.mxu0
        %v4196 = vadd.f32 0.0, %v4195
        %4197 = vmatmul.bf16.gmra.mxu0 %v3932
        %v4198 = vpop.f32.mrf.mxu0
        %v4199 = vadd.f32 0.0, %v4198
        %v4200 = vpop.f32.mrf.mxu0
        %v4201 = vadd.f32 0.0, %v4200
        %4202 = vmatmul.bf16.gmra.mxu0 %v3933
        %v4203 = vpop.f32.mrf.mxu0
        %v4204 = vadd.f32 0.0, %v4203
        %v4205 = vpop.f32.mrf.mxu0
        %v4206 = vadd.f32 0.0, %v4205
        %4207 = vmatmul.bf16.gmra.mxu0 %v3934
        %v4208 = vpop.f32.mrf.mxu0
        %v4209 = vadd.f32 0.0, %v4208
        %v4210 = vpop.f32.mrf.mxu0
        %v4211 = vadd.f32 0.0, %v4210
        %4212 = vmatmul.bf16.gmra.mxu0 %v3935
        %v4213 = vpop.f32.mrf.mxu0
        %v4214 = vadd.f32 0.0, %v4213
        %v4215 = vpop.f32.mrf.mxu0
        %v4216 = vadd.f32 0.0, %v4215
        %4217 = vmatmul.bf16.gmra.mxu0 %v3936
        %v4218 = vpop.f32.mrf.mxu0
        %v4219 = vadd.f32 0.0, %v4218
        %v4220 = vpop.f32.mrf.mxu0
        %v4221 = vadd.f32 0.0, %v4220
        %4222 = vmatmul.bf16.gmra.mxu0 %v3937
        %v4223 = vpop.f32.mrf.mxu0
        %v4224 = vadd.f32 0.0, %v4223
        %v4225 = vpop.f32.mrf.mxu0
        %v4226 = vadd.f32 0.0, %v4225
        %4227 = vdwg.mxu0
        %4228 = vmatpush.bf16.msra.mxu0 %v4073
        %4229 = vmatpush.bf16.msra.mxu0 %v4070
        %4230 = vmatpush.bf16.msra.mxu0 %v4067
        %4231 = vmatpush.bf16.msra.mxu0 %v4064
        %4232 = vmatpush.bf16.msra.mxu0 %v4061
        %4233 = vmatpush.bf16.msra.mxu0 %v4058
        %4234 = vmatpush.bf16.msra.mxu0 %v4055
        %4235 = vmatpush.bf16.msra.mxu0 %v4052
        %4236 = vmatmul.bf16.gmra.mxu0 %v3914
        %v4237 = vpop.f32.mrf.mxu0
        %v4238 = vadd.f32 0.0, %v4237
        %v4239 = vpop.f32.mrf.mxu0
        %v4240 = vadd.f32 0.0, %v4239
        %4241 = vmatmul.bf16.gmra.mxu0 %v3915
        %v4242 = vpop.f32.mrf.mxu0
        %v4243 = vpop.f32.mrf.mxu0
        %v4244 = vadd.f32 0.0, %v4243
        %4245 = vmatmul.bf16.gmra.mxu0 %v3916
        %v4246 = vpop.f32.mrf.mxu0
        %v4247 = vadd.f32 0.0, %v4246
        %v4248 = vpop.f32.mrf.mxu0
        %4249 = vmatmul.bf16.gmra.mxu0 %v3917
        %v4250 = vpop.f32.mrf.mxu0
        %v4251 = vadd.f32 0.0, %v4250
        %v4252 = vpop.f32.mrf.mxu0
        %v4253 = vadd.f32 0.0, %v4252
        %4254 = vmatmul.bf16.gmra.mxu0 %v3918
        %v4255 = vpop.f32.mrf.mxu0
        %v4256 = vpop.f32.mrf.mxu0
        %v4257 = vadd.f32 0.0, %v4256
        %4258 = vmatmul.bf16.gmra.mxu0 %v3919
        %v4259 = vpop.f32.mrf.mxu0
        %v4260 = vadd.f32 0.0, %v4259
        %v4261 = vpop.f32.mrf.mxu0
        %4262 = vmatmul.bf16.gmra.mxu0 %v3920
        %v4263 = vpop.f32.mrf.mxu0
        %v4264 = vadd.f32 0.0, %v4263
        %v4265 = vpop.f32.mrf.mxu0
        %v4266 = vadd.f32 0.0, %v4265
        %4267 = vmatmul.bf16.gmra.mxu0 %v3921
        %v4268 = vpop.f32.mrf.mxu0
        %v4269 = vpop.f32.mrf.mxu0
        %v4270 = vadd.f32 0.0, %v4269
        %4271 = vmatmul.bf16.gmra.mxu0 %v3922
        %v4272 = vpop.f32.mrf.mxu0
        %v4273 = vadd.f32 0.0, %v4272
        %v4274 = vpop.f32.mrf.mxu0
        %4275 = vmatmul.bf16.gmra.mxu0 %v3923
        %v4276 = vpop.f32.mrf.mxu0
        %v4277 = vadd.f32 0.0, %v4276
        %v4278 = vpop.f32.mrf.mxu0
        %v4279 = vadd.f32 0.0, %v4278
        %4280 = vmatmul.bf16.gmra.mxu0 %v3924
        %v4281 = vpop.f32.mrf.mxu0
        %v4282 = vpop.f32.mrf.mxu0
        %v4283 = vadd.f32 0.0, %v4282
        %4284 = vmatmul.bf16.gmra.mxu0 %v3925
        %v4285 = vpop.f32.mrf.mxu0
        %v4286 = vadd.f32 0.0, %v4285
        %v4287 = vpop.f32.mrf.mxu0
        %4288 = vmatmul.bf16.gmra.mxu0 %v3926
        %v4289 = vpop.f32.mrf.mxu0
        %v4290 = vadd.f32 0.0, %v4289
        %v4291 = vpop.f32.mrf.mxu0
        %v4292 = vadd.f32 0.0, %v4291
        %4293 = vmatmul.bf16.gmra.mxu0 %v3927
        %v4294 = vpop.f32.mrf.mxu0
        %v4295 = vpop.f32.mrf.mxu0
        %v4296 = vadd.f32 0.0, %v4295
        %4297 = vmatmul.bf16.gmra.mxu0 %v3928
        %v4298 = vpop.f32.mrf.mxu0
        %v4299 = vadd.f32 0.0, %v4298
        %v4300 = vpop.f32.mrf.mxu0
        %4301 = vmatmul.bf16.gmra.mxu0 %v3929
        %v4302 = vpop.f32.mrf.mxu0
        %v4303 = vadd.f32 0.0, %v4302
        %v4304 = vpop.f32.mrf.mxu0
        %v4305 = vadd.f32 0.0, %v4304
        %4306 = vmatmul.bf16.gmra.mxu0 %v3930
        %v4307 = vpop.f32.mrf.mxu0
        %v4308 = vpop.f32.mrf.mxu0
        %v4309 = vadd.f32 0.0, %v4308
        %4310 = vmatmul.bf16.gmra.mxu0 %v3931
        %v4311 = vpop.f32.mrf.mxu0
        %v4312 = vadd.f32 0.0, %v4311
        %v4313 = vpop.f32.mrf.mxu0
        %4314 = vmatmul.bf16.gmra.mxu0 %v3932
        %v4315 = vpop.f32.mrf.mxu0
        %v4316 = vadd.f32 0.0, %v4315
        %v4317 = vpop.f32.mrf.mxu0
        %v4318 = vadd.f32 0.0, %v4317
        %4319 = vmatmul.bf16.gmra.mxu0 %v3933
        %v4320 = vpop.f32.mrf.mxu0
        %v4321 = vpop.f32.mrf.mxu0
        %v4322 = vadd.f32 0.0, %v4321
        %4323 = vmatmul.bf16.gmra.mxu0 %v3934
        %v4324 = vpop.f32.mrf.mxu0
        %v4325 = vadd.f32 0.0, %v4324
        %v4326 = vpop.f32.mrf.mxu0
        %4327 = vmatmul.bf16.gmra.mxu0 %v3935
        %v4328 = vpop.f32.mrf.mxu0
        %v4329 = vadd.f32 0.0, %v4328
        %v4330 = vpop.f32.mrf.mxu0
        %v4331 = vadd.f32 0.0, %v4330
        %4332 = vmatmul.bf16.gmra.mxu0 %v3936
        %v4333 = vpop.f32.mrf.mxu0
        %v4334 = vpop.f32.mrf.mxu0
        %v4335 = vadd.f32 0.0, %v4334
        %4336 = vmatmul.bf16.gmra.mxu0 %v3937
        %v4337 = vpop.f32.mrf.mxu0
        %v4338 = vadd.f32 0.0, %v4337
        %v4339 = vpop.f32.mrf.mxu0
        %4340 = vdwg.mxu0
        %4341 = vmatpush.bf16.msra.mxu0 %v4074
        %4342 = vmatpush.bf16.msra.mxu0 %v4071
        %4343 = vmatpush.bf16.msra.mxu0 %v4068
        %4344 = vmatpush.bf16.msra.mxu0 %v4065
        %4345 = vmatpush.bf16.msra.mxu0 %v4062
        %4346 = vmatpush.bf16.msra.mxu0 %v4059
        %4347 = vmatpush.bf16.msra.mxu0 %v4056
        %4348 = vmatpush.bf16.msra.mxu0 %v4053
        %4349 = vmatmul.bf16.gmra.mxu0 %v3914
        %v4350 = vpop.f32.mrf.mxu0
        %v4351 = vadd.f32 0.0, %v4350
        %v4352 = vpop.f32.mrf.mxu0
        %v4353 = vadd.f32 0.0, %v4352
        %4354 = vmatmul.bf16.gmra.mxu0 %v3915
        %v4355 = vpop.f32.mrf.mxu0
        %v4356 = vadd.f32 0.0, %v4355
        %v4357 = vpop.f32.mrf.mxu0
        %v4358 = vadd.f32 0.0, %v4357
        %4359 = vmatmul.bf16.gmra.mxu0 %v3916
        %v4360 = vpop.f32.mrf.mxu0
        %v4361 = vadd.f32 0.0, %v4360
        %v4362 = vpop.f32.mrf.mxu0
        %v4363 = vadd.f32 0.0, %v4362
        %4364 = vmatmul.bf16.gmra.mxu0 %v3917
        %v4365 = vpop.f32.mrf.mxu0
        %v4366 = vadd.f32 0.0, %v4365
        %v4367 = vpop.f32.mrf.mxu0
        %v4368 = vadd.f32 0.0, %v4367
        %4369 = vmatmul.bf16.gmra.mxu0 %v3918
        %v4370 = vpop.f32.mrf.mxu0
        %v4371 = vadd.f32 0.0, %v4370
        %v4372 = vpop.f32.mrf.mxu0
        %v4373 = vadd.f32 0.0, %v4372
        %4374 = vmatmul.bf16.gmra.mxu0 %v3919
        %v4375 = vpop.f32.mrf.mxu0
        %v4376 = vadd.f32 0.0, %v4375
        %v4377 = vpop.f32.mrf.mxu0
        %v4378 = vadd.f32 0.0, %v4377
        %4379 = vmatmul.bf16.gmra.mxu0 %v3920
        %v4380 = vpop.f32.mrf.mxu0
        %v4381 = vadd.f32 0.0, %v4380
        %v4382 = vpop.f32.mrf.mxu0
        %v4383 = vadd.f32 0.0, %v4382
        %4384 = vmatmul.bf16.gmra.mxu0 %v3921
        %v4385 = vpop.f32.mrf.mxu0
        %v4386 = vadd.f32 0.0, %v4385
        %v4387 = vpop.f32.mrf.mxu0
        %v4388 = vadd.f32 0.0, %v4387
        %4389 = vmatmul.bf16.gmra.mxu0 %v3922
        %v4390 = vpop.f32.mrf.mxu0
        %v4391 = vadd.f32 0.0, %v4390
        %v4392 = vpop.f32.mrf.mxu0
        %v4393 = vadd.f32 0.0, %v4392
        %4394 = vmatmul.bf16.gmra.mxu0 %v3923
        %v4395 = vpop.f32.mrf.mxu0
        %v4396 = vadd.f32 0.0, %v4395
        %v4397 = vpop.f32.mrf.mxu0
        %v4398 = vadd.f32 0.0, %v4397
        %4399 = vmatmul.bf16.gmra.mxu0 %v3924
        %v4400 = vpop.f32.mrf.mxu0
        %v4401 = vadd.f32 0.0, %v4400
        %v4402 = vpop.f32.mrf.mxu0
        %v4403 = vadd.f32 0.0, %v4402
        %4404 = vmatmul.bf16.gmra.mxu0 %v3925
        %v4405 = vpop.f32.mrf.mxu0
        %v4406 = vadd.f32 0.0, %v4405
        %v4407 = vpop.f32.mrf.mxu0
        %v4408 = vadd.f32 0.0, %v4407
        %4409 = vmatmul.bf16.gmra.mxu0 %v3926
        %v4410 = vpop.f32.mrf.mxu0
        %v4411 = vadd.f32 0.0, %v4410
        %v4412 = vpop.f32.mrf.mxu0
        %v4413 = vadd.f32 0.0, %v4412
        %4414 = vmatmul.bf16.gmra.mxu0 %v3927
        %v4415 = vpop.f32.mrf.mxu0
        %v4416 = vadd.f32 0.0, %v4415
        %v4417 = vpop.f32.mrf.mxu0
        %v4418 = vadd.f32 0.0, %v4417
        %4419 = vmatmul.bf16.gmra.mxu0 %v3928
        %v4420 = vpop.f32.mrf.mxu0
        %v4421 = vadd.f32 0.0, %v4420
        %v4422 = vpop.f32.mrf.mxu0
        %v4423 = vadd.f32 0.0, %v4422
        %4424 = vmatmul.bf16.gmra.mxu0 %v3929
        %v4425 = vpop.f32.mrf.mxu0
        %v4426 = vadd.f32 0.0, %v4425
        %v4427 = vpop.f32.mrf.mxu0
        %v4428 = vadd.f32 0.0, %v4427
        %4429 = vmatmul.bf16.gmra.mxu0 %v3930
        %v4430 = vpop.f32.mrf.mxu0
        %v4431 = vadd.f32 0.0, %v4430
        %v4432 = vpop.f32.mrf.mxu0
        %v4433 = vadd.f32 0.0, %v4432
        %4434 = vmatmul.bf16.gmra.mxu0 %v3931
        %v4435 = vpop.f32.mrf.mxu0
        %v4436 = vadd.f32 0.0, %v4435
        %v4437 = vpop.f32.mrf.mxu0
        %v4438 = vadd.f32 0.0, %v4437
        %4439 = vmatmul.bf16.gmra.mxu0 %v3932
        %v4440 = vpop.f32.mrf.mxu0
        %v4441 = vadd.f32 0.0, %v4440
        %v4442 = vpop.f32.mrf.mxu0
        %v4443 = vadd.f32 0.0, %v4442
        %4444 = vmatmul.bf16.gmra.mxu0 %v3933
        %v4445 = vpop.f32.mrf.mxu0
        %v4446 = vadd.f32 0.0, %v4445
        %v4447 = vpop.f32.mrf.mxu0
        %v4448 = vadd.f32 0.0, %v4447
        %4449 = vmatmul.bf16.gmra.mxu0 %v3934
        %v4450 = vpop.f32.mrf.mxu0
        %v4451 = vadd.f32 0.0, %v4450
        %v4452 = vpop.f32.mrf.mxu0
        %v4453 = vadd.f32 0.0, %v4452
        %4454 = vmatmul.bf16.gmra.mxu0 %v3935
        %v4455 = vpop.f32.mrf.mxu0
        %v4456 = vadd.f32 0.0, %v4455
        %v4457 = vpop.f32.mrf.mxu0
        %v4458 = vadd.f32 0.0, %v4457
        %4459 = vmatmul.bf16.gmra.mxu0 %v3936
        %v4460 = vpop.f32.mrf.mxu0
        %v4461 = vadd.f32 0.0, %v4460
        %v4462 = vpop.f32.mrf.mxu0
        %v4463 = vadd.f32 0.0, %v4462
        %4464 = vmatmul.bf16.gmra.mxu0 %v3937
        %v4465 = vpop.f32.mrf.mxu0
        %v4466 = vadd.f32 0.0, %v4465
        %v4467 = vpop.f32.mrf.mxu0
        %v4468 = vadd.f32 0.0, %v4467
        %4469 = vdwg.mxu0
        %v4470 = vadd.f32 %v3504, %v4109
        %v4471 = vadd.f32 %v3633, %v4238
        %v4472 = vadd.f32 %v3746, %v4351
        %v4473 = vadd.f32 %v3506, %v4111
        %v4474 = vadd.f32 %v3635, %v4240
        %v4475 = vadd.f32 %v3748, %v4353
        %v4476 = vadd.f32 %v3509, %v4114
        %v4477 = vadd.f32 %v3751, %v4356
        %v4478 = vadd.f32 %v3511, %v4116
        %v4479 = vadd.f32 %v3639, %v4244
        %v4480 = vadd.f32 %v3753, %v4358
        %v4481 = vadd.f32 %v3514, %v4119
        %v4482 = vadd.f32 %v3642, %v4247
        %v4483 = vadd.f32 %v3756, %v4361
        %v4484 = vadd.f32 %v3516, %v4121
        %v4485 = vadd.f32 %v3758, %v4363
        %v4486 = vadd.f32 %v3519, %v4124
        %v4487 = vadd.f32 %v3646, %v4251
        %v4488 = vadd.f32 %v3761, %v4366
        %v4489 = vadd.f32 %v3521, %v4126
        %v4490 = vadd.f32 %v3648, %v4253
        %v4491 = vadd.f32 %v3763, %v4368
        %v4492 = vadd.f32 %v3524, %v4129
        %v4493 = vadd.f32 %v3766, %v4371
        %v4494 = vadd.f32 %v3526, %v4131
        %v4495 = vadd.f32 %v3652, %v4257
        %v4496 = vadd.f32 %v3768, %v4373
        %v4497 = vadd.f32 %v3529, %v4134
        %v4498 = vadd.f32 %v3655, %v4260
        %v4499 = vadd.f32 %v3771, %v4376
        %v4500 = vadd.f32 %v3531, %v4136
        %v4501 = vadd.f32 %v3773, %v4378
        %v4502 = vadd.f32 %v3534, %v4139
        %v4503 = vadd.f32 %v3659, %v4264
        %v4504 = vadd.f32 %v3776, %v4381
        %v4505 = vadd.f32 %v3536, %v4141
        %v4506 = vadd.f32 %v3661, %v4266
        %v4507 = vadd.f32 %v3778, %v4383
        %v4508 = vadd.f32 %v3539, %v4144
        %v4509 = vadd.f32 %v3781, %v4386
        %v4510 = vadd.f32 %v3541, %v4146
        %v4511 = vadd.f32 %v3665, %v4270
        %v4512 = vadd.f32 %v3783, %v4388
        %v4513 = vadd.f32 %v3544, %v4149
        %v4514 = vadd.f32 %v3668, %v4273
        %v4515 = vadd.f32 %v3786, %v4391
        %v4516 = vadd.f32 %v3546, %v4151
        %v4517 = vadd.f32 %v3788, %v4393
        %v4518 = vadd.f32 %v3549, %v4154
        %v4519 = vadd.f32 %v3672, %v4277
        %v4520 = vadd.f32 %v3791, %v4396
        %v4521 = vadd.f32 %v3551, %v4156
        %v4522 = vadd.f32 %v3674, %v4279
        %v4523 = vadd.f32 %v3793, %v4398
        %v4524 = vadd.f32 %v3554, %v4159
        %v4525 = vadd.f32 %v3796, %v4401
        %v4526 = vadd.f32 %v3556, %v4161
        %v4527 = vadd.f32 %v3678, %v4283
        %v4528 = vadd.f32 %v3798, %v4403
        %v4529 = vadd.f32 %v3559, %v4164
        %v4530 = vadd.f32 %v3681, %v4286
        %v4531 = vadd.f32 %v3801, %v4406
        %v4532 = vadd.f32 %v3561, %v4166
        %v4533 = vadd.f32 %v3803, %v4408
        %v4534 = vadd.f32 %v3564, %v4169
        %v4535 = vadd.f32 %v3685, %v4290
        %v4536 = vadd.f32 %v3806, %v4411
        %v4537 = vadd.f32 %v3566, %v4171
        %v4538 = vadd.f32 %v3687, %v4292
        %v4539 = vadd.f32 %v3808, %v4413
        %v4540 = vadd.f32 %v3569, %v4174
        %v4541 = vadd.f32 %v3811, %v4416
        %v4542 = vadd.f32 %v3571, %v4176
        %v4543 = vadd.f32 %v3691, %v4296
        %v4544 = vadd.f32 %v3813, %v4418
        %v4545 = vadd.f32 %v3574, %v4179
        %v4546 = vadd.f32 %v3694, %v4299
        %v4547 = vadd.f32 %v3816, %v4421
        %v4548 = vadd.f32 %v3576, %v4181
        %v4549 = vadd.f32 %v3818, %v4423
        %v4550 = vadd.f32 %v3579, %v4184
        %v4551 = vadd.f32 %v3698, %v4303
        %v4552 = vadd.f32 %v3821, %v4426
        %v4553 = vadd.f32 %v3581, %v4186
        %v4554 = vadd.f32 %v3700, %v4305
        %v4555 = vadd.f32 %v3823, %v4428
        %v4556 = vadd.f32 %v3584, %v4189
        %v4557 = vadd.f32 %v3826, %v4431
        %v4558 = vadd.f32 %v3586, %v4191
        %v4559 = vadd.f32 %v3704, %v4309
        %v4560 = vadd.f32 %v3828, %v4433
        %v4561 = vadd.f32 %v3589, %v4194
        %v4562 = vadd.f32 %v3707, %v4312
        %v4563 = vadd.f32 %v3831, %v4436
        %v4564 = vadd.f32 %v3591, %v4196
        %v4565 = vadd.f32 %v3833, %v4438
        %v4566 = vadd.f32 %v3594, %v4199
        %v4567 = vadd.f32 %v3711, %v4316
        %v4568 = vadd.f32 %v3836, %v4441
        %v4569 = vadd.f32 %v3596, %v4201
        %v4570 = vadd.f32 %v3713, %v4318
        %v4571 = vadd.f32 %v3838, %v4443
        %v4572 = vadd.f32 %v3599, %v4204
        %v4573 = vadd.f32 %v3841, %v4446
        %v4574 = vadd.f32 %v3601, %v4206
        %v4575 = vadd.f32 %v3717, %v4322
        %v4576 = vadd.f32 %v3843, %v4448
        %v4577 = vadd.f32 %v3604, %v4209
        %v4578 = vadd.f32 %v3720, %v4325
        %v4579 = vadd.f32 %v3846, %v4451
        %v4580 = vadd.f32 %v3606, %v4211
        %v4581 = vadd.f32 %v3848, %v4453
        %v4582 = vadd.f32 %v3609, %v4214
        %v4583 = vadd.f32 %v3724, %v4329
        %v4584 = vadd.f32 %v3851, %v4456
        %v4585 = vadd.f32 %v3611, %v4216
        %v4586 = vadd.f32 %v3726, %v4331
        %v4587 = vadd.f32 %v3853, %v4458
        %v4588 = vadd.f32 %v3614, %v4219
        %v4589 = vadd.f32 %v3856, %v4461
        %v4590 = vadd.f32 %v3616, %v4221
        %v4591 = vadd.f32 %v3730, %v4335
        %v4592 = vadd.f32 %v3858, %v4463
        %v4593 = vadd.f32 %v3619, %v4224
        %v4594 = vadd.f32 %v3733, %v4338
        %v4595 = vadd.f32 %v3861, %v4466
        %v4596 = vadd.f32 %v3621, %v4226
        %v4597 = vadd.f32 %v3863, %v4468
        %v4598 = vrot.slane %v4470, 7
        %v4599 = vrot.slane %v4473, 7
        %v4600 = vrot.slane %v4476, 7
        %v4601 = vrot.slane %v4478, 7
        %v4602 = vrot.slane %v4481, 7
        %v4603 = vrot.slane %v4484, 7
        %v4604 = vrot.slane %v4486, 7
        %v4605 = vrot.slane %v4489, 7
        %v4606 = vrot.slane %v4492, 7
        %v4607 = vrot.slane %v4494, 7
        %v4608 = vrot.slane %v4497, 7
        %v4609 = vrot.slane %v4500, 7
        %v4610 = vrot.slane %v4502, 7
        %v4611 = vrot.slane %v4505, 7
        %v4612 = vrot.slane %v4508, 7
        %v4613 = vrot.slane %v4510, 7
        %v4614 = vrot.slane %v4513, 7
        %v4615 = vrot.slane %v4516, 7
        %v4616 = vrot.slane %v4518, 7
        %v4617 = vrot.slane %v4521, 7
        %v4618 = vrot.slane %v4524, 7
        %v4619 = vrot.slane %v4526, 7
        %v4620 = vrot.slane %v4529, 7
        %v4621 = vrot.slane %v4532, 7
        %v4622 = vrot.slane %v4534, 7
        %v4623 = vrot.slane %v4537, 7
        %v4624 = vrot.slane %v4540, 7
        %v4625 = vrot.slane %v4542, 7
        %v4626 = vrot.slane %v4545, 7
        %v4627 = vrot.slane %v4548, 7
        %v4628 = vrot.slane %v4550, 7
        %v4629 = vrot.slane %v4553, 7
        %v4630 = vrot.slane %v4556, 7
        %v4631 = vrot.slane %v4558, 7
        %v4632 = vrot.slane %v4561, 7
        %v4633 = vrot.slane %v4564, 7
        %v4634 = vrot.slane %v4566, 7
        %v4635 = vrot.slane %v4569, 7
        %v4636 = vrot.slane %v4572, 7
        %v4637 = vrot.slane %v4574, 7
        %v4638 = vrot.slane %v4577, 7
        %v4639 = vrot.slane %v4580, 7
        %v4640 = vrot.slane %v4582, 7
        %v4641 = vrot.slane %v4585, 7
        %v4642 = vrot.slane %v4588, 7
        %v4643 = vrot.slane %v4590, 7
        %v4644 = vrot.slane %v4593, 7
        %v4645 = vrot.slane %v4596, 7
        %v4646 = vsel %vm2380, %v4643, %v4644
        %v4647 = vsel %vm2380, %v4642, %v4643
        %v4648 = vsel %vm2380, %v4640, %v4641
        %v4649 = vsel %vm2380, %v4639, %v4640
        %v4650 = vsel %vm2380, %v4637, %v4638
        %v4651 = vsel %vm2380, %v4636, %v4637
        %v4652 = vsel %vm2380, %v4634, %v4635
        %v4653 = vsel %vm2380, %v4633, %v4634
        %v4654 = vsel %vm2380, %v4631, %v4632
        %v4655 = vsel %vm2380, %v4630, %v4631
        %v4656 = vsel %vm2380, %v4628, %v4629
        %v4657 = vsel %vm2380, %v4627, %v4628
        %v4658 = vsel %vm2380, %v4625, %v4626
        %v4659 = vsel %vm2380, %v4624, %v4625
        %v4660 = vsel %vm2380, %v4622, %v4623
        %v4661 = vsel %vm2380, %v4621, %v4622
        %v4662 = vsel %vm2380, %v4619, %v4620
        %v4663 = vsel %vm2380, %v4618, %v4619
        %v4664 = vsel %vm2380, %v4616, %v4617
        %v4665 = vsel %vm2380, %v4615, %v4616
        %v4666 = vsel %vm2380, %v4613, %v4614
        %v4667 = vsel %vm2380, %v4612, %v4613
        %v4668 = vsel %vm2380, %v4610, %v4611
        %v4669 = vsel %vm2380, %v4609, %v4610
        %v4670 = vsel %vm2380, %v4607, %v4608
        %v4671 = vsel %vm2380, %v4606, %v4607
        %v4672 = vsel %vm2380, %v4604, %v4605
        %v4673 = vsel %vm2380, %v4603, %v4604
        %v4674 = vsel %vm2380, %v4601, %v4602
        %v4675 = vsel %vm2380, %v4600, %v4601
        %v4676 = vsel %vm2380, %v4598, %v4599
        %v4677 = vsel %vm2380, %v4645, %v4598
        %v4678 = vrot.slane %v4472, 1
        %v4679 = vrot.slane %v4475, 1
        %v4680 = vrot.slane %v4477, 1
        %v4681 = vrot.slane %v4480, 1
        %v4682 = vrot.slane %v4483, 1
        %v4683 = vrot.slane %v4485, 1
        %v4684 = vrot.slane %v4488, 1
        %v4685 = vrot.slane %v4491, 1
        %v4686 = vrot.slane %v4493, 1
        %v4687 = vrot.slane %v4496, 1
        %v4688 = vrot.slane %v4499, 1
        %v4689 = vrot.slane %v4501, 1
        %v4690 = vrot.slane %v4504, 1
        %v4691 = vrot.slane %v4507, 1
        %v4692 = vrot.slane %v4509, 1
        %v4693 = vrot.slane %v4512, 1
        %v4694 = vrot.slane %v4515, 1
        %v4695 = vrot.slane %v4517, 1
        %v4696 = vrot.slane %v4520, 1
        %v4697 = vrot.slane %v4523, 1
        %v4698 = vrot.slane %v4525, 1
        %v4699 = vrot.slane %v4528, 1
        %v4700 = vrot.slane %v4531, 1
        %v4701 = vrot.slane %v4533, 1
        %v4702 = vrot.slane %v4536, 1
        %v4703 = vrot.slane %v4539, 1
        %v4704 = vrot.slane %v4541, 1
        %v4705 = vrot.slane %v4544, 1
        %v4706 = vrot.slane %v4547, 1
        %v4707 = vrot.slane %v4549, 1
        %v4708 = vrot.slane %v4552, 1
        %v4709 = vrot.slane %v4555, 1
        %v4710 = vrot.slane %v4557, 1
        %v4711 = vrot.slane %v4560, 1
        %v4712 = vrot.slane %v4563, 1
        %v4713 = vrot.slane %v4565, 1
        %v4714 = vrot.slane %v4568, 1
        %v4715 = vrot.slane %v4571, 1
        %v4716 = vrot.slane %v4573, 1
        %v4717 = vrot.slane %v4576, 1
        %v4718 = vrot.slane %v4579, 1
        %v4719 = vrot.slane %v4581, 1
        %v4720 = vrot.slane %v4584, 1
        %v4721 = vrot.slane %v4587, 1
        %v4722 = vrot.slane %v4589, 1
        %v4723 = vrot.slane %v4592, 1
        %v4724 = vrot.slane %v4595, 1
        %v4725 = vrot.slane %v4597, 1
        %v4726 = vsel %vm2461, %v4724, %v4725
        %v4727 = vsel %vm2461, %v4723, %v4724
        %v4728 = vsel %vm2461, %v4721, %v4722
        %v4729 = vsel %vm2461, %v4720, %v4721
        %v4730 = vsel %vm2461, %v4718, %v4719
        %v4731 = vsel %vm2461, %v4717, %v4718
        %v4732 = vsel %vm2461, %v4715, %v4716
        %v4733 = vsel %vm2461, %v4714, %v4715
        %v4734 = vsel %vm2461, %v4712, %v4713
        %v4735 = vsel %vm2461, %v4711, %v4712
        %v4736 = vsel %vm2461, %v4709, %v4710
        %v4737 = vsel %vm2461, %v4708, %v4709
        %v4738 = vsel %vm2461, %v4706, %v4707
        %v4739 = vsel %vm2461, %v4705, %v4706
        %v4740 = vsel %vm2461, %v4703, %v4704
        %v4741 = vsel %vm2461, %v4702, %v4703
        %v4742 = vsel %vm2461, %v4700, %v4701
        %v4743 = vsel %vm2461, %v4699, %v4700
        %v4744 = vsel %vm2461, %v4697, %v4698
        %v4745 = vsel %vm2461, %v4696, %v4697
        %v4746 = vsel %vm2461, %v4694, %v4695
        %v4747 = vsel %vm2461, %v4693, %v4694
        %v4748 = vsel %vm2461, %v4691, %v4692
        %v4749 = vsel %vm2461, %v4690, %v4691
        %v4750 = vsel %vm2461, %v4688, %v4689
        %v4751 = vsel %vm2461, %v4687, %v4688
        %v4752 = vsel %vm2461, %v4685, %v4686
        %v4753 = vsel %vm2461, %v4684, %v4685
        %v4754 = vsel %vm2461, %v4682, %v4683
        %v4755 = vsel %vm2461, %v4681, %v4682
        %v4756 = vsel %vm2461, %v4679, %v4680
        %v4757 = vsel %vm2461, %v4678, %v4679
        %v4758 = vadd.f32 %v4677, %v4471
        %v4759 = vadd.f32 %v4676, %v4474
        %v4760 = vadd.f32 %v4675, %v4479
        %v4761 = vadd.f32 %v4674, %v4482
        %v4762 = vadd.f32 %v4673, %v4487
        %v4763 = vadd.f32 %v4672, %v4490
        %v4764 = vadd.f32 %v4671, %v4495
        %v4765 = vadd.f32 %v4670, %v4498
        %v4766 = vadd.f32 %v4669, %v4503
        %v4767 = vadd.f32 %v4668, %v4506
        %v4768 = vadd.f32 %v4667, %v4511
        %v4769 = vadd.f32 %v4666, %v4514
        %v4770 = vadd.f32 %v4665, %v4519
        %v4771 = vadd.f32 %v4664, %v4522
        %v4772 = vadd.f32 %v4663, %v4527
        %v4773 = vadd.f32 %v4662, %v4530
        %v4774 = vadd.f32 %v4661, %v4535
        %v4775 = vadd.f32 %v4660, %v4538
        %v4776 = vadd.f32 %v4659, %v4543
        %v4777 = vadd.f32 %v4658, %v4546
        %v4778 = vadd.f32 %v4657, %v4551
        %v4779 = vadd.f32 %v4656, %v4554
        %v4780 = vadd.f32 %v4655, %v4559
        %v4781 = vadd.f32 %v4654, %v4562
        %v4782 = vadd.f32 %v4653, %v4567
        %v4783 = vadd.f32 %v4652, %v4570
        %v4784 = vadd.f32 %v4651, %v4575
        %v4785 = vadd.f32 %v4650, %v4578
        %v4786 = vadd.f32 %v4649, %v4583
        %v4787 = vadd.f32 %v4648, %v4586
        %v4788 = vadd.f32 %v4647, %v4591
        %v4789 = vadd.f32 %v4646, %v4594
        %v4790 = vadd.f32 %v4758, %v4757
        %v4791 = vadd.f32 %v4759, %v4756
        %v4792 = vadd.f32 %v4760, %v4755
        %v4793 = vadd.f32 %v4761, %v4754
        %v4794 = vadd.f32 %v4762, %v4753
        %v4795 = vadd.f32 %v4763, %v4752
        %v4796 = vadd.f32 %v4764, %v4751
        %v4797 = vadd.f32 %v4765, %v4750
        %v4798 = vadd.f32 %v4766, %v4749
        %v4799 = vadd.f32 %v4767, %v4748
        %v4800 = vadd.f32 %v4768, %v4747
        %v4801 = vadd.f32 %v4769, %v4746
        %v4802 = vadd.f32 %v4770, %v4745
        %v4803 = vadd.f32 %v4771, %v4744
        %v4804 = vadd.f32 %v4772, %v4743
        %v4805 = vadd.f32 %v4773, %v4742
        %v4806 = vadd.f32 %v4774, %v4741
        %v4807 = vadd.f32 %v4775, %v4740
        %v4808 = vadd.f32 %v4776, %v4739
        %v4809 = vadd.f32 %v4777, %v4738
        %v4810 = vadd.f32 %v4778, %v4737
        %v4811 = vadd.f32 %v4779, %v4736
        %v4812 = vadd.f32 %v4780, %v4735
        %v4813 = vadd.f32 %v4781, %v4734
        %v4814 = vadd.f32 %v4782, %v4733
        %v4815 = vadd.f32 %v4783, %v4732
        %v4816 = vadd.f32 %v4784, %v4731
        %v4817 = vadd.f32 %v4785, %v4730
        %v4818 = vadd.f32 %v4786, %v4729
        %v4819 = vadd.f32 %v4787, %v4728
        %v4820 = vadd.f32 %v4788, %v4727
        %v4821 = vadd.f32 %v4789, %v4726
        %v4822 = vld [vmem:[%s4] sm:$0x1]
        %v4824 = vperm.slane %v4822, 0
        %v4826 = vadd.f32 %v4790, %v4824
        %v4827 = vadd.f32 %v4791, %v4824
        %v4828 = vadd.f32 %v4792, %v4824
        %v4829 = vadd.f32 %v4793, %v4824
        %v4830 = vadd.f32 %v4794, %v4824
        %v4831 = vadd.f32 %v4795, %v4824
        %v4832 = vadd.f32 %v4796, %v4824
        %v4833 = vadd.f32 %v4797, %v4824
        %v4834 = vadd.f32 %v4798, %v4824
        %v4835 = vadd.f32 %v4799, %v4824
        %v4836 = vadd.f32 %v4800, %v4824
        %v4837 = vadd.f32 %v4801, %v4824
        %v4838 = vadd.f32 %v4802, %v4824
        %v4839 = vadd.f32 %v4803, %v4824
        %v4840 = vadd.f32 %v4804, %v4824
        %v4841 = vadd.f32 %v4805, %v4824
        %v4842 = vadd.f32 %v4806, %v4824
        %v4843 = vadd.f32 %v4807, %v4824
        %v4844 = vadd.f32 %v4808, %v4824
        %v4845 = vadd.f32 %v4809, %v4824
        %v4846 = vadd.f32 %v4810, %v4824
        %v4847 = vadd.f32 %v4811, %v4824
        %v4848 = vadd.f32 %v4812, %v4824
        %v4849 = vadd.f32 %v4813, %v4824
        %v4850 = vadd.f32 %v4814, %v4824
        %v4851 = vadd.f32 %v4815, %v4824
        %v4852 = vadd.f32 %v4816, %v4824
        %v4853 = vadd.f32 %v4817, %v4824
        %v4854 = vadd.f32 %v4818, %v4824
        %v4855 = vadd.f32 %v4819, %v4824
        %v4856 = vadd.f32 %v4820, %v4824
        %v4857 = vadd.f32 %v4821, %v4824
        %v4858 = vadd.f32 %v4826, %v326
        %v4859 = vadd.f32 %v4827, %v327
        %v4860 = vadd.f32 %v4828, %v328
        %v4861 = vadd.f32 %v4829, %v329
        %v4862 = vadd.f32 %v4830, %v330
        %v4863 = vadd.f32 %v4831, %v331
        %v4864 = vadd.f32 %v4832, %v332
        %v4865 = vadd.f32 %v4833, %v333
        %v4866 = vadd.f32 %v4834, %v334
        %v4867 = vadd.f32 %v4835, %v335
        %v4868 = vadd.f32 %v4836, %v336
        %v4869 = vadd.f32 %v4837, %v337
        %v4870 = vadd.f32 %v4838, %v338
        %v4871 = vadd.f32 %v4839, %v339
        %v4872 = vadd.f32 %v4840, %v340
        %v4873 = vadd.f32 %v4841, %v341
        %v4874 = vadd.f32 %v4842, %v342
        %v4875 = vadd.f32 %v4843, %v343
        %v4876 = vadd.f32 %v4844, %v344
        %v4877 = vadd.f32 %v4845, %v345
        %v4878 = vadd.f32 %v4846, %v346
        %v4879 = vadd.f32 %v4847, %v347
        %v4880 = vadd.f32 %v4848, %v348
        %v4881 = vadd.f32 %v4849, %v349
        %v4882 = vadd.f32 %v4850, %v350
        %v4883 = vadd.f32 %v4851, %v351
        %v4884 = vadd.f32 %v4852, %v352
        %v4885 = vadd.f32 %v4853, %v353
        %v4886 = vadd.f32 %v4854, %v354
        %v4887 = vadd.f32 %v4855, %v355
        %v4888 = vadd.f32 %v4856, %v356
        %v4889 = vadd.f32 %v4857, %v357
        %v4890 = vmax.f32 %v4858, 0.0
        %v4891 = vmax.f32 %v4859, 0.0
        %v4892 = vmax.f32 %v4860, 0.0
        %v4893 = vmax.f32 %v4861, 0.0
        %v4894 = vmax.f32 %v4862, 0.0
        %v4895 = vmax.f32 %v4863, 0.0
        %v4896 = vmax.f32 %v4864, 0.0
        %v4897 = vmax.f32 %v4865, 0.0
        %v4898 = vmax.f32 %v4866, 0.0
        %v4899 = vmax.f32 %v4867, 0.0
        %v4900 = vmax.f32 %v4868, 0.0
        %v4901 = vmax.f32 %v4869, 0.0
        %v4902 = vmax.f32 %v4870, 0.0
        %v4903 = vmax.f32 %v4871, 0.0
        %v4904 = vmax.f32 %v4872, 0.0
        %v4905 = vmax.f32 %v4873, 0.0
        %v4906 = vmax.f32 %v4874, 0.0
        %v4907 = vmax.f32 %v4875, 0.0
        %v4908 = vmax.f32 %v4876, 0.0
        %v4909 = vmax.f32 %v4877, 0.0
        %v4910 = vmax.f32 %v4878, 0.0
        %v4911 = vmax.f32 %v4879, 0.0
        %v4912 = vmax.f32 %v4880, 0.0
        %v4913 = vmax.f32 %v4881, 0.0
        %v4914 = vmax.f32 %v4882, 0.0
        %v4915 = vmax.f32 %v4883, 0.0
        %v4916 = vmax.f32 %v4884, 0.0
        %v4917 = vmax.f32 %v4885, 0.0
        %v4918 = vmax.f32 %v4886, 0.0
        %v4919 = vmax.f32 %v4887, 0.0
        %v4920 = vmax.f32 %v4888, 0.0
        %v4921 = vmax.f32 %v4889, 0.0
        %4922 = vst [vmem:[%s277] sm:$0xff] %v4890
        %4923 = vst [vmem:[%s277 + $0x8] sm:$0xff] %v4891
        %4924 = vst [vmem:[%s277 + $0x10] sm:$0xff] %v4892
        %4925 = vst [vmem:[%s277 + $0x18] sm:$0xff] %v4893
        %4926 = vst [vmem:[%s277 + $0x20] sm:$0xff] %v4894
        %4927 = vst [vmem:[%s277 + $0x28] sm:$0xff] %v4895
        %4928 = vst [vmem:[%s277 + $0x30] sm:$0xff] %v4896
        %4929 = vst [vmem:[%s277 + $0x38] sm:$0xff] %v4897
        %4930 = vst [vmem:[%s277 + $0x40] sm:$0xff] %v4898
        %4931 = vst [vmem:[%s277 + $0x48] sm:$0xff] %v4899
        %4932 = vst [vmem:[%s277 + $0x50] sm:$0xff] %v4900
        %4933 = vst [vmem:[%s277 + $0x58] sm:$0xff] %v4901
        %4934 = vst [vmem:[%s277 + $0x60] sm:$0xff] %v4902
        %4935 = vst [vmem:[%s277 + $0x68] sm:$0xff] %v4903
        %4936 = vst [vmem:[%s277 + $0x70] sm:$0xff] %v4904
        %4937 = vst [vmem:[%s277 + $0x78] sm:$0xff] %v4905
        %4938 = vst [vmem:[%s277 + $0x80] sm:$0xff] %v4906
        %4939 = vst [vmem:[%s277 + $0x88] sm:$0xff] %v4907
        %4940 = vst [vmem:[%s277 + $0x90] sm:$0xff] %v4908
        %4941 = vst [vmem:[%s277 + $0x98] sm:$0xff] %v4909
        %4942 = vst [vmem:[%s277 + $0xa0] sm:$0xff] %v4910
        %4943 = vst [vmem:[%s277 + $0xa8] sm:$0xff] %v4911
        %4944 = vst [vmem:[%s277 + $0xb0] sm:$0xff] %v4912
        %4945 = vst [vmem:[%s277 + $0xb8] sm:$0xff] %v4913
        %4946 = vst [vmem:[%s277 + $0xc0] sm:$0xff] %v4914
        %4947 = vst [vmem:[%s277 + $0xc8] sm:$0xff] %v4915
        %4948 = vst [vmem:[%s277 + $0xd0] sm:$0xff] %v4916
        %4949 = vst [vmem:[%s277 + $0xd8] sm:$0xff] %v4917
        %4950 = vst [vmem:[%s277 + $0xe0] sm:$0xff] %v4918
        %4951 = vst [vmem:[%s277 + $0xe8] sm:$0xff] %v4919
        %4952 = vst [vmem:[%s277 + $0xf0] sm:$0xff] %v4920
        %4953 = vst [vmem:[%s277 + $0xf8] sm:$0xff] %v4921
        %s4954 = sand.u32 %s141, 1
        %s4955 = scalar_lea.sflag [#allocation6], %s4954
        %s4956 = sand.u32 %s141, 1
        %s4957 = smul.addr %s4956, 256
        %s4958 = scalar_lea.vmem [#allocation10], %s4957
        // Predicated region
        $region53: #{tpu_custom_call.1} parent=39 // pred_check
          %p4959 = pneg %p151
        $region54: #{tpu_custom_call.1} parent=39 // pred_check_branch
          %4961 = sbr.rel (%p4959) target = $region56
        $region55: #{tpu_custom_call.1} parent=39 // pred_region
          %4963 = vsyncadd %s4955, 0
          %s4964 = smul.addr %s23, 32
          %s4965 = smul.addr %s4964, 8
          %s4966 = scalar_lea.hbm %s5, %s4965
          %s4967 = sshll.u32 %s4958, 4
          %s4968 = int_to_ptr.vmem [resolvable:$true] %s4967
          %s4969 = sshll.u32 %s4966, 4
          %s4970 = int_to_ptr.hbm [resolvable:$true] %s4969
          %4975 = dma.vmem_to_hbm [thread:$0]  %s4968, 4096, %s4970, %s4955, 128, 128, 8
        $region56: #{tpu_custom_call.1} parent=39 // pred_fallthru
          _
      $region40: #{tpu_custom_call.1} parent=5 // pred_fallthru
        _
      %p4976 = scmp.le.s32.totalorder 2, %s18
      // Predicated region
      $region57: #{tpu_custom_call.1} parent=5 // pred_check
        %p4977 = pneg %p4976
      $region58: #{tpu_custom_call.1} parent=5 // pred_check_branch
        %4979 = sbr.rel (%p4977) target = $region60
      $region59: #{tpu_custom_call.1} parent=5 // pred_region
        %s4980 = ssub.s32 %s18, 2
        // Predicated region
        $region61: #{tpu_custom_call.1} parent=59 // pred_check
          %p4981 = pneg %p157
        $region62: #{tpu_custom_call.1} parent=59 // pred_check_branch
          %4983 = sbr.rel (%p4981) target = $region64
        $region63: #{tpu_custom_call.1} parent=59 // pred_region
          %s4984 = sand.u32 %s142, 1
          %s4985 = scalar_lea.sflag [#allocation6], %s4984
          %s4986 = sand.u32 %s142, 1
          %s4987 = smul.addr %s4986, 256
          %s4988 = scalar_lea.vmem [#allocation10], %s4987
          %4990 = dma.done %s4985, 4096
        $region64: #{tpu_custom_call.1} parent=59 // pred_fallthru
          _
      $region60: #{tpu_custom_call.1} parent=5 // pred_fallthru
        _
    $region6: #{tpu_custom_call.1} parent=1 // loop_footer
      %s22 = sadd.s32 1, %s18
    $region7: #{tpu_custom_call.1} parent=1 // loop_footer_branch
      %17 = sbr.rel target = $region3
    $region8: #{tpu_custom_call.1} parent=1 // loop_exit
      _
    %4991 = vsyncpa [#allocation5], 1
    %s4992 = scalar_lea.sflag [#allocation5], 1
    %4993 = vsyncpa %s4992, 1
    %4994 = vsyncpa [#allocation8], 1
    %4995 = vsyncpa [#allocation6], 1
    %s4996 = scalar_lea.sflag [#allocation6], 1
    %4997 = vsyncpa %s4996, 1

</llo_original>
